<compile_context>
chip_gen: v7x
topology: tpu7x:2x2x1
jax: 0.10.0
libtpu: 0.0.40
codegen_flags: <defaults>
</compile_context>

<pallas_src>
import functools
import math

import jax
import jax.numpy as jnp
from jax.experimental import pallas as pl
from jax.experimental.pallas import tpu as pltpu

_EPS = 1e-6  # matches nn.LayerNorm(d_model, eps=1e-06)

_WEIGHT_ORDER = (
    "sa_wqkv", "sa_bqkv", "sa_wo", "sa_bo", "sa_g", "sa_b",
    "ca_wqkv", "ca_bqkv", "ca_wo", "ca_bo", "ca_g", "ca_b",
    "w1", "b1", "w2", "b2", "ffn_g", "ffn_b",
)


# ----------------------------------------------------------------------------
# Fused whole-decoder kernel (grid = (batch, layer))
# ----------------------------------------------------------------------------
def _build_decoder_kernel(n_head, d_k, d_v, St, Ss, *, has_tmask, has_smask,
                          causal, eps=_EPS):
    H = n_head
    Hdk, Hdv = H * d_k, H * d_v
    scale = 1.0 / math.sqrt(d_k)

    def layer_norm(y, g, b):
        mean = jnp.mean(y, axis=-1, keepdims=True)
        var = jnp.mean(jnp.square(y - mean), axis=-1, keepdims=True)
        return (y - mean) * jax.lax.rsqrt(var + eps) * g + b

    def kernel(*refs):
        it = iter(refs)
        tgt_ref, src_ref, pe_ref = next(it), next(it), next(it)
        tmask_ref = next(it) if has_tmask else None
        smask_ref = next(it) if has_smask else None
        (sa_wqkv, sa_bqkv, sa_wo, sa_bo, sa_g, sa_b,
         ca_wqkv, ca_bqkv, ca_wo, ca_bo, ca_g, ca_b,
         w1, b1, w2, b2, ffn_g, ffn_b) = (next(it) for _ in range(18))
        norm_g, norm_b = next(it), next(it)
        out_ref, attn_ref = next(it), next(it)
        qh_sc, kh_sc, vh_sc, ctx_sc = next(it), next(it), next(it), next(it)

        l = pl.program_id(1)
        n_l = pl.num_programs(1)

        # Layer 0: initialize the resident carry block with tgt + positional encoding.
        @pl.when(l == 0)
        def _():
            out_ref[0] = tgt_ref[0] + pe_ref[...]

        x = out_ref[0]                                     # (St, D) f32 activation carry

        # Additive masks: built / loaded ONCE per (batch, layer) step.
        if causal:
            rows = jax.lax.broadcasted_iota(jnp.int32, (St, St), 0)
            cols = jax.lax.broadcasted_iota(jnp.int32, (St, St), 1)
            tmask = jnp.where(cols <= rows, 0.0, -1e9)     # generated in-kernel, no HBM
        elif has_tmask:
            tmask = tmask_ref[...]
        else:
            tmask = None
        smask = smask_ref[...] if has_smask else None

        def mha(xq, kv_src_bf, Sk, wqkv_ref, bqkv_ref, wo_ref, bo_ref,
                g_ref, b_ref, mask, write_attn):
            wqkv = wqkv_ref[0]                             # (D, 2*Hdk+Hdv) bf16
            bqkv = bqkv_ref[0]                             # (1, 2*Hdk+Hdv) f32
            xq_bf = xq.astype(jnp.bfloat16)
            if kv_src_bf is None:
                # Self-attention: single fused QKV matmul.
                qkv = jnp.dot(xq_bf, wqkv, preferred_element_type=jnp.float32) + bqkv
                q, k, v = qkv[:, :Hdk], qkv[:, Hdk:2 * Hdk], qkv[:, 2 * Hdk:]
            else:
                # Cross-attention: Q from xq, fused KV from the source.
                q = jnp.dot(xq_bf, wqkv[:, :Hdk],
                            preferred_element_type=jnp.float32) + bqkv[:, :Hdk]
                kv = jnp.dot(kv_src_bf, wqkv[:, Hdk:],
                             preferred_element_type=jnp.float32) + bqkv[:, Hdk:]
                k, v = kv[:, :Hdk], kv[:, Hdk:]

            # Scatter heads into (H, S, d) VMEM scratch so scores / PV are ONE batched
            # matmul instead of H tiny (K = d_k) matmuls.
            for h in range(H):
                qh_sc[h] = q[:, h * d_k:(h + 1) * d_k].astype(jnp.bfloat16)
                kh_sc[h, 0:Sk, :] = k[:, h * d_k:(h + 1) * d_k].astype(jnp.bfloat16)
                vh_sc[h, 0:Sk, :] = v[:, h * d_v:(h + 1) * d_v].astype(jnp.bfloat16)
            qh = qh_sc[...]                                # (H, St, dk) bf16
            kh = kh_sc[:, 0:Sk, :]                         # (H, Sk, dk) bf16
            vh = vh_sc[:, 0:Sk, :]                         # (H, Sk, dv) bf16

            sc = jax.lax.dot_general(qh, kh, (((2,), (2,)), ((0,), (0,))),
                                     preferred_element_type=jnp.float32) * scale
            if mask is not None:
                sc = sc + mask                             # (Sq,Sk) broadcast over heads
            sc = sc - jnp.max(sc, axis=-1, keepdims=True)
            e = jnp.exp(sc)
            p = e / jnp.sum(e, axis=-1, keepdims=True)     # exact softmax (fidelity)
            if write_attn:
                attn_ref[0, 0] = p                         # one (H,St,Ss) store
            pv = jax.lax.dot_general(p.astype(jnp.bfloat16), vh,
                                     (((2,), (1,)), ((0,), (0,))),
                                     preferred_element_type=jnp.float32)  # (H, St, dv)
            # Concat heads in scratch -> single deep output projection.
            for h in range(H):
                ctx_sc[:, h * d_v:(h + 1) * d_v] = pv[h].astype(jnp.bfloat16)
            proj = jnp.dot(ctx_sc[...], wo_ref[0],
                           preferred_element_type=jnp.float32) + bo_ref[0]
            return layer_norm(proj + xq, g_ref[0], b_ref[0])

        # masked self-attention + Add&Norm (attention weights never materialized in HBM)
        x1 = mha(x, None, St, sa_wqkv, sa_bqkv, sa_wo, sa_bo, sa_g, sa_b,
                 tmask, write_attn=False)
        # cross-attention + Add&Norm (weights written out)
        x2 = mha(x1, src_ref[0].astype(jnp.bfloat16), Ss, ca_wqkv, ca_bqkv,
                 ca_wo, ca_bo, ca_g, ca_b, smask, write_attn=True)

        # position-wise FFN + Add&Norm
        h1 = jnp.maximum(
            jnp.dot(x2.astype(jnp.bfloat16), w1[0],
                    preferred_element_type=jnp.float32) + b1[0], 0.0)
        h2 = jnp.dot(h1.astype(jnp.bfloat16), w2[0],
                     preferred_element_type=jnp.float32) + b2[0]
        y = layer_norm(h2 + x2, ffn_g[0], ffn_b[0])

        # Last layer: fuse the decoder's final LayerNorm into the epilogue.
        @pl.when(l == n_l - 1)
        def _():
            out_ref[0] = layer_norm(y, norm_g[...], norm_b[...])

        @pl.when(l != n_l - 1)
        def _():
            out_ref[0] = y

    return kernel


# ----------------------------------------------------------------------------
# Wrapper: single pallas_call for the whole decoder
# ----------------------------------------------------------------------------
def decoder_forward(params, tgt, src, tgt_mask=None, src_mask=None, *,
                    config, causal_tgt_mask=False):
    B, St, D = tgt.shape
    Ss = src.shape[1]
    L, H = config["n_layers"], config["n_head"]
    dk, dv = config["d_k"], config["d_v"]

    pe = positional_encoding(St, D)                        # (St, D) f32

    has_tmask = (tgt_mask is not None) and (not causal_tgt_mask)
    has_smask = src_mask is not None

    inputs = [tgt.astype(jnp.float32), src.astype(jnp.float32), pe]
    in_specs = [pl.BlockSpec((1, St, D), lambda b, l: (b, 0, 0)),
                pl.BlockSpec((1, Ss, D), lambda b, l: (b, 0, 0)),
                pl.BlockSpec((St, D), lambda b, l: (0, 0))]
    if has_tmask:
        inputs.append(tgt_mask.astype(jnp.float32))
        in_specs.append(pl.BlockSpec((St, St), lambda b, l: (0, 0)))
    if has_smask:
        inputs.append(src_mask.astype(jnp.float32))
        in_specs.append(pl.BlockSpec((St, Ss), lambda b, l: (0, 0)))

    # Per-layer weights, stacked along a leading layer axis; indexed by the l grid coord.
    for name in _WEIGHT_ORDER:
        w = params[name]
        inputs.append(w)
        in_specs.append(pl.BlockSpec(
            (1,) + w.shape[1:],
            lambda b, l, _nd=w.ndim - 1: (l,) + (0,) * _nd))
    for name in ("norm_g", "norm_b"):
        w = params[name]
        inputs.append(w)
        in_specs.append(pl.BlockSpec(w.shape, lambda b, l: (0, 0)))

    kernel = _build_decoder_kernel(H, dk, dv, St, Ss,
                                   has_tmask=has_tmask, has_smask=has_smask,
                                   causal=causal_tgt_mask)
    Smax = max(St, Ss)
    out, attn_all = pl.pallas_call(
        kernel,
        grid=(B, L),
        out_shape=(jax.ShapeDtypeStruct((B, St, D), jnp.float32),
                   jax.ShapeDtypeStruct((L, B, H, St, Ss), jnp.float32)),
        in_specs=in_specs,
        out_specs=(pl.BlockSpec((1, St, D), lambda b, l: (b, 0, 0)),
                   pl.BlockSpec((1, 1, H, St, Ss), lambda b, l: (l, b, 0, 0, 0))),
        scratch_shapes=[pltpu.VMEM((H, St, dk), jnp.bfloat16),
                        pltpu.VMEM((H, Smax, dk), jnp.bfloat16),
                        pltpu.VMEM((H, Smax, dv), jnp.bfloat16),
                        pltpu.VMEM((St, H * dv), jnp.bfloat16)],
        compiler_params=pltpu.CompilerParams(
            dimension_semantics=("parallel", "arbitrary"),
            vmem_limit_bytes=32 * 1024 * 1024),
    )(*inputs)

    return out, [attn_all[i] for i in range(L)]


# ----------------------------------------------------------------------------
# Model glue (plain JAX): positional encoding, parameter init
# ----------------------------------------------------------------------------
def positional_encoding(seq_len, d_model):
    pos = jnp.arange(seq_len, dtype=jnp.float32)[:, None]
    div = jnp.exp(jnp.arange(0, d_model, 2, dtype=jnp.float32)
                  * (-math.log(10000.0) / d_model))
    pe = jnp.zeros((seq_len, d_model), dtype=jnp.float32)
    pe = pe.at[:, 0::2].set(jnp.sin(pos * div))
    pe = pe.at[:, 1::2].set(jnp.cos(pos * div))
    return pe


def init_params(key, *, n_layers, d_model, d_inner, n_head, d_k, d_v):
    L = n_layers
    Hdk, Hdv = n_head * d_k, n_head * d_v

    def dense_w(k, fan_in, fan_out):
        s = 1.0 / math.sqrt(fan_in)
        return jax.random.uniform(k, (L, fan_in, fan_out), jnp.float32, -s, s)

    keys = jax.random.split(key, 10)
    sa_wqkv = jnp.concatenate([dense_w(keys[0], d_model, Hdk),
                               dense_w(keys[1], d_model, Hdk),
                               dense_w(keys[2], d_model, Hdv)], axis=2)
    ca_wqkv = jnp.concatenate([dense_w(keys[3], d_model, Hdk),
                               dense_w(keys[4], d_model, Hdk),
                               dense_w(keys[5], d_model, Hdv)], axis=2)
    sa_wo = dense_w(keys[6], Hdv, d_model)
    ca_wo = dense_w(keys[7], Hdv, d_model)
    w1 = dense_w(keys[8], d_model, d_inner)
    w2 = dense_w(keys[9], d_inner, d_model)

    zeros = lambda *sh: jnp.zeros(sh, jnp.float32)
    ones = lambda *sh: jnp.ones(sh, jnp.float32)

    return {
        # Matmul weights stored bf16 in HBM (MXU-native, half the VMEM/DMA footprint);
        # biases and LayerNorm params stay f32.
        "sa_wqkv": sa_wqkv.astype(jnp.bfloat16), "sa_bqkv": zeros(L, 1, 2 * Hdk + Hdv),
        "sa_wo": sa_wo.astype(jnp.bfloat16), "sa_bo": zeros(L, 1, d_model),
        "sa_g": ones(L, 1, d_model), "sa_b": zeros(L, 1, d_model),
        "ca_wqkv": ca_wqkv.astype(jnp.bfloat16), "ca_bqkv": zeros(L, 1, 2 * Hdk + Hdv),
        "ca_wo": ca_wo.astype(jnp.bfloat16), "ca_bo": zeros(L, 1, d_model),
        "ca_g": ones(L, 1, d_model), "ca_b": zeros(L, 1, d_model),
        "w1": w1.astype(jnp.bfloat16), "b1": zeros(L, 1, d_inner),
        "w2": w2.astype(jnp.bfloat16), "b2": zeros(L, 1, d_model),
        "ffn_g": ones(L, 1, d_model), "ffn_b": zeros(L, 1, d_model),
        "norm_g": ones(1, d_model), "norm_b": zeros(1, d_model),
    }


# ----------------------------------------------------------------------------
if __name__ == "__main__":
    cfg = dict(n_layers=2, d_model=32, d_inner=64, n_head=4, d_k=8, d_v=8)
    B, S_tgt, S_src = 2, 8, 8

    root = jax.random.PRNGKey(0)
    k_params, k_tgt, k_src = jax.random.split(root, 3)

    params = init_params(k_params, **cfg)
    tgt = jax.random.normal(k_tgt, (B, S_tgt, cfg["d_model"]), jnp.float32)
    src = jax.random.normal(k_src, (B, S_src, cfg["d_model"]), jnp.float32)

    # Causal decoder self-attention mask is generated inside the kernel
    # (causal_tgt_mask=True); arbitrary masks can still be passed as arrays.
    fwd = jax.jit(functools.partial(decoder_forward, config=cfg, causal_tgt_mask=True))
    out, attns = fwd(params, tgt, src)
    out = jax.block_until_ready(out)
    attns = [jax.block_until_ready(a) for a in attns]

    assert out.shape == (B, S_tgt, cfg["d_model"])
    assert len(attns) == cfg["n_layers"]
    assert attns[0].shape == (B, cfg["n_head"], S_tgt, S_src)
    assert bool(jnp.all(jnp.isfinite(out)))
    # exact softmax: cross-attention rows sum to 1
    assert bool(jnp.all(jnp.abs(jnp.sum(attns[0], axis=-1) - 1.0) < 1e-3))
    print("KERNEL_OK")
</pallas_src>

<mosaic_0001>
module attributes {stable_mosaic.version = 11 : i64} {
  func.func @kernel(%arg0: i32, %arg1: i32, %arg2: memref<1x8x32xf32, #tpu.memory_space<vmem>>, %arg3: memref<1x8x32xf32, #tpu.memory_space<vmem>>, %arg4: memref<8x32xf32, #tpu.memory_space<vmem>>, %arg5: memref<1x32x96xbf16, #tpu.memory_space<vmem>>, %arg6: memref<1x1x96xf32, #tpu.memory_space<vmem>>, %arg7: memref<1x32x32xbf16, #tpu.memory_space<vmem>>, %arg8: memref<1x1x32xf32, #tpu.memory_space<vmem>>, %arg9: memref<1x1x32xf32, #tpu.memory_space<vmem>>, %arg10: memref<1x1x32xf32, #tpu.memory_space<vmem>>, %arg11: memref<1x32x96xbf16, #tpu.memory_space<vmem>>, %arg12: memref<1x1x96xf32, #tpu.memory_space<vmem>>, %arg13: memref<1x32x32xbf16, #tpu.memory_space<vmem>>, %arg14: memref<1x1x32xf32, #tpu.memory_space<vmem>>, %arg15: memref<1x1x32xf32, #tpu.memory_space<vmem>>, %arg16: memref<1x1x32xf32, #tpu.memory_space<vmem>>, %arg17: memref<1x32x64xbf16, #tpu.memory_space<vmem>>, %arg18: memref<1x1x64xf32, #tpu.memory_space<vmem>>, %arg19: memref<1x64x32xbf16, #tpu.memory_space<vmem>>, %arg20: memref<1x1x32xf32, #tpu.memory_space<vmem>>, %arg21: memref<1x1x32xf32, #tpu.memory_space<vmem>>, %arg22: memref<1x1x32xf32, #tpu.memory_space<vmem>>, %arg23: memref<1x32xf32, #tpu.memory_space<vmem>>, %arg24: memref<1x32xf32, #tpu.memory_space<vmem>>, %arg25: memref<1x8x32xf32, #tpu.memory_space<vmem>>, %arg26: memref<1x1x4x8x8xf32, #tpu.memory_space<vmem>>, %arg27: memref<4x8x8xbf16, #tpu.memory_space<vmem>>, %arg28: memref<4x8x8xbf16, #tpu.memory_space<vmem>>, %arg29: memref<4x8x8xbf16, #tpu.memory_space<vmem>>, %arg30: memref<8x32xbf16, #tpu.memory_space<vmem>>) attributes {dimension_semantics = [#tpu.dimension_semantics<parallel>, #tpu.dimension_semantics<arbitrary>], iteration_bounds = array<i64: 2, 2>, scalar_prefetch = 0 : i64, scratch_operands = 4 : i64, tpu.core_type = #tpu.core_type<tc>, window_params = [{transform_indices = @transform_0, window_bounds = array<i64: 1, 8, 32>}, {transform_indices = @transform_1, window_bounds = array<i64: 1, 8, 32>}, {pipeline_mode = #tpu.pipeline_mode<synchronous>, transform_indices = @transform_2, window_bounds = array<i64: 8, 32>}, {transform_indices = @transform_3, window_bounds = array<i64: 1, 32, 96>}, {transform_indices = @transform_4, window_bounds = array<i64: 1, 1, 96>}, {transform_indices = @transform_5, window_bounds = array<i64: 1, 32, 32>}, {transform_indices = @transform_6, window_bounds = array<i64: 1, 1, 32>}, {transform_indices = @transform_7, window_bounds = array<i64: 1, 1, 32>}, {transform_indices = @transform_8, window_bounds = array<i64: 1, 1, 32>}, {transform_indices = @transform_9, window_bounds = array<i64: 1, 32, 96>}, {transform_indices = @transform_10, window_bounds = array<i64: 1, 1, 96>}, {transform_indices = @transform_11, window_bounds = array<i64: 1, 32, 32>}, {transform_indices = @transform_12, window_bounds = array<i64: 1, 1, 32>}, {transform_indices = @transform_13, window_bounds = array<i64: 1, 1, 32>}, {transform_indices = @transform_14, window_bounds = array<i64: 1, 1, 32>}, {transform_indices = @transform_15, window_bounds = array<i64: 1, 32, 64>}, {transform_indices = @transform_16, window_bounds = array<i64: 1, 1, 64>}, {transform_indices = @transform_17, window_bounds = array<i64: 1, 64, 32>}, {transform_indices = @transform_18, window_bounds = array<i64: 1, 1, 32>}, {transform_indices = @transform_19, window_bounds = array<i64: 1, 1, 32>}, {transform_indices = @transform_20, window_bounds = array<i64: 1, 1, 32>}, {pipeline_mode = #tpu.pipeline_mode<synchronous>, transform_indices = @transform_21, window_bounds = array<i64: 1, 32>}, {pipeline_mode = #tpu.pipeline_mode<synchronous>, transform_indices = @transform_22, window_bounds = array<i64: 1, 32>}, {transform_indices = @transform_23, window_bounds = array<i64: 1, 8, 32>}, {transform_indices = @transform_24, window_bounds = array<i64: 1, 1, 4, 8, 8>}]} {
    %c0_i32 = arith.constant 0 : i32
    %0 = arith.cmpi eq, %arg1, %c0_i32 : i32
    %1 = arith.extui %0 : i1 to i32
    %c0_i32_0 = arith.constant 0 : i32
    %2 = arith.cmpi ne, %1, %c0_i32_0 : i32
    scf.if %2 {
      %c0_206 = arith.constant 0 : index
      %c0_207 = arith.constant 0 : index
      %c0_208 = arith.constant 0 : index
      %355 = vector.load %arg2[%c0_206, %c0_207, %c0_208] : memref<1x8x32xf32, #tpu.memory_space<vmem>>, vector<1x8x32xf32>
      %356 = vector.shape_cast %355 : vector<1x8x32xf32> to vector<8x32xf32>
      %c0_209 = arith.constant 0 : index
      %c0_210 = arith.constant 0 : index
      %357 = vector.load %arg4[%c0_209, %c0_210] : memref<8x32xf32, #tpu.memory_space<vmem>>, vector<8x32xf32>
      %358 = arith.addf %356, %357 : vector<8x32xf32>
      %c0_211 = arith.constant 0 : index
      %c0_212 = arith.constant 0 : index
      %c0_213 = arith.constant 0 : index
      %359 = vector.load %arg25[%c0_211, %c0_212, %c0_213] : memref<1x8x32xf32, #tpu.memory_space<vmem>>, vector<1x8x32xf32>
      %360 = vector.shape_cast %359 : vector<1x8x32xf32> to vector<8x32xf32>
      %361 = vector.shape_cast %358 : vector<8x32xf32> to vector<1x8x32xf32>
      tpu.vector_store %arg25[%c0_211, %c0_212, %c0_213], %361 {strides = array<i32>} : memref<1x8x32xf32, #tpu.memory_space<vmem>>, vector<1x8x32xf32>,
    } else {
    }
    %c0 = arith.constant 0 : index
    %c0_1 = arith.constant 0 : index
    %c0_2 = arith.constant 0 : index
    %3 = vector.load %arg25[%c0, %c0_1, %c0_2] : memref<1x8x32xf32, #tpu.memory_space<vmem>>, vector<1x8x32xf32>
    %4 = vector.shape_cast %3 : vector<1x8x32xf32> to vector<8x32xf32>
    %5 = tpu.iota {dimensions = array<i32: 0>} : vector<8x8xi32>
    %6 = tpu.iota {dimensions = array<i32: 1>} : vector<8x8xi32>
    %7 = arith.cmpi sle, %6, %5 : vector<8x8xi32>
    %cst = arith.constant 0.000000e+00 : f32
    %cst_3 = arith.constant -1.000000e+09 : f32
    %8 = vector.broadcast %cst : f32 to vector<8x8xf32>
    %9 = vector.broadcast %cst_3 : f32 to vector<8x8xf32>
    %10 = arith.select %7, %8, %9 : vector<8x8xi1>, vector<8x8xf32>
    %c0_4 = arith.constant 0 : index
    %c0_5 = arith.constant 0 : index
    %c0_6 = arith.constant 0 : index
    %11 = vector.load %arg5[%c0_4, %c0_5, %c0_6] : memref<1x32x96xbf16, #tpu.memory_space<vmem>>, vector<1x32x96xbf16>
    %12 = vector.shape_cast %11 : vector<1x32x96xbf16> to vector<32x96xbf16>
    %c0_7 = arith.constant 0 : index
    %c0_8 = arith.constant 0 : index
    %c0_9 = arith.constant 0 : index
    %13 = vector.load %arg6[%c0_7, %c0_8, %c0_9] : memref<1x1x96xf32, #tpu.memory_space<vmem>>, vector<1x1x96xf32>
    %14 = vector.shape_cast %13 : vector<1x1x96xf32> to vector<1x96xf32>
    %15 = arith.truncf %4 : vector<8x32xf32> to vector<8x32xbf16>
    %cst_10 = arith.constant dense<0.000000e+00> : vector<8x96xf32>
    %16 = tpu.matmul %15, %12, %cst_10 {dimension_numbers = #tpu.dot_dimension_numbers<[1], [0], [0], [1], [0, 0, 1, 1], [], []>} : vector<8x32xbf16>, vector<32x96xbf16>, vector<8x96xf32> -> vector<8x96xf32>
    %17 = vector.broadcast %14 : vector<1x96xf32> to vector<8x96xf32>
    %18 = arith.addf %16, %17 : vector<8x96xf32>
    %19 = vector.extract_strided_slice %18 {offsets = [0, 0], sizes = [8, 32], strides = [1, 1]} : vector<8x96xf32> to vector<8x32xf32>
    %20 = vector.extract_strided_slice %18 {offsets = [0, 32], sizes = [8, 32], strides = [1, 1]} : vector<8x96xf32> to vector<8x32xf32>
    %21 = vector.extract_strided_slice %18 {offsets = [0, 64], sizes = [8, 32], strides = [1, 1]} : vector<8x96xf32> to vector<8x32xf32>
    %22 = vector.extract_strided_slice %19 {offsets = [0, 0], sizes = [8, 8], strides = [1, 1]} : vector<8x32xf32> to vector<8x8xf32>
    %23 = arith.truncf %22 : vector<8x8xf32> to vector<8x8xbf16>
    %c0_11 = arith.constant 0 : index
    %c0_12 = arith.constant 0 : index
    %c0_13 = arith.constant 0 : index
    %24 = vector.load %arg27[%c0_11, %c0_12, %c0_13] : memref<4x8x8xbf16, #tpu.memory_space<vmem>>, vector<1x8x8xbf16>
    %25 = vector.shape_cast %24 : vector<1x8x8xbf16> to vector<8x8xbf16>
    %26 = vector.shape_cast %23 : vector<8x8xbf16> to vector<1x8x8xbf16>
    tpu.vector_store %arg27[%c0_11, %c0_12, %c0_13], %26 {strides = array<i32>} : memref<4x8x8xbf16, #tpu.memory_space<vmem>>, vector<1x8x8xbf16>,
    %27 = vector.extract_strided_slice %20 {offsets = [0, 0], sizes = [8, 8], strides = [1, 1]} : vector<8x32xf32> to vector<8x8xf32>
    %28 = arith.truncf %27 : vector<8x8xf32> to vector<8x8xbf16>
    %c0_14 = arith.constant 0 : index
    %c0_15 = arith.constant 0 : index
    %c0_16 = arith.constant 0 : index
    %29 = vector.load %arg28[%c0_14, %c0_15, %c0_16] : memref<4x8x8xbf16, #tpu.memory_space<vmem>>, vector<1x8x8xbf16>
    %30 = vector.shape_cast %29 : vector<1x8x8xbf16> to vector<8x8xbf16>
    %31 = vector.shape_cast %28 : vector<8x8xbf16> to vector<1x8x8xbf16>
    tpu.vector_store %arg28[%c0_14, %c0_15, %c0_16], %31 {strides = array<i32>} : memref<4x8x8xbf16, #tpu.memory_space<vmem>>, vector<1x8x8xbf16>,
    %32 = vector.extract_strided_slice %21 {offsets = [0, 0], sizes = [8, 8], strides = [1, 1]} : vector<8x32xf32> to vector<8x8xf32>
    %33 = arith.truncf %32 : vector<8x8xf32> to vector<8x8xbf16>
    %c0_17 = arith.constant 0 : index
    %c0_18 = arith.constant 0 : index
    %c0_19 = arith.constant 0 : index
    %34 = vector.load %arg29[%c0_17, %c0_18, %c0_19] : memref<4x8x8xbf16, #tpu.memory_space<vmem>>, vector<1x8x8xbf16>
    %35 = vector.shape_cast %34 : vector<1x8x8xbf16> to vector<8x8xbf16>
    %36 = vector.shape_cast %33 : vector<8x8xbf16> to vector<1x8x8xbf16>
    tpu.vector_store %arg29[%c0_17, %c0_18, %c0_19], %36 {strides = array<i32>} : memref<4x8x8xbf16, #tpu.memory_space<vmem>>, vector<1x8x8xbf16>,
    %37 = vector.extract_strided_slice %19 {offsets = [0, 8], sizes = [8, 8], strides = [1, 1]} : vector<8x32xf32> to vector<8x8xf32>
    %38 = arith.truncf %37 : vector<8x8xf32> to vector<8x8xbf16>
    %c1 = arith.constant 1 : index
    %c0_20 = arith.constant 0 : index
    %c0_21 = arith.constant 0 : index
    %39 = vector.load %arg27[%c1, %c0_20, %c0_21] : memref<4x8x8xbf16, #tpu.memory_space<vmem>>, vector<1x8x8xbf16>
    %40 = vector.shape_cast %39 : vector<1x8x8xbf16> to vector<8x8xbf16>
    %41 = vector.shape_cast %38 : vector<8x8xbf16> to vector<1x8x8xbf16>
    tpu.vector_store %arg27[%c1, %c0_20, %c0_21], %41 {strides = array<i32>} : memref<4x8x8xbf16, #tpu.memory_space<vmem>>, vector<1x8x8xbf16>,
    %42 = vector.extract_strided_slice %20 {offsets = [0, 8], sizes = [8, 8], strides = [1, 1]} : vector<8x32xf32> to vector<8x8xf32>
    %43 = arith.truncf %42 : vector<8x8xf32> to vector<8x8xbf16>
    %c1_22 = arith.constant 1 : index
    %c0_23 = arith.constant 0 : index
    %c0_24 = arith.constant 0 : index
    %44 = vector.load %arg28[%c1_22, %c0_23, %c0_24] : memref<4x8x8xbf16, #tpu.memory_space<vmem>>, vector<1x8x8xbf16>
    %45 = vector.shape_cast %44 : vector<1x8x8xbf16> to vector<8x8xbf16>
    %46 = vector.shape_cast %43 : vector<8x8xbf16> to vector<1x8x8xbf16>
    tpu.vector_store %arg28[%c1_22, %c0_23, %c0_24], %46 {strides = array<i32>} : memref<4x8x8xbf16, #tpu.memory_space<vmem>>, vector<1x8x8xbf16>,
    %47 = vector.extract_strided_slice %21 {offsets = [0, 8], sizes = [8, 8], strides = [1, 1]} : vector<8x32xf32> to vector<8x8xf32>
    %48 = arith.truncf %47 : vector<8x8xf32> to vector<8x8xbf16>
    %c1_25 = arith.constant 1 : index
    %c0_26 = arith.constant 0 : index
    %c0_27 = arith.constant 0 : index
    %49 = vector.load %arg29[%c1_25, %c0_26, %c0_27] : memref<4x8x8xbf16, #tpu.memory_space<vmem>>, vector<1x8x8xbf16>
    %50 = vector.shape_cast %49 : vector<1x8x8xbf16> to vector<8x8xbf16>
    %51 = vector.shape_cast %48 : vector<8x8xbf16> to vector<1x8x8xbf16>
    tpu.vector_store %arg29[%c1_25, %c0_26, %c0_27], %51 {strides = array<i32>} : memref<4x8x8xbf16, #tpu.memory_space<vmem>>, vector<1x8x8xbf16>,
    %52 = vector.extract_strided_slice %19 {offsets = [0, 16], sizes = [8, 8], strides = [1, 1]} : vector<8x32xf32> to vector<8x8xf32>
    %53 = arith.truncf %52 : vector<8x8xf32> to vector<8x8xbf16>
    %c2 = arith.constant 2 : index
    %c0_28 = arith.constant 0 : index
    %c0_29 = arith.constant 0 : index
    %54 = vector.load %arg27[%c2, %c0_28, %c0_29] : memref<4x8x8xbf16, #tpu.memory_space<vmem>>, vector<1x8x8xbf16>
    %55 = vector.shape_cast %54 : vector<1x8x8xbf16> to vector<8x8xbf16>
    %56 = vector.shape_cast %53 : vector<8x8xbf16> to vector<1x8x8xbf16>
    tpu.vector_store %arg27[%c2, %c0_28, %c0_29], %56 {strides = array<i32>} : memref<4x8x8xbf16, #tpu.memory_space<vmem>>, vector<1x8x8xbf16>,
    %57 = vector.extract_strided_slice %20 {offsets = [0, 16], sizes = [8, 8], strides = [1, 1]} : vector<8x32xf32> to vector<8x8xf32>
    %58 = arith.truncf %57 : vector<8x8xf32> to vector<8x8xbf16>
    %c2_30 = arith.constant 2 : index
    %c0_31 = arith.constant 0 : index
    %c0_32 = arith.constant 0 : index
    %59 = vector.load %arg28[%c2_30, %c0_31, %c0_32] : memref<4x8x8xbf16, #tpu.memory_space<vmem>>, vector<1x8x8xbf16>
    %60 = vector.shape_cast %59 : vector<1x8x8xbf16> to vector<8x8xbf16>
    %61 = vector.shape_cast %58 : vector<8x8xbf16> to vector<1x8x8xbf16>
    tpu.vector_store %arg28[%c2_30, %c0_31, %c0_32], %61 {strides = array<i32>} : memref<4x8x8xbf16, #tpu.memory_space<vmem>>, vector<1x8x8xbf16>,
    %62 = vector.extract_strided_slice %21 {offsets = [0, 16], sizes = [8, 8], strides = [1, 1]} : vector<8x32xf32> to vector<8x8xf32>
    %63 = arith.truncf %62 : vector<8x8xf32> to vector<8x8xbf16>
    %c2_33 = arith.constant 2 : index
    %c0_34 = arith.constant 0 : index
    %c0_35 = arith.constant 0 : index
    %64 = vector.load %arg29[%c2_33, %c0_34, %c0_35] : memref<4x8x8xbf16, #tpu.memory_space<vmem>>, vector<1x8x8xbf16>
    %65 = vector.shape_cast %64 : vector<1x8x8xbf16> to vector<8x8xbf16>
    %66 = vector.shape_cast %63 : vector<8x8xbf16> to vector<1x8x8xbf16>
    tpu.vector_store %arg29[%c2_33, %c0_34, %c0_35], %66 {strides = array<i32>} : memref<4x8x8xbf16, #tpu.memory_space<vmem>>, vector<1x8x8xbf16>,
    %67 = vector.extract_strided_slice %19 {offsets = [0, 24], sizes = [8, 8], strides = [1, 1]} : vector<8x32xf32> to vector<8x8xf32>
    %68 = arith.truncf %67 : vector<8x8xf32> to vector<8x8xbf16>
    %c3 = arith.constant 3 : index
    %c0_36 = arith.constant 0 : index
    %c0_37 = arith.constant 0 : index
    %69 = vector.load %arg27[%c3, %c0_36, %c0_37] : memref<4x8x8xbf16, #tpu.memory_space<vmem>>, vector<1x8x8xbf16>
    %70 = vector.shape_cast %69 : vector<1x8x8xbf16> to vector<8x8xbf16>
    %71 = vector.shape_cast %68 : vector<8x8xbf16> to vector<1x8x8xbf16>
    tpu.vector_store %arg27[%c3, %c0_36, %c0_37], %71 {strides = array<i32>} : memref<4x8x8xbf16, #tpu.memory_space<vmem>>, vector<1x8x8xbf16>,
    %72 = vector.extract_strided_slice %20 {offsets = [0, 24], sizes = [8, 8], strides = [1, 1]} : vector<8x32xf32> to vector<8x8xf32>
    %73 = arith.truncf %72 : vector<8x8xf32> to vector<8x8xbf16>
    %c3_38 = arith.constant 3 : index
    %c0_39 = arith.constant 0 : index
    %c0_40 = arith.constant 0 : index
    %74 = vector.load %arg28[%c3_38, %c0_39, %c0_40] : memref<4x8x8xbf16, #tpu.memory_space<vmem>>, vector<1x8x8xbf16>
    %75 = vector.shape_cast %74 : vector<1x8x8xbf16> to vector<8x8xbf16>
    %76 = vector.shape_cast %73 : vector<8x8xbf16> to vector<1x8x8xbf16>
    tpu.vector_store %arg28[%c3_38, %c0_39, %c0_40], %76 {strides = array<i32>} : memref<4x8x8xbf16, #tpu.memory_space<vmem>>, vector<1x8x8xbf16>,
    %77 = vector.extract_strided_slice %21 {offsets = [0, 24], sizes = [8, 8], strides = [1, 1]} : vector<8x32xf32> to vector<8x8xf32>
    %78 = arith.truncf %77 : vector<8x8xf32> to vector<8x8xbf16>
    %c3_41 = arith.constant 3 : index
    %c0_42 = arith.constant 0 : index
    %c0_43 = arith.constant 0 : index
    %79 = vector.load %arg29[%c3_41, %c0_42, %c0_43] : memref<4x8x8xbf16, #tpu.memory_space<vmem>>, vector<1x8x8xbf16>
    %80 = vector.shape_cast %79 : vector<1x8x8xbf16> to vector<8x8xbf16>
    %81 = vector.shape_cast %78 : vector<8x8xbf16> to vector<1x8x8xbf16>
    tpu.vector_store %arg29[%c3_41, %c0_42, %c0_43], %81 {strides = array<i32>} : memref<4x8x8xbf16, #tpu.memory_space<vmem>>, vector<1x8x8xbf16>,
    %c0_44 = arith.constant 0 : index
    %c0_45 = arith.constant 0 : index
    %c0_46 = arith.constant 0 : index
    %82 = vector.load %arg27[%c0_44, %c0_45, %c0_46] : memref<4x8x8xbf16, #tpu.memory_space<vmem>>, vector<4x8x8xbf16>
    %c0_47 = arith.constant 0 : index
    %c0_48 = arith.constant 0 : index
    %c0_49 = arith.constant 0 : index
    %83 = vector.load %arg28[%c0_47, %c0_48, %c0_49] : memref<4x8x8xbf16, #tpu.memory_space<vmem>>, vector<4x8x8xbf16>
    %c0_50 = arith.constant 0 : index
    %c0_51 = arith.constant 0 : index
    %c0_52 = arith.constant 0 : index
    %84 = vector.load %arg29[%c0_50, %c0_51, %c0_52] : memref<4x8x8xbf16, #tpu.memory_space<vmem>>, vector<4x8x8xbf16>
    %cst_53 = arith.constant dense<0.000000e+00> : vector<4x8x8xf32>
    %85 = tpu.matmul %82, %83, %cst_53 {dimension_numbers = #tpu.dot_dimension_numbers<[2], [2], [1], [1], [0, 0, 0, 1, 1, 1], [0], [0]>} : vector<4x8x8xbf16>, vector<4x8x8xbf16>, vector<4x8x8xf32> -> vector<4x8x8xf32>
    %cst_54 = arith.constant 0.353553385 : f32
    %86 = vector.broadcast %cst_54 : f32 to vector<4x8x8xf32>
    %87 = arith.mulf %85, %86 : vector<4x8x8xf32>
    %88 = vector.shape_cast %10 : vector<8x8xf32> to vector<1x8x8xf32>
    %89 = vector.broadcast %88 : vector<1x8x8xf32> to vector<4x8x8xf32>
    %90 = arith.addf %87, %89 : vector<4x8x8xf32>
    %cst_55 = arith.constant dense<0xFF800000> : vector<4x8xf32>
    %91 = vector.multi_reduction <maximumf>, %90, %cst_55 [2] : vector<4x8x8xf32> to vector<4x8xf32>
    %92 = vector.shape_cast %91 : vector<4x8xf32> to vector<4x8x1xf32>
    %93 = vector.broadcast %92 : vector<4x8x1xf32> to vector<4x8x8xf32>
    %94 = arith.subf %90, %93 : vector<4x8x8xf32>
    %95 = math.exp %94 : vector<4x8x8xf32>
    %cst_56 = arith.constant dense<0.000000e+00> : vector<4x8xf32>
    %96 = vector.multi_reduction <add>, %95, %cst_56 [2] : vector<4x8x8xf32> to vector<4x8xf32>
    %97 = vector.shape_cast %96 : vector<4x8xf32> to vector<4x8x1xf32>
    %98 = vector.broadcast %97 : vector<4x8x1xf32> to vector<4x8x8xf32>
    %99 = arith.divf %95, %98 : vector<4x8x8xf32>
    %100 = arith.truncf %99 : vector<4x8x8xf32> to vector<4x8x8xbf16>
    %cst_57 = arith.constant dense<0.000000e+00> : vector<4x8x8xf32>
    %101 = tpu.matmul %100, %84, %cst_57 {dimension_numbers = #tpu.dot_dimension_numbers<[2], [1], [1], [2], [0, 0, 0, 1, 1, 2], [0], [0]>} : vector<4x8x8xbf16>, vector<4x8x8xbf16>, vector<4x8x8xf32> -> vector<4x8x8xf32>
    %102 = vector.extract_strided_slice %101 {offsets = [0, 0, 0], sizes = [1, 8, 8], strides = [1, 1, 1]} : vector<4x8x8xf32> to vector<1x8x8xf32>
    %103 = vector.shape_cast %102 : vector<1x8x8xf32> to vector<8x8xf32>
    %104 = arith.truncf %103 : vector<8x8xf32> to vector<8x8xbf16>
    %c0_58 = arith.constant 0 : index
    %c0_59 = arith.constant 0 : index
    %105 = vector.load %arg30[%c0_58, %c0_59] : memref<8x32xbf16, #tpu.memory_space<vmem>>, vector<8x8xbf16>
    tpu.vector_store %arg30[%c0_58, %c0_59], %104 {strides = array<i32>} : memref<8x32xbf16, #tpu.memory_space<vmem>>, vector<8x8xbf16>,
    %106 = vector.extract_strided_slice %101 {offsets = [1, 0, 0], sizes = [1, 8, 8], strides = [1, 1, 1]} : vector<4x8x8xf32> to vector<1x8x8xf32>
    %107 = vector.shape_cast %106 : vector<1x8x8xf32> to vector<8x8xf32>
    %108 = arith.truncf %107 : vector<8x8xf32> to vector<8x8xbf16>
    %c0_60 = arith.constant 0 : index
    %c8 = arith.constant 8 : index
    %109 = vector.load %arg30[%c0_60, %c8] : memref<8x32xbf16, #tpu.memory_space<vmem>>, vector<8x8xbf16>
    tpu.vector_store %arg30[%c0_60, %c8], %108 {strides = array<i32>} : memref<8x32xbf16, #tpu.memory_space<vmem>>, vector<8x8xbf16>,
    %110 = vector.extract_strided_slice %101 {offsets = [2, 0, 0], sizes = [1, 8, 8], strides = [1, 1, 1]} : vector<4x8x8xf32> to vector<1x8x8xf32>
    %111 = vector.shape_cast %110 : vector<1x8x8xf32> to vector<8x8xf32>
    %112 = arith.truncf %111 : vector<8x8xf32> to vector<8x8xbf16>
    %c0_61 = arith.constant 0 : index
    %c16 = arith.constant 16 : index
    %113 = vector.load %arg30[%c0_61, %c16] : memref<8x32xbf16, #tpu.memory_space<vmem>>, vector<8x8xbf16>
    tpu.vector_store %arg30[%c0_61, %c16], %112 {strides = array<i32>} : memref<8x32xbf16, #tpu.memory_space<vmem>>, vector<8x8xbf16>,
    %114 = vector.extract_strided_slice %101 {offsets = [3, 0, 0], sizes = [1, 8, 8], strides = [1, 1, 1]} : vector<4x8x8xf32> to vector<1x8x8xf32>
    %115 = vector.shape_cast %114 : vector<1x8x8xf32> to vector<8x8xf32>
    %116 = arith.truncf %115 : vector<8x8xf32> to vector<8x8xbf16>
    %c0_62 = arith.constant 0 : index
    %c24 = arith.constant 24 : index
    %117 = vector.load %arg30[%c0_62, %c24] : memref<8x32xbf16, #tpu.memory_space<vmem>>, vector<8x8xbf16>
    tpu.vector_store %arg30[%c0_62, %c24], %116 {strides = array<i32>} : memref<8x32xbf16, #tpu.memory_space<vmem>>, vector<8x8xbf16>,
    %c0_63 = arith.constant 0 : index
    %c0_64 = arith.constant 0 : index
    %118 = vector.load %arg30[%c0_63, %c0_64] : memref<8x32xbf16, #tpu.memory_space<vmem>>, vector<8x32xbf16>
    %c0_65 = arith.constant 0 : index
    %c0_66 = arith.constant 0 : index
    %c0_67 = arith.constant 0 : index
    %119 = vector.load %arg7[%c0_65, %c0_66, %c0_67] : memref<1x32x32xbf16, #tpu.memory_space<vmem>>, vector<1x32x32xbf16>
    %120 = vector.shape_cast %119 : vector<1x32x32xbf16> to vector<32x32xbf16>
    %cst_68 = arith.constant dense<0.000000e+00> : vector<8x32xf32>
    %121 = tpu.matmul %118, %120, %cst_68 {dimension_numbers = #tpu.dot_dimension_numbers<[1], [0], [0], [1], [0, 0, 1, 1], [], []>} : vector<8x32xbf16>, vector<32x32xbf16>, vector<8x32xf32> -> vector<8x32xf32>
    %c0_69 = arith.constant 0 : index
    %c0_70 = arith.constant 0 : index
    %c0_71 = arith.constant 0 : index
    %122 = vector.load %arg8[%c0_69, %c0_70, %c0_71] : memref<1x1x32xf32, #tpu.memory_space<vmem>>, vector<1x1x32xf32>
    %123 = vector.shape_cast %122 : vector<1x1x32xf32> to vector<1x32xf32>
    %124 = vector.broadcast %123 : vector<1x32xf32> to vector<8x32xf32>
    %125 = arith.addf %121, %124 : vector<8x32xf32>
    %126 = arith.addf %125, %4 : vector<8x32xf32>
    %c0_72 = arith.constant 0 : index
    %c0_73 = arith.constant 0 : index
    %c0_74 = arith.constant 0 : index
    %127 = vector.load %arg9[%c0_72, %c0_73, %c0_74] : memref<1x1x32xf32, #tpu.memory_space<vmem>>, vector<1x1x32xf32>
    %128 = vector.shape_cast %127 : vector<1x1x32xf32> to vector<1x32xf32>
    %c0_75 = arith.constant 0 : index
    %c0_76 = arith.constant 0 : index
    %c0_77 = arith.constant 0 : index
    %129 = vector.load %arg10[%c0_75, %c0_76, %c0_77] : memref<1x1x32xf32, #tpu.memory_space<vmem>>, vector<1x1x32xf32>
    %130 = vector.shape_cast %129 : vector<1x1x32xf32> to vector<1x32xf32>
    %cst_78 = arith.constant dense<0.000000e+00> : vector<8xf32>
    %131 = vector.multi_reduction <add>, %126, %cst_78 [1] : vector<8x32xf32> to vector<8xf32>
    %132 = vector.shape_cast %131 : vector<8xf32> to vector<8x1xf32>
    %cst_79 = arith.constant 3.200000e+01 : f32
    %133 = vector.broadcast %cst_79 : f32 to vector<8x1xf32>
    %134 = arith.divf %132, %133 : vector<8x1xf32>
    %135 = vector.broadcast %134 : vector<8x1xf32> to vector<8x32xf32>
    %136 = arith.subf %126, %135 : vector<8x32xf32>
    %137 = arith.mulf %136, %136 : vector<8x32xf32>
    %cst_80 = arith.constant dense<0.000000e+00> : vector<8xf32>
    %138 = vector.multi_reduction <add>, %137, %cst_80 [1] : vector<8x32xf32> to vector<8xf32>
    %139 = vector.shape_cast %138 : vector<8xf32> to vector<8x1xf32>
    %cst_81 = arith.constant 3.200000e+01 : f32
    %140 = vector.broadcast %cst_81 : f32 to vector<8x1xf32>
    %141 = arith.divf %139, %140 : vector<8x1xf32>
    %142 = vector.broadcast %134 : vector<8x1xf32> to vector<8x32xf32>
    %143 = arith.subf %126, %142 : vector<8x32xf32>
    %cst_82 = arith.constant 9.99999997E-7 : f32
    %144 = vector.broadcast %cst_82 : f32 to vector<8x1xf32>
    %145 = arith.addf %141, %144 : vector<8x1xf32>
    %146 = math.rsqrt %145 : vector<8x1xf32>
    %147 = vector.broadcast %146 : vector<8x1xf32> to vector<8x32xf32>
    %148 = arith.mulf %143, %147 : vector<8x32xf32>
    %149 = vector.broadcast %128 : vector<1x32xf32> to vector<8x32xf32>
    %150 = arith.mulf %148, %149 : vector<8x32xf32>
    %151 = vector.broadcast %130 : vector<1x32xf32> to vector<8x32xf32>
    %152 = arith.addf %150, %151 : vector<8x32xf32>
    %c0_83 = arith.constant 0 : index
    %c0_84 = arith.constant 0 : index
    %c0_85 = arith.constant 0 : index
    %153 = vector.load %arg3[%c0_83, %c0_84, %c0_85] : memref<1x8x32xf32, #tpu.memory_space<vmem>>, vector<1x8x32xf32>
    %154 = vector.shape_cast %153 : vector<1x8x32xf32> to vector<8x32xf32>
    %155 = arith.truncf %154 : vector<8x32xf32> to vector<8x32xbf16>
    %c0_86 = arith.constant 0 : index
    %c0_87 = arith.constant 0 : index
    %c0_88 = arith.constant 0 : index
    %156 = vector.load %arg11[%c0_86, %c0_87, %c0_88] : memref<1x32x96xbf16, #tpu.memory_space<vmem>>, vector<1x32x96xbf16>
    %157 = vector.shape_cast %156 : vector<1x32x96xbf16> to vector<32x96xbf16>
    %c0_89 = arith.constant 0 : index
    %c0_90 = arith.constant 0 : index
    %c0_91 = arith.constant 0 : index
    %158 = vector.load %arg12[%c0_89, %c0_90, %c0_91] : memref<1x1x96xf32, #tpu.memory_space<vmem>>, vector<1x1x96xf32>
    %159 = vector.shape_cast %158 : vector<1x1x96xf32> to vector<1x96xf32>
    %160 = arith.truncf %152 : vector<8x32xf32> to vector<8x32xbf16>
    %161 = vector.extract_strided_slice %157 {offsets = [0, 0], sizes = [32, 32], strides = [1, 1]} : vector<32x96xbf16> to vector<32x32xbf16>
    %cst_92 = arith.constant dense<0.000000e+00> : vector<8x32xf32>
    %162 = tpu.matmul %160, %161, %cst_92 {dimension_numbers = #tpu.dot_dimension_numbers<[1], [0], [0], [1], [0, 0, 1, 1], [], []>} : vector<8x32xbf16>, vector<32x32xbf16>, vector<8x32xf32> -> vector<8x32xf32>
    %163 = vector.extract_strided_slice %159 {offsets = [0, 0], sizes = [1, 32], strides = [1, 1]} : vector<1x96xf32> to vector<1x32xf32>
    %164 = vector.broadcast %163 : vector<1x32xf32> to vector<8x32xf32>
    %165 = arith.addf %162, %164 : vector<8x32xf32>
    %166 = vector.extract_strided_slice %157 {offsets = [0, 32], sizes = [32, 64], strides = [1, 1]} : vector<32x96xbf16> to vector<32x64xbf16>
    %cst_93 = arith.constant dense<0.000000e+00> : vector<8x64xf32>
    %167 = tpu.matmul %155, %166, %cst_93 {dimension_numbers = #tpu.dot_dimension_numbers<[1], [0], [0], [1], [0, 0, 1, 1], [], []>} : vector<8x32xbf16>, vector<32x64xbf16>, vector<8x64xf32> -> vector<8x64xf32>
    %168 = vector.extract_strided_slice %159 {offsets = [0, 32], sizes = [1, 64], strides = [1, 1]} : vector<1x96xf32> to vector<1x64xf32>
    %169 = vector.broadcast %168 : vector<1x64xf32> to vector<8x64xf32>
    %170 = arith.addf %167, %169 : vector<8x64xf32>
    %171 = vector.extract_strided_slice %170 {offsets = [0, 0], sizes = [8, 32], strides = [1, 1]} : vector<8x64xf32> to vector<8x32xf32>
    %172 = vector.extract_strided_slice %170 {offsets = [0, 32], sizes = [8, 32], strides = [1, 1]} : vector<8x64xf32> to vector<8x32xf32>
    %173 = vector.extract_strided_slice %165 {offsets = [0, 0], sizes = [8, 8], strides = [1, 1]} : vector<8x32xf32> to vector<8x8xf32>
    %174 = arith.truncf %173 : vector<8x8xf32> to vector<8x8xbf16>
    %c0_94 = arith.constant 0 : index
    %c0_95 = arith.constant 0 : index
    %c0_96 = arith.constant 0 : index
    %175 = vector.load %arg27[%c0_94, %c0_95, %c0_96] : memref<4x8x8xbf16, #tpu.memory_space<vmem>>, vector<1x8x8xbf16>
    %176 = vector.shape_cast %175 : vector<1x8x8xbf16> to vector<8x8xbf16>
    %177 = vector.shape_cast %174 : vector<8x8xbf16> to vector<1x8x8xbf16>
    tpu.vector_store %arg27[%c0_94, %c0_95, %c0_96], %177 {strides = array<i32>} : memref<4x8x8xbf16, #tpu.memory_space<vmem>>, vector<1x8x8xbf16>,
    %178 = vector.extract_strided_slice %171 {offsets = [0, 0], sizes = [8, 8], strides = [1, 1]} : vector<8x32xf32> to vector<8x8xf32>
    %179 = arith.truncf %178 : vector<8x8xf32> to vector<8x8xbf16>
    %c0_97 = arith.constant 0 : index
    %c0_98 = arith.constant 0 : index
    %c0_99 = arith.constant 0 : index
    %180 = vector.load %arg28[%c0_97, %c0_98, %c0_99] : memref<4x8x8xbf16, #tpu.memory_space<vmem>>, vector<1x8x8xbf16>
    %181 = vector.shape_cast %180 : vector<1x8x8xbf16> to vector<8x8xbf16>
    %182 = vector.shape_cast %179 : vector<8x8xbf16> to vector<1x8x8xbf16>
    tpu.vector_store %arg28[%c0_97, %c0_98, %c0_99], %182 {strides = array<i32>} : memref<4x8x8xbf16, #tpu.memory_space<vmem>>, vector<1x8x8xbf16>,
    %183 = vector.extract_strided_slice %172 {offsets = [0, 0], sizes = [8, 8], strides = [1, 1]} : vector<8x32xf32> to vector<8x8xf32>
    %184 = arith.truncf %183 : vector<8x8xf32> to vector<8x8xbf16>
    %c0_100 = arith.constant 0 : index
    %c0_101 = arith.constant 0 : index
    %c0_102 = arith.constant 0 : index
    %185 = vector.load %arg29[%c0_100, %c0_101, %c0_102] : memref<4x8x8xbf16, #tpu.memory_space<vmem>>, vector<1x8x8xbf16>
    %186 = vector.shape_cast %185 : vector<1x8x8xbf16> to vector<8x8xbf16>
    %187 = vector.shape_cast %184 : vector<8x8xbf16> to vector<1x8x8xbf16>
    tpu.vector_store %arg29[%c0_100, %c0_101, %c0_102], %187 {strides = array<i32>} : memref<4x8x8xbf16, #tpu.memory_space<vmem>>, vector<1x8x8xbf16>,
    %188 = vector.extract_strided_slice %165 {offsets = [0, 8], sizes = [8, 8], strides = [1, 1]} : vector<8x32xf32> to vector<8x8xf32>
    %189 = arith.truncf %188 : vector<8x8xf32> to vector<8x8xbf16>
    %c1_103 = arith.constant 1 : index
    %c0_104 = arith.constant 0 : index
    %c0_105 = arith.constant 0 : index
    %190 = vector.load %arg27[%c1_103, %c0_104, %c0_105] : memref<4x8x8xbf16, #tpu.memory_space<vmem>>, vector<1x8x8xbf16>
    %191 = vector.shape_cast %190 : vector<1x8x8xbf16> to vector<8x8xbf16>
    %192 = vector.shape_cast %189 : vector<8x8xbf16> to vector<1x8x8xbf16>
    tpu.vector_store %arg27[%c1_103, %c0_104, %c0_105], %192 {strides = array<i32>} : memref<4x8x8xbf16, #tpu.memory_space<vmem>>, vector<1x8x8xbf16>,
    %193 = vector.extract_strided_slice %171 {offsets = [0, 8], sizes = [8, 8], strides = [1, 1]} : vector<8x32xf32> to vector<8x8xf32>
    %194 = arith.truncf %193 : vector<8x8xf32> to vector<8x8xbf16>
    %c1_106 = arith.constant 1 : index
    %c0_107 = arith.constant 0 : index
    %c0_108 = arith.constant 0 : index
    %195 = vector.load %arg28[%c1_106, %c0_107, %c0_108] : memref<4x8x8xbf16, #tpu.memory_space<vmem>>, vector<1x8x8xbf16>
    %196 = vector.shape_cast %195 : vector<1x8x8xbf16> to vector<8x8xbf16>
    %197 = vector.shape_cast %194 : vector<8x8xbf16> to vector<1x8x8xbf16>
    tpu.vector_store %arg28[%c1_106, %c0_107, %c0_108], %197 {strides = array<i32>} : memref<4x8x8xbf16, #tpu.memory_space<vmem>>, vector<1x8x8xbf16>,
    %198 = vector.extract_strided_slice %172 {offsets = [0, 8], sizes = [8, 8], strides = [1, 1]} : vector<8x32xf32> to vector<8x8xf32>
    %199 = arith.truncf %198 : vector<8x8xf32> to vector<8x8xbf16>
    %c1_109 = arith.constant 1 : index
    %c0_110 = arith.constant 0 : index
    %c0_111 = arith.constant 0 : index
    %200 = vector.load %arg29[%c1_109, %c0_110, %c0_111] : memref<4x8x8xbf16, #tpu.memory_space<vmem>>, vector<1x8x8xbf16>
    %201 = vector.shape_cast %200 : vector<1x8x8xbf16> to vector<8x8xbf16>
    %202 = vector.shape_cast %199 : vector<8x8xbf16> to vector<1x8x8xbf16>
    tpu.vector_store %arg29[%c1_109, %c0_110, %c0_111], %202 {strides = array<i32>} : memref<4x8x8xbf16, #tpu.memory_space<vmem>>, vector<1x8x8xbf16>,
    %203 = vector.extract_strided_slice %165 {offsets = [0, 16], sizes = [8, 8], strides = [1, 1]} : vector<8x32xf32> to vector<8x8xf32>
    %204 = arith.truncf %203 : vector<8x8xf32> to vector<8x8xbf16>
    %c2_112 = arith.constant 2 : index
    %c0_113 = arith.constant 0 : index
    %c0_114 = arith.constant 0 : index
    %205 = vector.load %arg27[%c2_112, %c0_113, %c0_114] : memref<4x8x8xbf16, #tpu.memory_space<vmem>>, vector<1x8x8xbf16>
    %206 = vector.shape_cast %205 : vector<1x8x8xbf16> to vector<8x8xbf16>
    %207 = vector.shape_cast %204 : vector<8x8xbf16> to vector<1x8x8xbf16>
    tpu.vector_store %arg27[%c2_112, %c0_113, %c0_114], %207 {strides = array<i32>} : memref<4x8x8xbf16, #tpu.memory_space<vmem>>, vector<1x8x8xbf16>,
    %208 = vector.extract_strided_slice %171 {offsets = [0, 16], sizes = [8, 8], strides = [1, 1]} : vector<8x32xf32> to vector<8x8xf32>
    %209 = arith.truncf %208 : vector<8x8xf32> to vector<8x8xbf16>
    %c2_115 = arith.constant 2 : index
    %c0_116 = arith.constant 0 : index
    %c0_117 = arith.constant 0 : index
    %210 = vector.load %arg28[%c2_115, %c0_116, %c0_117] : memref<4x8x8xbf16, #tpu.memory_space<vmem>>, vector<1x8x8xbf16>
    %211 = vector.shape_cast %210 : vector<1x8x8xbf16> to vector<8x8xbf16>
    %212 = vector.shape_cast %209 : vector<8x8xbf16> to vector<1x8x8xbf16>
    tpu.vector_store %arg28[%c2_115, %c0_116, %c0_117], %212 {strides = array<i32>} : memref<4x8x8xbf16, #tpu.memory_space<vmem>>, vector<1x8x8xbf16>,
    %213 = vector.extract_strided_slice %172 {offsets = [0, 16], sizes = [8, 8], strides = [1, 1]} : vector<8x32xf32> to vector<8x8xf32>
    %214 = arith.truncf %213 : vector<8x8xf32> to vector<8x8xbf16>
    %c2_118 = arith.constant 2 : index
    %c0_119 = arith.constant 0 : index
    %c0_120 = arith.constant 0 : index
    %215 = vector.load %arg29[%c2_118, %c0_119, %c0_120] : memref<4x8x8xbf16, #tpu.memory_space<vmem>>, vector<1x8x8xbf16>
    %216 = vector.shape_cast %215 : vector<1x8x8xbf16> to vector<8x8xbf16>
    %217 = vector.shape_cast %214 : vector<8x8xbf16> to vector<1x8x8xbf16>
    tpu.vector_store %arg29[%c2_118, %c0_119, %c0_120], %217 {strides = array<i32>} : memref<4x8x8xbf16, #tpu.memory_space<vmem>>, vector<1x8x8xbf16>,
    %218 = vector.extract_strided_slice %165 {offsets = [0, 24], sizes = [8, 8], strides = [1, 1]} : vector<8x32xf32> to vector<8x8xf32>
    %219 = arith.truncf %218 : vector<8x8xf32> to vector<8x8xbf16>
    %c3_121 = arith.constant 3 : index
    %c0_122 = arith.constant 0 : index
    %c0_123 = arith.constant 0 : index
    %220 = vector.load %arg27[%c3_121, %c0_122, %c0_123] : memref<4x8x8xbf16, #tpu.memory_space<vmem>>, vector<1x8x8xbf16>
    %221 = vector.shape_cast %220 : vector<1x8x8xbf16> to vector<8x8xbf16>
    %222 = vector.shape_cast %219 : vector<8x8xbf16> to vector<1x8x8xbf16>
    tpu.vector_store %arg27[%c3_121, %c0_122, %c0_123], %222 {strides = array<i32>} : memref<4x8x8xbf16, #tpu.memory_space<vmem>>, vector<1x8x8xbf16>,
    %223 = vector.extract_strided_slice %171 {offsets = [0, 24], sizes = [8, 8], strides = [1, 1]} : vector<8x32xf32> to vector<8x8xf32>
    %224 = arith.truncf %223 : vector<8x8xf32> to vector<8x8xbf16>
    %c3_124 = arith.constant 3 : index
    %c0_125 = arith.constant 0 : index
    %c0_126 = arith.constant 0 : index
    %225 = vector.load %arg28[%c3_124, %c0_125, %c0_126] : memref<4x8x8xbf16, #tpu.memory_space<vmem>>, vector<1x8x8xbf16>
    %226 = vector.shape_cast %225 : vector<1x8x8xbf16> to vector<8x8xbf16>
    %227 = vector.shape_cast %224 : vector<8x8xbf16> to vector<1x8x8xbf16>
    tpu.vector_store %arg28[%c3_124, %c0_125, %c0_126], %227 {strides = array<i32>} : memref<4x8x8xbf16, #tpu.memory_space<vmem>>, vector<1x8x8xbf16>,
    %228 = vector.extract_strided_slice %172 {offsets = [0, 24], sizes = [8, 8], strides = [1, 1]} : vector<8x32xf32> to vector<8x8xf32>
    %229 = arith.truncf %228 : vector<8x8xf32> to vector<8x8xbf16>
    %c3_127 = arith.constant 3 : index
    %c0_128 = arith.constant 0 : index
    %c0_129 = arith.constant 0 : index
    %230 = vector.load %arg29[%c3_127, %c0_128, %c0_129] : memref<4x8x8xbf16, #tpu.memory_space<vmem>>, vector<1x8x8xbf16>
    %231 = vector.shape_cast %230 : vector<1x8x8xbf16> to vector<8x8xbf16>
    %232 = vector.shape_cast %229 : vector<8x8xbf16> to vector<1x8x8xbf16>
    tpu.vector_store %arg29[%c3_127, %c0_128, %c0_129], %232 {strides = array<i32>} : memref<4x8x8xbf16, #tpu.memory_space<vmem>>, vector<1x8x8xbf16>,
    %c0_130 = arith.constant 0 : index
    %c0_131 = arith.constant 0 : index
    %c0_132 = arith.constant 0 : index
    %233 = vector.load %arg27[%c0_130, %c0_131, %c0_132] : memref<4x8x8xbf16, #tpu.memory_space<vmem>>, vector<4x8x8xbf16>
    %c0_133 = arith.constant 0 : index
    %c0_134 = arith.constant 0 : index
    %c0_135 = arith.constant 0 : index
    %234 = vector.load %arg28[%c0_133, %c0_134, %c0_135] : memref<4x8x8xbf16, #tpu.memory_space<vmem>>, vector<4x8x8xbf16>
    %c0_136 = arith.constant 0 : index
    %c0_137 = arith.constant 0 : index
    %c0_138 = arith.constant 0 : index
    %235 = vector.load %arg29[%c0_136, %c0_137, %c0_138] : memref<4x8x8xbf16, #tpu.memory_space<vmem>>, vector<4x8x8xbf16>
    %cst_139 = arith.constant dense<0.000000e+00> : vector<4x8x8xf32>
    %236 = tpu.matmul %233, %234, %cst_139 {dimension_numbers = #tpu.dot_dimension_numbers<[2], [2], [1], [1], [0, 0, 0, 1, 1, 1], [0], [0]>} : vector<4x8x8xbf16>, vector<4x8x8xbf16>, vector<4x8x8xf32> -> vector<4x8x8xf32>
    %cst_140 = arith.constant 0.353553385 : f32
    %237 = vector.broadcast %cst_140 : f32 to vector<4x8x8xf32>
    %238 = arith.mulf %236, %237 : vector<4x8x8xf32>
    %cst_141 = arith.constant dense<0xFF800000> : vector<4x8xf32>
    %239 = vector.multi_reduction <maximumf>, %238, %cst_141 [2] : vector<4x8x8xf32> to vector<4x8xf32>
    %240 = vector.shape_cast %239 : vector<4x8xf32> to vector<4x8x1xf32>
    %241 = vector.broadcast %240 : vector<4x8x1xf32> to vector<4x8x8xf32>
    %242 = arith.subf %238, %241 : vector<4x8x8xf32>
    %243 = math.exp %242 : vector<4x8x8xf32>
    %cst_142 = arith.constant dense<0.000000e+00> : vector<4x8xf32>
    %244 = vector.multi_reduction <add>, %243, %cst_142 [2] : vector<4x8x8xf32> to vector<4x8xf32>
    %245 = vector.shape_cast %244 : vector<4x8xf32> to vector<4x8x1xf32>
    %246 = vector.broadcast %245 : vector<4x8x1xf32> to vector<4x8x8xf32>
    %247 = arith.divf %243, %246 : vector<4x8x8xf32>
    %c0_143 = arith.constant 0 : index
    %c0_144 = arith.constant 0 : index
    %c0_145 = arith.constant 0 : index
    %c0_146 = arith.constant 0 : index
    %c0_147 = arith.constant 0 : index
    %248 = vector.load %arg26[%c0_143, %c0_144, %c0_145, %c0_146, %c0_147] : memref<1x1x4x8x8xf32, #tpu.memory_space<vmem>>, vector<1x1x4x8x8xf32>
    %249 = vector.shape_cast %248 : vector<1x1x4x8x8xf32> to vector<4x8x8xf32>
    %250 = vector.shape_cast %247 : vector<4x8x8xf32> to vector<1x1x4x8x8xf32>
    tpu.vector_store %arg26[%c0_143, %c0_144, %c0_145, %c0_146, %c0_147], %250 {strides = array<i32>} : memref<1x1x4x8x8xf32, #tpu.memory_space<vmem>>, vector<1x1x4x8x8xf32>,
    %251 = arith.truncf %247 : vector<4x8x8xf32> to vector<4x8x8xbf16>
    %cst_148 = arith.constant dense<0.000000e+00> : vector<4x8x8xf32>
    %252 = tpu.matmul %251, %235, %cst_148 {dimension_numbers = #tpu.dot_dimension_numbers<[2], [1], [1], [2], [0, 0, 0, 1, 1, 2], [0], [0]>} : vector<4x8x8xbf16>, vector<4x8x8xbf16>, vector<4x8x8xf32> -> vector<4x8x8xf32>
    %253 = vector.extract_strided_slice %252 {offsets = [0, 0, 0], sizes = [1, 8, 8], strides = [1, 1, 1]} : vector<4x8x8xf32> to vector<1x8x8xf32>
    %254 = vector.shape_cast %253 : vector<1x8x8xf32> to vector<8x8xf32>
    %255 = arith.truncf %254 : vector<8x8xf32> to vector<8x8xbf16>
    %c0_149 = arith.constant 0 : index
    %c0_150 = arith.constant 0 : index
    %256 = vector.load %arg30[%c0_149, %c0_150] : memref<8x32xbf16, #tpu.memory_space<vmem>>, vector<8x8xbf16>
    tpu.vector_store %arg30[%c0_149, %c0_150], %255 {strides = array<i32>} : memref<8x32xbf16, #tpu.memory_space<vmem>>, vector<8x8xbf16>,
    %257 = vector.extract_strided_slice %252 {offsets = [1, 0, 0], sizes = [1, 8, 8], strides = [1, 1, 1]} : vector<4x8x8xf32> to vector<1x8x8xf32>
    %258 = vector.shape_cast %257 : vector<1x8x8xf32> to vector<8x8xf32>
    %259 = arith.truncf %258 : vector<8x8xf32> to vector<8x8xbf16>
    %c0_151 = arith.constant 0 : index
    %c8_152 = arith.constant 8 : index
    %260 = vector.load %arg30[%c0_151, %c8_152] : memref<8x32xbf16, #tpu.memory_space<vmem>>, vector<8x8xbf16>
    tpu.vector_store %arg30[%c0_151, %c8_152], %259 {strides = array<i32>} : memref<8x32xbf16, #tpu.memory_space<vmem>>, vector<8x8xbf16>,
    %261 = vector.extract_strided_slice %252 {offsets = [2, 0, 0], sizes = [1, 8, 8], strides = [1, 1, 1]} : vector<4x8x8xf32> to vector<1x8x8xf32>
    %262 = vector.shape_cast %261 : vector<1x8x8xf32> to vector<8x8xf32>
    %263 = arith.truncf %262 : vector<8x8xf32> to vector<8x8xbf16>
    %c0_153 = arith.constant 0 : index
    %c16_154 = arith.constant 16 : index
    %264 = vector.load %arg30[%c0_153, %c16_154] : memref<8x32xbf16, #tpu.memory_space<vmem>>, vector<8x8xbf16>
    tpu.vector_store %arg30[%c0_153, %c16_154], %263 {strides = array<i32>} : memref<8x32xbf16, #tpu.memory_space<vmem>>, vector<8x8xbf16>,
    %265 = vector.extract_strided_slice %252 {offsets = [3, 0, 0], sizes = [1, 8, 8], strides = [1, 1, 1]} : vector<4x8x8xf32> to vector<1x8x8xf32>
    %266 = vector.shape_cast %265 : vector<1x8x8xf32> to vector<8x8xf32>
    %267 = arith.truncf %266 : vector<8x8xf32> to vector<8x8xbf16>
    %c0_155 = arith.constant 0 : index
    %c24_156 = arith.constant 24 : index
    %268 = vector.load %arg30[%c0_155, %c24_156] : memref<8x32xbf16, #tpu.memory_space<vmem>>, vector<8x8xbf16>
    tpu.vector_store %arg30[%c0_155, %c24_156], %267 {strides = array<i32>} : memref<8x32xbf16, #tpu.memory_space<vmem>>, vector<8x8xbf16>,
    %c0_157 = arith.constant 0 : index
    %c0_158 = arith.constant 0 : index
    %269 = vector.load %arg30[%c0_157, %c0_158] : memref<8x32xbf16, #tpu.memory_space<vmem>>, vector<8x32xbf16>
    %c0_159 = arith.constant 0 : index
    %c0_160 = arith.constant 0 : index
    %c0_161 = arith.constant 0 : index
    %270 = vector.load %arg13[%c0_159, %c0_160, %c0_161] : memref<1x32x32xbf16, #tpu.memory_space<vmem>>, vector<1x32x32xbf16>
    %271 = vector.shape_cast %270 : vector<1x32x32xbf16> to vector<32x32xbf16>
    %cst_162 = arith.constant dense<0.000000e+00> : vector<8x32xf32>
    %272 = tpu.matmul %269, %271, %cst_162 {dimension_numbers = #tpu.dot_dimension_numbers<[1], [0], [0], [1], [0, 0, 1, 1], [], []>} : vector<8x32xbf16>, vector<32x32xbf16>, vector<8x32xf32> -> vector<8x32xf32>
    %c0_163 = arith.constant 0 : index
    %c0_164 = arith.constant 0 : index
    %c0_165 = arith.constant 0 : index
    %273 = vector.load %arg14[%c0_163, %c0_164, %c0_165] : memref<1x1x32xf32, #tpu.memory_space<vmem>>, vector<1x1x32xf32>
    %274 = vector.shape_cast %273 : vector<1x1x32xf32> to vector<1x32xf32>
    %275 = vector.broadcast %274 : vector<1x32xf32> to vector<8x32xf32>
    %276 = arith.addf %272, %275 : vector<8x32xf32>
    %277 = arith.addf %276, %152 : vector<8x32xf32>
    %c0_166 = arith.constant 0 : index
    %c0_167 = arith.constant 0 : index
    %c0_168 = arith.constant 0 : index
    %278 = vector.load %arg15[%c0_166, %c0_167, %c0_168] : memref<1x1x32xf32, #tpu.memory_space<vmem>>, vector<1x1x32xf32>
    %279 = vector.shape_cast %278 : vector<1x1x32xf32> to vector<1x32xf32>
    %c0_169 = arith.constant 0 : index
    %c0_170 = arith.constant 0 : index
    %c0_171 = arith.constant 0 : index
    %280 = vector.load %arg16[%c0_169, %c0_170, %c0_171] : memref<1x1x32xf32, #tpu.memory_space<vmem>>, vector<1x1x32xf32>
    %281 = vector.shape_cast %280 : vector<1x1x32xf32> to vector<1x32xf32>
    %cst_172 = arith.constant dense<0.000000e+00> : vector<8xf32>
    %282 = vector.multi_reduction <add>, %277, %cst_172 [1] : vector<8x32xf32> to vector<8xf32>
    %283 = vector.shape_cast %282 : vector<8xf32> to vector<8x1xf32>
    %cst_173 = arith.constant 3.200000e+01 : f32
    %284 = vector.broadcast %cst_173 : f32 to vector<8x1xf32>
    %285 = arith.divf %283, %284 : vector<8x1xf32>
    %286 = vector.broadcast %285 : vector<8x1xf32> to vector<8x32xf32>
    %287 = arith.subf %277, %286 : vector<8x32xf32>
    %288 = arith.mulf %287, %287 : vector<8x32xf32>
    %cst_174 = arith.constant dense<0.000000e+00> : vector<8xf32>
    %289 = vector.multi_reduction <add>, %288, %cst_174 [1] : vector<8x32xf32> to vector<8xf32>
    %290 = vector.shape_cast %289 : vector<8xf32> to vector<8x1xf32>
    %cst_175 = arith.constant 3.200000e+01 : f32
    %291 = vector.broadcast %cst_175 : f32 to vector<8x1xf32>
    %292 = arith.divf %290, %291 : vector<8x1xf32>
    %293 = vector.broadcast %285 : vector<8x1xf32> to vector<8x32xf32>
    %294 = arith.subf %277, %293 : vector<8x32xf32>
    %cst_176 = arith.constant 9.99999997E-7 : f32
    %295 = vector.broadcast %cst_176 : f32 to vector<8x1xf32>
    %296 = arith.addf %292, %295 : vector<8x1xf32>
    %297 = math.rsqrt %296 : vector<8x1xf32>
    %298 = vector.broadcast %297 : vector<8x1xf32> to vector<8x32xf32>
    %299 = arith.mulf %294, %298 : vector<8x32xf32>
    %300 = vector.broadcast %279 : vector<1x32xf32> to vector<8x32xf32>
    %301 = arith.mulf %299, %300 : vector<8x32xf32>
    %302 = vector.broadcast %281 : vector<1x32xf32> to vector<8x32xf32>
    %303 = arith.addf %301, %302 : vector<8x32xf32>
    %304 = arith.truncf %303 : vector<8x32xf32> to vector<8x32xbf16>
    %c0_177 = arith.constant 0 : index
    %c0_178 = arith.constant 0 : index
    %c0_179 = arith.constant 0 : index
    %305 = vector.load %arg17[%c0_177, %c0_178, %c0_179] : memref<1x32x64xbf16, #tpu.memory_space<vmem>>, vector<1x32x64xbf16>
    %306 = vector.shape_cast %305 : vector<1x32x64xbf16> to vector<32x64xbf16>
    %cst_180 = arith.constant dense<0.000000e+00> : vector<8x64xf32>
    %307 = tpu.matmul %304, %306, %cst_180 {dimension_numbers = #tpu.dot_dimension_numbers<[1], [0], [0], [1], [0, 0, 1, 1], [], []>} : vector<8x32xbf16>, vector<32x64xbf16>, vector<8x64xf32> -> vector<8x64xf32>
    %c0_181 = arith.constant 0 : index
    %c0_182 = arith.constant 0 : index
    %c0_183 = arith.constant 0 : index
    %308 = vector.load %arg18[%c0_181, %c0_182, %c0_183] : memref<1x1x64xf32, #tpu.memory_space<vmem>>, vector<1x1x64xf32>
    %309 = vector.shape_cast %308 : vector<1x1x64xf32> to vector<1x64xf32>
    %310 = vector.broadcast %309 : vector<1x64xf32> to vector<8x64xf32>
    %311 = arith.addf %307, %310 : vector<8x64xf32>
    %cst_184 = arith.constant 0.000000e+00 : f32
    %312 = vector.broadcast %cst_184 : f32 to vector<8x64xf32>
    %313 = arith.maximumf %311, %312 : vector<8x64xf32>
    %314 = arith.truncf %313 : vector<8x64xf32> to vector<8x64xbf16>
    %c0_185 = arith.constant 0 : index
    %c0_186 = arith.constant 0 : index
    %c0_187 = arith.constant 0 : index
    %315 = vector.load %arg19[%c0_185, %c0_186, %c0_187] : memref<1x64x32xbf16, #tpu.memory_space<vmem>>, vector<1x64x32xbf16>
    %316 = vector.shape_cast %315 : vector<1x64x32xbf16> to vector<64x32xbf16>
    %cst_188 = arith.constant dense<0.000000e+00> : vector<8x32xf32>
    %317 = tpu.matmul %314, %316, %cst_188 {dimension_numbers = #tpu.dot_dimension_numbers<[1], [0], [0], [1], [0, 0, 1, 1], [], []>} : vector<8x64xbf16>, vector<64x32xbf16>, vector<8x32xf32> -> vector<8x32xf32>
    %c0_189 = arith.constant 0 : index
    %c0_190 = arith.constant 0 : index
    %c0_191 = arith.constant 0 : index
    %318 = vector.load %arg20[%c0_189, %c0_190, %c0_191] : memref<1x1x32xf32, #tpu.memory_space<vmem>>, vector<1x1x32xf32>
    %319 = vector.shape_cast %318 : vector<1x1x32xf32> to vector<1x32xf32>
    %320 = vector.broadcast %319 : vector<1x32xf32> to vector<8x32xf32>
    %321 = arith.addf %317, %320 : vector<8x32xf32>
    %322 = arith.addf %321, %303 : vector<8x32xf32>
    %c0_192 = arith.constant 0 : index
    %c0_193 = arith.constant 0 : index
    %c0_194 = arith.constant 0 : index
    %323 = vector.load %arg21[%c0_192, %c0_193, %c0_194] : memref<1x1x32xf32, #tpu.memory_space<vmem>>, vector<1x1x32xf32>
    %324 = vector.shape_cast %323 : vector<1x1x32xf32> to vector<1x32xf32>
    %c0_195 = arith.constant 0 : index
    %c0_196 = arith.constant 0 : index
    %c0_197 = arith.constant 0 : index
    %325 = vector.load %arg22[%c0_195, %c0_196, %c0_197] : memref<1x1x32xf32, #tpu.memory_space<vmem>>, vector<1x1x32xf32>
    %326 = vector.shape_cast %325 : vector<1x1x32xf32> to vector<1x32xf32>
    %cst_198 = arith.constant dense<0.000000e+00> : vector<8xf32>
    %327 = vector.multi_reduction <add>, %322, %cst_198 [1] : vector<8x32xf32> to vector<8xf32>
    %328 = vector.shape_cast %327 : vector<8xf32> to vector<8x1xf32>
    %cst_199 = arith.constant 3.200000e+01 : f32
    %329 = vector.broadcast %cst_199 : f32 to vector<8x1xf32>
    %330 = arith.divf %328, %329 : vector<8x1xf32>
    %331 = vector.broadcast %330 : vector<8x1xf32> to vector<8x32xf32>
    %332 = arith.subf %322, %331 : vector<8x32xf32>
    %333 = arith.mulf %332, %332 : vector<8x32xf32>
    %cst_200 = arith.constant dense<0.000000e+00> : vector<8xf32>
    %334 = vector.multi_reduction <add>, %333, %cst_200 [1] : vector<8x32xf32> to vector<8xf32>
    %335 = vector.shape_cast %334 : vector<8xf32> to vector<8x1xf32>
    %cst_201 = arith.constant 3.200000e+01 : f32
    %336 = vector.broadcast %cst_201 : f32 to vector<8x1xf32>
    %337 = arith.divf %335, %336 : vector<8x1xf32>
    %338 = vector.broadcast %330 : vector<8x1xf32> to vector<8x32xf32>
    %339 = arith.subf %322, %338 : vector<8x32xf32>
    %cst_202 = arith.constant 9.99999997E-7 : f32
    %340 = vector.broadcast %cst_202 : f32 to vector<8x1xf32>
    %341 = arith.addf %337, %340 : vector<8x1xf32>
    %342 = math.rsqrt %341 : vector<8x1xf32>
    %343 = vector.broadcast %342 : vector<8x1xf32> to vector<8x32xf32>
    %344 = arith.mulf %339, %343 : vector<8x32xf32>
    %345 = vector.broadcast %324 : vector<1x32xf32> to vector<8x32xf32>
    %346 = arith.mulf %344, %345 : vector<8x32xf32>
    %347 = vector.broadcast %326 : vector<1x32xf32> to vector<8x32xf32>
    %348 = arith.addf %346, %347 : vector<8x32xf32>
    %c1_i32 = arith.constant 1 : i32
    %349 = arith.cmpi eq, %arg1, %c1_i32 : i32
    %350 = arith.extui %349 : i1 to i32
    %c0_i32_203 = arith.constant 0 : i32
    %351 = arith.cmpi ne, %350, %c0_i32_203 : i32
    scf.if %351 {
      %c0_206 = arith.constant 0 : index
      %c0_207 = arith.constant 0 : index
      %355 = vector.load %arg23[%c0_206, %c0_207] : memref<1x32xf32, #tpu.memory_space<vmem>>, vector<1x32xf32>
      %c0_208 = arith.constant 0 : index
      %c0_209 = arith.constant 0 : index
      %356 = vector.load %arg24[%c0_208, %c0_209] : memref<1x32xf32, #tpu.memory_space<vmem>>, vector<1x32xf32>
      %cst_210 = arith.constant dense<0.000000e+00> : vector<8xf32>
      %357 = vector.multi_reduction <add>, %348, %cst_210 [1] : vector<8x32xf32> to vector<8xf32>
      %358 = vector.shape_cast %357 : vector<8xf32> to vector<8x1xf32>
      %cst_211 = arith.constant 3.200000e+01 : f32
      %359 = vector.broadcast %cst_211 : f32 to vector<8x1xf32>
      %360 = arith.divf %358, %359 : vector<8x1xf32>
      %361 = vector.broadcast %360 : vector<8x1xf32> to vector<8x32xf32>
      %362 = arith.subf %348, %361 : vector<8x32xf32>
      %363 = arith.mulf %362, %362 : vector<8x32xf32>
      %cst_212 = arith.constant dense<0.000000e+00> : vector<8xf32>
      %364 = vector.multi_reduction <add>, %363, %cst_212 [1] : vector<8x32xf32> to vector<8xf32>
      %365 = vector.shape_cast %364 : vector<8xf32> to vector<8x1xf32>
      %cst_213 = arith.constant 3.200000e+01 : f32
      %366 = vector.broadcast %cst_213 : f32 to vector<8x1xf32>
      %367 = arith.divf %365, %366 : vector<8x1xf32>
      %368 = vector.broadcast %360 : vector<8x1xf32> to vector<8x32xf32>
      %369 = arith.subf %348, %368 : vector<8x32xf32>
      %cst_214 = arith.constant 9.99999997E-7 : f32
      %370 = vector.broadcast %cst_214 : f32 to vector<8x1xf32>
      %371 = arith.addf %367, %370 : vector<8x1xf32>
      %372 = math.rsqrt %371 : vector<8x1xf32>
      %373 = vector.broadcast %372 : vector<8x1xf32> to vector<8x32xf32>
      %374 = arith.mulf %369, %373 : vector<8x32xf32>
      %375 = vector.broadcast %355 : vector<1x32xf32> to vector<8x32xf32>
      %376 = arith.mulf %374, %375 : vector<8x32xf32>
      %377 = vector.broadcast %356 : vector<1x32xf32> to vector<8x32xf32>
      %378 = arith.addf %376, %377 : vector<8x32xf32>
      %c0_215 = arith.constant 0 : index
      %c0_216 = arith.constant 0 : index
      %c0_217 = arith.constant 0 : index
      %379 = vector.load %arg25[%c0_215, %c0_216, %c0_217] : memref<1x8x32xf32, #tpu.memory_space<vmem>>, vector<1x8x32xf32>
      %380 = vector.shape_cast %379 : vector<1x8x32xf32> to vector<8x32xf32>
      %381 = vector.shape_cast %378 : vector<8x32xf32> to vector<1x8x32xf32>
      tpu.vector_store %arg25[%c0_215, %c0_216, %c0_217], %381 {strides = array<i32>} : memref<1x8x32xf32, #tpu.memory_space<vmem>>, vector<1x8x32xf32>,
    } else {
    }
    %c1_i32_204 = arith.constant 1 : i32
    %352 = arith.cmpi ne, %arg1, %c1_i32_204 : i32
    %353 = arith.extui %352 : i1 to i32
    %c0_i32_205 = arith.constant 0 : i32
    %354 = arith.cmpi ne, %353, %c0_i32_205 : i32
    scf.if %354 {
      %c0_206 = arith.constant 0 : index
      %c0_207 = arith.constant 0 : index
      %c0_208 = arith.constant 0 : index
      %355 = vector.load %arg25[%c0_206, %c0_207, %c0_208] : memref<1x8x32xf32, #tpu.memory_space<vmem>>, vector<1x8x32xf32>
      %356 = vector.shape_cast %355 : vector<1x8x32xf32> to vector<8x32xf32>
      %357 = vector.shape_cast %348 : vector<8x32xf32> to vector<1x8x32xf32>
      tpu.vector_store %arg25[%c0_206, %c0_207, %c0_208], %357 {strides = array<i32>} : memref<1x8x32xf32, #tpu.memory_space<vmem>>, vector<1x8x32xf32>,
    } else {
    }
    return
  }
  func.func @transform_0(%arg0: i32, %arg1: i32) -> (i32, i32, i32) {
    %c0_i32 = arith.constant 0 : i32
    %c0_i32_0 = arith.constant 0 : i32
    %c0_i32_1 = arith.constant 0 : i32
    return %arg0, %c0_i32, %c0_i32_0 : i32, i32, i32
  }
  func.func @transform_1(%arg0: i32, %arg1: i32) -> (i32, i32, i32) {
    %c0_i32 = arith.constant 0 : i32
    %c0_i32_0 = arith.constant 0 : i32
    %c0_i32_1 = arith.constant 0 : i32
    return %arg0, %c0_i32, %c0_i32_0 : i32, i32, i32
  }
  func.func @transform_2(%arg0: i32, %arg1: i32) -> (i32, i32) {
    %c0_i32 = arith.constant 0 : i32
    %c0_i32_0 = arith.constant 0 : i32
    %c0_i32_1 = arith.constant 0 : i32
    return %c0_i32, %c0_i32_0 : i32, i32
  }
  func.func @transform_3(%arg0: i32, %arg1: i32) -> (i32, i32, i32) {
    %c0_i32 = arith.constant 0 : i32
    %c0_i32_0 = arith.constant 0 : i32
    %c0_i32_1 = arith.constant 0 : i32
    return %arg1, %c0_i32, %c0_i32_0 : i32, i32, i32
  }
  func.func @transform_4(%arg0: i32, %arg1: i32) -> (i32, i32, i32) {
    %c0_i32 = arith.constant 0 : i32
    %c0_i32_0 = arith.constant 0 : i32
    %c0_i32_1 = arith.constant 0 : i32
    return %arg1, %c0_i32, %c0_i32_0 : i32, i32, i32
  }
  func.func @transform_5(%arg0: i32, %arg1: i32) -> (i32, i32, i32) {
    %c0_i32 = arith.constant 0 : i32
    %c0_i32_0 = arith.constant 0 : i32
    %c0_i32_1 = arith.constant 0 : i32
    return %arg1, %c0_i32, %c0_i32_0 : i32, i32, i32
  }
  func.func @transform_6(%arg0: i32, %arg1: i32) -> (i32, i32, i32) {
    %c0_i32 = arith.constant 0 : i32
    %c0_i32_0 = arith.constant 0 : i32
    %c0_i32_1 = arith.constant 0 : i32
    return %arg1, %c0_i32, %c0_i32_0 : i32, i32, i32
  }
  func.func @transform_7(%arg0: i32, %arg1: i32) -> (i32, i32, i32) {
    %c0_i32 = arith.constant 0 : i32
    %c0_i32_0 = arith.constant 0 : i32
    %c0_i32_1 = arith.constant 0 : i32
    return %arg1, %c0_i32, %c0_i32_0 : i32, i32, i32
  }
  func.func @transform_8(%arg0: i32, %arg1: i32) -> (i32, i32, i32) {
    %c0_i32 = arith.constant 0 : i32
    %c0_i32_0 = arith.constant 0 : i32
    %c0_i32_1 = arith.constant 0 : i32
    return %arg1, %c0_i32, %c0_i32_0 : i32, i32, i32
  }
  func.func @transform_9(%arg0: i32, %arg1: i32) -> (i32, i32, i32) {
    %c0_i32 = arith.constant 0 : i32
    %c0_i32_0 = arith.constant 0 : i32
    %c0_i32_1 = arith.constant 0 : i32
    return %arg1, %c0_i32, %c0_i32_0 : i32, i32, i32
  }
  func.func @transform_10(%arg0: i32, %arg1: i32) -> (i32, i32, i32) {
    %c0_i32 = arith.constant 0 : i32
    %c0_i32_0 = arith.constant 0 : i32
    %c0_i32_1 = arith.constant 0 : i32
    return %arg1, %c0_i32, %c0_i32_0 : i32, i32, i32
  }
  func.func @transform_11(%arg0: i32, %arg1: i32) -> (i32, i32, i32) {
    %c0_i32 = arith.constant 0 : i32
    %c0_i32_0 = arith.constant 0 : i32
    %c0_i32_1 = arith.constant 0 : i32
    return %arg1, %c0_i32, %c0_i32_0 : i32, i32, i32
  }
  func.func @transform_12(%arg0: i32, %arg1: i32) -> (i32, i32, i32) {
    %c0_i32 = arith.constant 0 : i32
    %c0_i32_0 = arith.constant 0 : i32
    %c0_i32_1 = arith.constant 0 : i32
    return %arg1, %c0_i32, %c0_i32_0 : i32, i32, i32
  }
  func.func @transform_13(%arg0: i32, %arg1: i32) -> (i32, i32, i32) {
    %c0_i32 = arith.constant 0 : i32
    %c0_i32_0 = arith.constant 0 : i32
    %c0_i32_1 = arith.constant 0 : i32
    return %arg1, %c0_i32, %c0_i32_0 : i32, i32, i32
  }
  func.func @transform_14(%arg0: i32, %arg1: i32) -> (i32, i32, i32) {
    %c0_i32 = arith.constant 0 : i32
    %c0_i32_0 = arith.constant 0 : i32
    %c0_i32_1 = arith.constant 0 : i32
    return %arg1, %c0_i32, %c0_i32_0 : i32, i32, i32
  }
  func.func @transform_15(%arg0: i32, %arg1: i32) -> (i32, i32, i32) {
    %c0_i32 = arith.constant 0 : i32
    %c0_i32_0 = arith.constant 0 : i32
    %c0_i32_1 = arith.constant 0 : i32
    return %arg1, %c0_i32, %c0_i32_0 : i32, i32, i32
  }
  func.func @transform_16(%arg0: i32, %arg1: i32) -> (i32, i32, i32) {
    %c0_i32 = arith.constant 0 : i32
    %c0_i32_0 = arith.constant 0 : i32
    %c0_i32_1 = arith.constant 0 : i32
    return %arg1, %c0_i32, %c0_i32_0 : i32, i32, i32
  }
  func.func @transform_17(%arg0: i32, %arg1: i32) -> (i32, i32, i32) {
    %c0_i32 = arith.constant 0 : i32
    %c0_i32_0 = arith.constant 0 : i32
    %c0_i32_1 = arith.constant 0 : i32
    return %arg1, %c0_i32, %c0_i32_0 : i32, i32, i32
  }
  func.func @transform_18(%arg0: i32, %arg1: i32) -> (i32, i32, i32) {
    %c0_i32 = arith.constant 0 : i32
    %c0_i32_0 = arith.constant 0 : i32
    %c0_i32_1 = arith.constant 0 : i32
    return %arg1, %c0_i32, %c0_i32_0 : i32, i32, i32
  }
  func.func @transform_19(%arg0: i32, %arg1: i32) -> (i32, i32, i32) {
    %c0_i32 = arith.constant 0 : i32
    %c0_i32_0 = arith.constant 0 : i32
    %c0_i32_1 = arith.constant 0 : i32
    return %arg1, %c0_i32, %c0_i32_0 : i32, i32, i32
  }
  func.func @transform_20(%arg0: i32, %arg1: i32) -> (i32, i32, i32) {
    %c0_i32 = arith.constant 0 : i32
    %c0_i32_0 = arith.constant 0 : i32
    %c0_i32_1 = arith.constant 0 : i32
    return %arg1, %c0_i32, %c0_i32_0 : i32, i32, i32
  }
  func.func @transform_21(%arg0: i32, %arg1: i32) -> (i32, i32) {
    %c0_i32 = arith.constant 0 : i32
    %c0_i32_0 = arith.constant 0 : i32
    %c0_i32_1 = arith.constant 0 : i32
    return %c0_i32, %c0_i32_0 : i32, i32
  }
  func.func @transform_22(%arg0: i32, %arg1: i32) -> (i32, i32) {
    %c0_i32 = arith.constant 0 : i32
    %c0_i32_0 = arith.constant 0 : i32
    %c0_i32_1 = arith.constant 0 : i32
    return %c0_i32, %c0_i32_0 : i32, i32
  }
  func.func @transform_23(%arg0: i32, %arg1: i32) -> (i32, i32, i32) {
    %c0_i32 = arith.constant 0 : i32
    %c0_i32_0 = arith.constant 0 : i32
    %c0_i32_1 = arith.constant 0 : i32
    return %arg0, %c0_i32, %c0_i32_0 : i32, i32, i32
  }
  func.func @transform_24(%arg0: i32, %arg1: i32) -> (i32, i32, i32, i32, i32) {
    %c0_i32 = arith.constant 0 : i32
    %c0_i32_0 = arith.constant 0 : i32
    %c0_i32_1 = arith.constant 0 : i32
    %c0_i32_2 = arith.constant 0 : i32
    return %arg1, %arg0, %c0_i32, %c0_i32_0, %c0_i32_1 : i32, i32, i32, i32, i32
  }
}

</mosaic_0001>

<llo_original>
// kernel: decoder_forward.1
$region0: #{decoder_forward.1}
  #allocation0 [shape = 'u32[]', space=smem, size = 0x4, offset = 0x4, fixed_abs, tag = 'smem constant byte address 0x4 - core index']
  #allocation1 [shape = 'u32[144,128]{1,0:T(1,128)}', space=vmem, size = 0x12000, scoped, tag = 'internal scratch']
  #allocation2 [shape = 'bf16[4,8,8]{2,1,0:T(8,128)(2,1)}', space=vmem, size = 0x2000, scoped, tag = 'scratch operand']
  #allocation3 [shape = 'bf16[4,8,8]{2,1,0:T(8,128)(2,1)}', space=vmem, size = 0x2000, scoped, tag = 'scratch operand']
  #allocation4 [shape = 'bf16[4,8,8]{2,1,0:T(8,128)(2,1)}', space=vmem, size = 0x2000, scoped, tag = 'scratch operand']
  #allocation5 [shape = 'bf16[8,32]{1,0:T(8,128)(2,1)}', space=vmem, size = 0x800, scoped, tag = 'scratch operand']
  %s0 = inlined_call_operand.vmem [shape: f32[2,8,32], index: 0, kind: input, shape index: {}]
  %s1 = inlined_call_operand.vmem [shape: f32[2,8,32], index: 1, kind: input, shape index: {}]
  %s2 = inlined_call_operand.vmem [shape: f32[8,32], index: 2, kind: input, shape index: {}]
  %s3 = inlined_call_operand.vmem [shape: bf16[2,32,96], index: 3, kind: input, shape index: {}]
  %s4 = inlined_call_operand.vmem [shape: f32[2,1,96], index: 4, kind: input, shape index: {}]
  %s5 = inlined_call_operand.vmem [shape: bf16[2,32,32], index: 5, kind: input, shape index: {}]
  %s6 = inlined_call_operand.vmem [shape: f32[2,1,32], index: 6, kind: input, shape index: {}]
  %s7 = inlined_call_operand.vmem [shape: f32[2,1,32], index: 7, kind: input, shape index: {}]
  %s8 = inlined_call_operand.vmem [shape: f32[2,1,32], index: 8, kind: input, shape index: {}]
  %s9 = inlined_call_operand.vmem [shape: bf16[2,32,96], index: 9, kind: input, shape index: {}]
  %s10 = inlined_call_operand.hbm [shape: f32[2,1,96], index: 10, kind: input, shape index: {}]
  %s11 = inlined_call_operand.vmem [shape: bf16[2,32,32], index: 11, kind: input, shape index: {}]
  %s12 = inlined_call_operand.hbm [shape: f32[2,1,32], index: 12, kind: input, shape index: {}]
  %s13 = inlined_call_operand.hbm [shape: f32[2,1,32], index: 13, kind: input, shape index: {}]
  %s14 = inlined_call_operand.hbm [shape: f32[2,1,32], index: 14, kind: input, shape index: {}]
  %s15 = inlined_call_operand.vmem [shape: bf16[2,32,64], index: 15, kind: input, shape index: {}]
  %s16 = inlined_call_operand.hbm [shape: f32[2,1,64], index: 16, kind: input, shape index: {}]
  %s17 = inlined_call_operand.vmem [shape: bf16[2,64,32], index: 17, kind: input, shape index: {}]
  %s18 = inlined_call_operand.hbm [shape: f32[2,1,32], index: 18, kind: input, shape index: {}]
  %s19 = inlined_call_operand.vmem [shape: f32[2,1,32], index: 19, kind: input, shape index: {}]
  %s20 = inlined_call_operand.vmem [shape: f32[2,1,32], index: 20, kind: input, shape index: {}]
  %s21 = inlined_call_operand.vmem [shape: f32[1,32], index: 21, kind: input, shape index: {}]
  %s22 = inlined_call_operand.vmem [shape: f32[1,32], index: 22, kind: input, shape index: {}]
  %s23 = inlined_call_operand.hbm [shape: f32[2,8,32], index: 23, kind: output, shape index: {0}]
  %s24 = inlined_call_operand.vmem [shape: f32[2,2,4,8,8], index: 24, kind: output, shape index: {1}]
  %25 = xla_tuple %s23, %s24
  %s26 = sld [smem:[#allocation0]]
  $region169: #{decoder_forward.1} parent=0
    _
  %s28 = ssub.s32 1, %s26
  %s29 = scalar_select 0, %s28, %s26
  $region1: #{decoder_forward.1} parent=0
    #allocation6 [shape = 'u8[1024]{0}', space=vmem, size = 0x400, scoped, tag = 'input window, operand 10']
    #allocation7 [shape = 's32[2]{0}', space=sflag, size = 0x8, scoped, tag = 'scoped memory for decoder_forward.1']
    #allocation8 [shape = 's32[2]{0}', space=sflag, size = 0x8, scoped, tag = 'scoped memory for decoder_forward.1']
    #allocation9 [shape = 'u8[1024]{0}', space=vmem, size = 0x400, scoped, tag = 'input window, operand 12']
    #allocation10 [shape = 's32[2]{0}', space=sflag, size = 0x8, scoped, tag = 'scoped memory for decoder_forward.1']
    #allocation11 [shape = 'u8[1024]{0}', space=vmem, size = 0x400, scoped, tag = 'input window, operand 13']
    #allocation12 [shape = 'u8[1024]{0}', space=vmem, size = 0x400, scoped, tag = 'input window, operand 14']
    #allocation13 [shape = 's32[2]{0}', space=sflag, size = 0x8, scoped, tag = 'scoped memory for decoder_forward.1']
    #allocation14 [shape = 'u8[1024]{0}', space=vmem, size = 0x400, scoped, tag = 'input window, operand 16']
    #allocation15 [shape = 'u8[1024]{0}', space=vmem, size = 0x400, scoped, tag = 'input window, operand 18']
    #allocation16 [shape = 's32[2]{0}', space=sflag, size = 0x8, scoped, tag = 'scoped memory for decoder_forward.1']
    #allocation17 [shape = 'u8[8192]{0}', space=vmem, size = 0x2000, scoped, tag = 'output window, operand 0']
    %30 = vsyncpa [#allocation7], 0
    %s31 = scalar_lea.sflag [#allocation7], 1
    %32 = vsyncpa %s31, 0
    %33 = vsyncpa [#allocation10], 0
    %s34 = scalar_lea.sflag [#allocation10], 1
    %35 = vsyncpa %s34, 0
    %36 = vsyncpa [#allocation13], 0
    %s37 = scalar_lea.sflag [#allocation13], 1
    %38 = vsyncpa %s37, 0
    %39 = vsyncpa [#allocation16], 0
    %s40 = scalar_lea.sflag [#allocation16], 1
    %41 = vsyncpa %s40, 0
    %42 = vsyncpa [#allocation8], 0
    %s43 = scalar_lea.sflag [#allocation8], 1
    %44 = vsyncpa %s43, 0
    loop: start=0, step=1, limit=6
    $region2: #{decoder_forward.1} parent=1 // loop_pre_header
      _
    $region3: #{decoder_forward.1} parent=1 // loop_header
      %s46 = sphi 0, %s50
      %p47 = scmp.ge.s32.totalorder %s46, 6
      %s53 = sphi 0, %s65
      %s54 = sphi 0, %s61
      %s55 = sphi 0, %s53
      %s56 = sphi 0, %s54
      %s57 = sphi 0, %s55
      %s58 = sphi 0, %s56
      %s68 = sphi 0, %s70
      %s71 = sphi 0, %s68
      %s72 = sphi 0, %s71
      %s88 = sphi 0, %s72
      %s94 = sphi 0, %s96
      %s97 = sphi 0, %s94
      %s98 = sphi 0, %s97
      %s114 = sphi 0, %s98
      %s118 = sphi 0, %s118
      %s120 = sphi 0, %s118
      %s121 = sphi 0, %s120
      %s135 = sphi 0, %s121
      %s141 = sphi 0, %s143
      %s144 = sphi 0, %s141
      %s145 = sphi 0, %s144
      %s161 = sphi 0, %s145
      %s167 = sphi 0, %s169
      %s170 = sphi 0, %s167
      %s171 = sphi 0, %s170
      %s187 = sphi 0, %s171
      %s193 = sphi 0, %s195
      %s196 = sphi 0, %s193
      %s197 = sphi 0, %s196
      %s213 = sphi 0, %s197
      %s219 = sphi 0, %s221
      %s222 = sphi 0, %s219
      %s223 = sphi 0, %s222
      %s239 = sphi 0, %s223
      %s245 = sphi 0, %s247
      %s248 = sphi 0, %s245
      %s249 = sphi 0, %s248
      %s265 = sphi 0, %s249
      %s271 = sphi 0, %s273
      %s274 = sphi 0, %s271
      %s275 = sphi 0, %s274
      %s291 = sphi 0, %s275
      %s297 = sphi 0, %s299
      %s300 = sphi 0, %s297
      %s301 = sphi 0, %s300
      %s317 = sphi 0, %s301
      %s323 = sphi 0, %s325
      %s326 = sphi 0, %s323
      %s327 = sphi 0, %s326
      %s343 = sphi 0, %s327
      %s349 = sphi 0, %s351
      %s352 = sphi 0, %s349
      %s353 = sphi 0, %s352
      %s369 = sphi 0, %s353
      %s375 = sphi 0, %s377
      %s378 = sphi 0, %s375
      %s379 = sphi 0, %s378
      %s395 = sphi 0, %s379
      %s401 = sphi 0, %s403
      %s404 = sphi 0, %s401
      %s405 = sphi 0, %s404
      %s421 = sphi 0, %s405
      %s427 = sphi 0, %s429
      %s430 = sphi 0, %s427
      %s431 = sphi 0, %s430
      %s447 = sphi 0, %s431
      %s453 = sphi 0, %s455
      %s456 = sphi 0, %s453
      %s457 = sphi 0, %s456
      %s473 = sphi 0, %s457
      %s479 = sphi 0, %s481
      %s482 = sphi 0, %s479
      %s483 = sphi 0, %s482
      %s499 = sphi 0, %s483
      %s505 = sphi 0, %s507
      %s508 = sphi 0, %s505
      %s509 = sphi 0, %s508
      %s525 = sphi 0, %s509
      %s531 = sphi 0, %s533
      %s534 = sphi 0, %s531
      %s535 = sphi 0, %s534
      %s551 = sphi 0, %s535
      %s557 = sphi 0, %s559
      %s560 = sphi 0, %s557
      %s561 = sphi 0, %s560
      %s577 = sphi 0, %s561
      %s583 = sphi 0, %s585
      %s586 = sphi 0, %s583
      %s587 = sphi 0, %s586
      %s603 = sphi 0, %s587
      %s607 = sphi 0, %s607
      %s609 = sphi 0, %s607
      %s610 = sphi 0, %s609
      %s624 = sphi 0, %s610
      %s628 = sphi 0, %s628
      %s630 = sphi 0, %s628
      %s631 = sphi 0, %s630
      %s645 = sphi 0, %s631
      %s651 = sphi 0, %s653
      %s654 = sphi 0, %s651
      %s655 = sphi 0, %s654
      %s671 = sphi 0, %s655
      %s679 = sphi 0, %s681
      %s682 = sphi 0, %s679
      %s683 = sphi 0, %s682
      %s699 = sphi 0, %s683
    $region4: #{decoder_forward.1} parent=1 // loop_header_branch
      %49 = sbr.rel (%p47) target = $region8
    $region5: #{decoder_forward.1} parent=1 // loop_body
      %s51 = ssub.s32 %s46, 1
      %s52 = ssub.s32 %s46, 2
      %s59 = sadd.s32 1, %s54
      %p60 = scmp.ge.s32.totalorder %s59, 2
      %s61 = scalar_select %p60, 0, %s59
      %s62 = sadd.s32 1, %s53
      %s63 = scalar_select %p60, %s62, %s53
      %p64 = scmp.ge.s32.totalorder %s63, 2
      %s65 = scalar_select %p64, 0, %s63
      %s66 = ssub.s32 %s53, %s65
      %p67 = scmp.eq.s32.totalorder %s66, 0
      %s69 = sadd.s32 %s68, 1
      %s70 = scalar_select %p67, %s68, %s69
      %p73 = pneg %p67
      %p74 = scmp.eq.s32.totalorder %s46, 3
      %p75 = por %p73, %p74
      %p76 = scmp.ne.s32.totalorder %s68, %s71
      %p77 = scmp.eq.s32.totalorder %s46, 0
      %p78 = por %p76, %p77
      %p79 = scmp.ne.s32.totalorder %s68, %s71
      %p80 = scmp.eq.s32.totalorder %s51, 3
      %p81 = por %p79, %p80
      %p82 = scmp.ne.s32.totalorder %s71, %s72
      %p83 = scmp.eq.s32.totalorder %s51, 0
      %p84 = por %p82, %p83
      %p85 = scmp.ne.s32.totalorder %s71, %s72
      %p86 = scmp.eq.s32.totalorder %s52, 3
      %p87 = por %p85, %p86
      %p89 = scmp.ne.s32.totalorder %s72, %s88
      %p90 = scmp.eq.s32.totalorder %s52, 0
      %p91 = por %p89, %p90
      %s92 = ssub.s32 %s53, %s65
      %p93 = scmp.eq.s32.totalorder %s92, 0
      %s95 = sadd.s32 %s94, 1
      %s96 = scalar_select %p93, %s94, %s95
      %p99 = pneg %p93
      %p100 = scmp.eq.s32.totalorder %s46, 3
      %p101 = por %p99, %p100
      %p102 = scmp.ne.s32.totalorder %s94, %s97
      %p103 = scmp.eq.s32.totalorder %s46, 0
      %p104 = por %p102, %p103
      %p105 = scmp.ne.s32.totalorder %s94, %s97
      %p106 = scmp.eq.s32.totalorder %s51, 3
      %p107 = por %p105, %p106
      %p108 = scmp.ne.s32.totalorder %s97, %s98
      %p109 = scmp.eq.s32.totalorder %s51, 0
      %p110 = por %p108, %p109
      %p111 = scmp.ne.s32.totalorder %s97, %s98
      %p112 = scmp.eq.s32.totalorder %s52, 3
      %p113 = por %p111, %p112
      %p115 = scmp.ne.s32.totalorder %s98, %s114
      %p116 = scmp.eq.s32.totalorder %s52, 0
      %p117 = por %p115, %p116
      %s119 = sadd.s32 %s118, 1
      %p122 = scmp.eq.s32.totalorder %s46, 3
      %p123 = scmp.ne.s32.totalorder %s118, %s120
      %p124 = scmp.eq.s32.totalorder %s46, 0
      %p125 = por %p123, %p124
      %p126 = scmp.ne.s32.totalorder %s118, %s120
      %p127 = scmp.eq.s32.totalorder %s51, 3
      %p128 = por %p126, %p127
      %p129 = scmp.ne.s32.totalorder %s120, %s121
      %p130 = scmp.eq.s32.totalorder %s51, 0
      %p131 = por %p129, %p130
      %p132 = scmp.ne.s32.totalorder %s120, %s121
      %p133 = scmp.eq.s32.totalorder %s52, 3
      %p134 = por %p132, %p133
      %p136 = scmp.ne.s32.totalorder %s121, %s135
      %p137 = scmp.eq.s32.totalorder %s52, 0
      %p138 = por %p136, %p137
      %s139 = ssub.s32 %s54, %s61
      %p140 = scmp.eq.s32.totalorder %s139, 0
      %s142 = sadd.s32 %s141, 1
      %s143 = scalar_select %p140, %s141, %s142
      %p146 = pneg %p140
      %p147 = scmp.eq.s32.totalorder %s46, 3
      %p148 = por %p146, %p147
      %p149 = scmp.ne.s32.totalorder %s141, %s144
      %p150 = scmp.eq.s32.totalorder %s46, 0
      %p151 = por %p149, %p150
      %p152 = scmp.ne.s32.totalorder %s141, %s144
      %p153 = scmp.eq.s32.totalorder %s51, 3
      %p154 = por %p152, %p153
      %p155 = scmp.ne.s32.totalorder %s144, %s145
      %p156 = scmp.eq.s32.totalorder %s51, 0
      %p157 = por %p155, %p156
      %p158 = scmp.ne.s32.totalorder %s144, %s145
      %p159 = scmp.eq.s32.totalorder %s52, 3
      %p160 = por %p158, %p159
      %p162 = scmp.ne.s32.totalorder %s145, %s161
      %p163 = scmp.eq.s32.totalorder %s52, 0
      %p164 = por %p162, %p163
      %s165 = ssub.s32 %s54, %s61
      %p166 = scmp.eq.s32.totalorder %s165, 0
      %s168 = sadd.s32 %s167, 1
      %s169 = scalar_select %p166, %s167, %s168
      %p172 = pneg %p166
      %p173 = scmp.eq.s32.totalorder %s46, 3
      %p174 = por %p172, %p173
      %p175 = scmp.ne.s32.totalorder %s167, %s170
      %p176 = scmp.eq.s32.totalorder %s46, 0
      %p177 = por %p175, %p176
      %p178 = scmp.ne.s32.totalorder %s167, %s170
      %p179 = scmp.eq.s32.totalorder %s51, 3
      %p180 = por %p178, %p179
      %p181 = scmp.ne.s32.totalorder %s170, %s171
      %p182 = scmp.eq.s32.totalorder %s51, 0
      %p183 = por %p181, %p182
      %p184 = scmp.ne.s32.totalorder %s170, %s171
      %p185 = scmp.eq.s32.totalorder %s52, 3
      %p186 = por %p184, %p185
      %p188 = scmp.ne.s32.totalorder %s171, %s187
      %p189 = scmp.eq.s32.totalorder %s52, 0
      %p190 = por %p188, %p189
      %s191 = ssub.s32 %s54, %s61
      %p192 = scmp.eq.s32.totalorder %s191, 0
      %s194 = sadd.s32 %s193, 1
      %s195 = scalar_select %p192, %s193, %s194
      %p198 = pneg %p192
      %p199 = scmp.eq.s32.totalorder %s46, 3
      %p200 = por %p198, %p199
      %p201 = scmp.ne.s32.totalorder %s193, %s196
      %p202 = scmp.eq.s32.totalorder %s46, 0
      %p203 = por %p201, %p202
      %p204 = scmp.ne.s32.totalorder %s193, %s196
      %p205 = scmp.eq.s32.totalorder %s51, 3
      %p206 = por %p204, %p205
      %p207 = scmp.ne.s32.totalorder %s196, %s197
      %p208 = scmp.eq.s32.totalorder %s51, 0
      %p209 = por %p207, %p208
      %p210 = scmp.ne.s32.totalorder %s196, %s197
      %p211 = scmp.eq.s32.totalorder %s52, 3
      %p212 = por %p210, %p211
      %p214 = scmp.ne.s32.totalorder %s197, %s213
      %p215 = scmp.eq.s32.totalorder %s52, 0
      %p216 = por %p214, %p215
      %s217 = ssub.s32 %s54, %s61
      %p218 = scmp.eq.s32.totalorder %s217, 0
      %s220 = sadd.s32 %s219, 1
      %s221 = scalar_select %p218, %s219, %s220
      %p224 = pneg %p218
      %p225 = scmp.eq.s32.totalorder %s46, 3
      %p226 = por %p224, %p225
      %p227 = scmp.ne.s32.totalorder %s219, %s222
      %p228 = scmp.eq.s32.totalorder %s46, 0
      %p229 = por %p227, %p228
      %p230 = scmp.ne.s32.totalorder %s219, %s222
      %p231 = scmp.eq.s32.totalorder %s51, 3
      %p232 = por %p230, %p231
      %p233 = scmp.ne.s32.totalorder %s222, %s223
      %p234 = scmp.eq.s32.totalorder %s51, 0
      %p235 = por %p233, %p234
      %p236 = scmp.ne.s32.totalorder %s222, %s223
      %p237 = scmp.eq.s32.totalorder %s52, 3
      %p238 = por %p236, %p237
      %p240 = scmp.ne.s32.totalorder %s223, %s239
      %p241 = scmp.eq.s32.totalorder %s52, 0
      %p242 = por %p240, %p241
      %s243 = ssub.s32 %s54, %s61
      %p244 = scmp.eq.s32.totalorder %s243, 0
      %s246 = sadd.s32 %s245, 1
      %s247 = scalar_select %p244, %s245, %s246
      %p250 = pneg %p244
      %p251 = scmp.eq.s32.totalorder %s46, 3
      %p252 = por %p250, %p251
      %p253 = scmp.ne.s32.totalorder %s245, %s248
      %p254 = scmp.eq.s32.totalorder %s46, 0
      %p255 = por %p253, %p254
      %p256 = scmp.ne.s32.totalorder %s245, %s248
      %p257 = scmp.eq.s32.totalorder %s51, 3
      %p258 = por %p256, %p257
      %p259 = scmp.ne.s32.totalorder %s248, %s249
      %p260 = scmp.eq.s32.totalorder %s51, 0
      %p261 = por %p259, %p260
      %p262 = scmp.ne.s32.totalorder %s248, %s249
      %p263 = scmp.eq.s32.totalorder %s52, 3
      %p264 = por %p262, %p263
      %p266 = scmp.ne.s32.totalorder %s249, %s265
      %p267 = scmp.eq.s32.totalorder %s52, 0
      %p268 = por %p266, %p267
      %s269 = ssub.s32 %s54, %s61
      %p270 = scmp.eq.s32.totalorder %s269, 0
      %s272 = sadd.s32 %s271, 1
      %s273 = scalar_select %p270, %s271, %s272
      %p276 = pneg %p270
      %p277 = scmp.eq.s32.totalorder %s46, 3
      %p278 = por %p276, %p277
      %p279 = scmp.ne.s32.totalorder %s271, %s274
      %p280 = scmp.eq.s32.totalorder %s46, 0
      %p281 = por %p279, %p280
      %p282 = scmp.ne.s32.totalorder %s271, %s274
      %p283 = scmp.eq.s32.totalorder %s51, 3
      %p284 = por %p282, %p283
      %p285 = scmp.ne.s32.totalorder %s274, %s275
      %p286 = scmp.eq.s32.totalorder %s51, 0
      %p287 = por %p285, %p286
      %p288 = scmp.ne.s32.totalorder %s274, %s275
      %p289 = scmp.eq.s32.totalorder %s52, 3
      %p290 = por %p288, %p289
      %p292 = scmp.ne.s32.totalorder %s275, %s291
      %p293 = scmp.eq.s32.totalorder %s52, 0
      %p294 = por %p292, %p293
      %s295 = ssub.s32 %s54, %s61
      %p296 = scmp.eq.s32.totalorder %s295, 0
      %s298 = sadd.s32 %s297, 1
      %s299 = scalar_select %p296, %s297, %s298
      %p302 = pneg %p296
      %p303 = scmp.eq.s32.totalorder %s46, 3
      %p304 = por %p302, %p303
      %p305 = scmp.ne.s32.totalorder %s297, %s300
      %p306 = scmp.eq.s32.totalorder %s46, 0
      %p307 = por %p305, %p306
      %p308 = scmp.ne.s32.totalorder %s297, %s300
      %p309 = scmp.eq.s32.totalorder %s51, 3
      %p310 = por %p308, %p309
      %p311 = scmp.ne.s32.totalorder %s300, %s301
      %p312 = scmp.eq.s32.totalorder %s51, 0
      %p313 = por %p311, %p312
      %p314 = scmp.ne.s32.totalorder %s300, %s301
      %p315 = scmp.eq.s32.totalorder %s52, 3
      %p316 = por %p314, %p315
      %p318 = scmp.ne.s32.totalorder %s301, %s317
      %p319 = scmp.eq.s32.totalorder %s52, 0
      %p320 = por %p318, %p319
      %s321 = ssub.s32 %s54, %s61
      %p322 = scmp.eq.s32.totalorder %s321, 0
      %s324 = sadd.s32 %s323, 1
      %s325 = scalar_select %p322, %s323, %s324
      %p328 = pneg %p322
      %p329 = scmp.eq.s32.totalorder %s46, 3
      %p330 = por %p328, %p329
      %p331 = scmp.ne.s32.totalorder %s323, %s326
      %p332 = scmp.eq.s32.totalorder %s46, 0
      %p333 = por %p331, %p332
      %p334 = scmp.ne.s32.totalorder %s323, %s326
      %p335 = scmp.eq.s32.totalorder %s51, 3
      %p336 = por %p334, %p335
      %p337 = scmp.ne.s32.totalorder %s326, %s327
      %p338 = scmp.eq.s32.totalorder %s51, 0
      %p339 = por %p337, %p338
      %p340 = scmp.ne.s32.totalorder %s326, %s327
      %p341 = scmp.eq.s32.totalorder %s52, 3
      %p342 = por %p340, %p341
      %p344 = scmp.ne.s32.totalorder %s327, %s343
      %p345 = scmp.eq.s32.totalorder %s52, 0
      %p346 = por %p344, %p345
      %s347 = ssub.s32 %s54, %s61
      %p348 = scmp.eq.s32.totalorder %s347, 0
      %s350 = sadd.s32 %s349, 1
      %s351 = scalar_select %p348, %s349, %s350
      %p354 = pneg %p348
      %p355 = scmp.eq.s32.totalorder %s46, 3
      %p356 = por %p354, %p355
      %p357 = scmp.ne.s32.totalorder %s349, %s352
      %p358 = scmp.eq.s32.totalorder %s46, 0
      %p359 = por %p357, %p358
      %p360 = scmp.ne.s32.totalorder %s349, %s352
      %p361 = scmp.eq.s32.totalorder %s51, 3
      %p362 = por %p360, %p361
      %p363 = scmp.ne.s32.totalorder %s352, %s353
      %p364 = scmp.eq.s32.totalorder %s51, 0
      %p365 = por %p363, %p364
      %p366 = scmp.ne.s32.totalorder %s352, %s353
      %p367 = scmp.eq.s32.totalorder %s52, 3
      %p368 = por %p366, %p367
      %p370 = scmp.ne.s32.totalorder %s353, %s369
      %p371 = scmp.eq.s32.totalorder %s52, 0
      %p372 = por %p370, %p371
      %s373 = ssub.s32 %s54, %s61
      %p374 = scmp.eq.s32.totalorder %s373, 0
      %s376 = sadd.s32 %s375, 1
      %s377 = scalar_select %p374, %s375, %s376
      %p380 = pneg %p374
      %p381 = scmp.eq.s32.totalorder %s46, 3
      %p382 = por %p380, %p381
      %p383 = scmp.ne.s32.totalorder %s375, %s378
      %p384 = scmp.eq.s32.totalorder %s46, 0
      %p385 = por %p383, %p384
      %p386 = scmp.ne.s32.totalorder %s375, %s378
      %p387 = scmp.eq.s32.totalorder %s51, 3
      %p388 = por %p386, %p387
      %p389 = scmp.ne.s32.totalorder %s378, %s379
      %p390 = scmp.eq.s32.totalorder %s51, 0
      %p391 = por %p389, %p390
      %p392 = scmp.ne.s32.totalorder %s378, %s379
      %p393 = scmp.eq.s32.totalorder %s52, 3
      %p394 = por %p392, %p393
      %p396 = scmp.ne.s32.totalorder %s379, %s395
      %p397 = scmp.eq.s32.totalorder %s52, 0
      %p398 = por %p396, %p397
      %s399 = ssub.s32 %s54, %s61
      %p400 = scmp.eq.s32.totalorder %s399, 0
      %s402 = sadd.s32 %s401, 1
      %s403 = scalar_select %p400, %s401, %s402
      %p406 = pneg %p400
      %p407 = scmp.eq.s32.totalorder %s46, 3
      %p408 = por %p406, %p407
      %p409 = scmp.ne.s32.totalorder %s401, %s404
      %p410 = scmp.eq.s32.totalorder %s46, 0
      %p411 = por %p409, %p410
      %p412 = scmp.ne.s32.totalorder %s401, %s404
      %p413 = scmp.eq.s32.totalorder %s51, 3
      %p414 = por %p412, %p413
      %p415 = scmp.ne.s32.totalorder %s404, %s405
      %p416 = scmp.eq.s32.totalorder %s51, 0
      %p417 = por %p415, %p416
      %p418 = scmp.ne.s32.totalorder %s404, %s405
      %p419 = scmp.eq.s32.totalorder %s52, 3
      %p420 = por %p418, %p419
      %p422 = scmp.ne.s32.totalorder %s405, %s421
      %p423 = scmp.eq.s32.totalorder %s52, 0
      %p424 = por %p422, %p423
      %s425 = ssub.s32 %s54, %s61
      %p426 = scmp.eq.s32.totalorder %s425, 0
      %s428 = sadd.s32 %s427, 1
      %s429 = scalar_select %p426, %s427, %s428
      %p432 = pneg %p426
      %p433 = scmp.eq.s32.totalorder %s46, 3
      %p434 = por %p432, %p433
      %p435 = scmp.ne.s32.totalorder %s427, %s430
      %p436 = scmp.eq.s32.totalorder %s46, 0
      %p437 = por %p435, %p436
      %p438 = scmp.ne.s32.totalorder %s427, %s430
      %p439 = scmp.eq.s32.totalorder %s51, 3
      %p440 = por %p438, %p439
      %p441 = scmp.ne.s32.totalorder %s430, %s431
      %p442 = scmp.eq.s32.totalorder %s51, 0
      %p443 = por %p441, %p442
      %p444 = scmp.ne.s32.totalorder %s430, %s431
      %p445 = scmp.eq.s32.totalorder %s52, 3
      %p446 = por %p444, %p445
      %p448 = scmp.ne.s32.totalorder %s431, %s447
      %p449 = scmp.eq.s32.totalorder %s52, 0
      %p450 = por %p448, %p449
      %s451 = ssub.s32 %s54, %s61
      %p452 = scmp.eq.s32.totalorder %s451, 0
      %s454 = sadd.s32 %s453, 1
      %s455 = scalar_select %p452, %s453, %s454
      %p458 = pneg %p452
      %p459 = scmp.eq.s32.totalorder %s46, 3
      %p460 = por %p458, %p459
      %p461 = scmp.ne.s32.totalorder %s453, %s456
      %p462 = scmp.eq.s32.totalorder %s46, 0
      %p463 = por %p461, %p462
      %p464 = scmp.ne.s32.totalorder %s453, %s456
      %p465 = scmp.eq.s32.totalorder %s51, 3
      %p466 = por %p464, %p465
      %p467 = scmp.ne.s32.totalorder %s456, %s457
      %p468 = scmp.eq.s32.totalorder %s51, 0
      %p469 = por %p467, %p468
      %p470 = scmp.ne.s32.totalorder %s456, %s457
      %p471 = scmp.eq.s32.totalorder %s52, 3
      %p472 = por %p470, %p471
      %p474 = scmp.ne.s32.totalorder %s457, %s473
      %p475 = scmp.eq.s32.totalorder %s52, 0
      %p476 = por %p474, %p475
      %s477 = ssub.s32 %s54, %s61
      %p478 = scmp.eq.s32.totalorder %s477, 0
      %s480 = sadd.s32 %s479, 1
      %s481 = scalar_select %p478, %s479, %s480
      %p484 = pneg %p478
      %p485 = scmp.eq.s32.totalorder %s46, 3
      %p486 = por %p484, %p485
      %p487 = scmp.ne.s32.totalorder %s479, %s482
      %p488 = scmp.eq.s32.totalorder %s46, 0
      %p489 = por %p487, %p488
      %p490 = scmp.ne.s32.totalorder %s479, %s482
      %p491 = scmp.eq.s32.totalorder %s51, 3
      %p492 = por %p490, %p491
      %p493 = scmp.ne.s32.totalorder %s482, %s483
      %p494 = scmp.eq.s32.totalorder %s51, 0
      %p495 = por %p493, %p494
      %p496 = scmp.ne.s32.totalorder %s482, %s483
      %p497 = scmp.eq.s32.totalorder %s52, 3
      %p498 = por %p496, %p497
      %p500 = scmp.ne.s32.totalorder %s483, %s499
      %p501 = scmp.eq.s32.totalorder %s52, 0
      %p502 = por %p500, %p501
      %s503 = ssub.s32 %s54, %s61
      %p504 = scmp.eq.s32.totalorder %s503, 0
      %s506 = sadd.s32 %s505, 1
      %s507 = scalar_select %p504, %s505, %s506
      %p510 = pneg %p504
      %p511 = scmp.eq.s32.totalorder %s46, 3
      %p512 = por %p510, %p511
      %p513 = scmp.ne.s32.totalorder %s505, %s508
      %p514 = scmp.eq.s32.totalorder %s46, 0
      %p515 = por %p513, %p514
      %p516 = scmp.ne.s32.totalorder %s505, %s508
      %p517 = scmp.eq.s32.totalorder %s51, 3
      %p518 = por %p516, %p517
      %p519 = scmp.ne.s32.totalorder %s508, %s509
      %p520 = scmp.eq.s32.totalorder %s51, 0
      %p521 = por %p519, %p520
      %p522 = scmp.ne.s32.totalorder %s508, %s509
      %p523 = scmp.eq.s32.totalorder %s52, 3
      %p524 = por %p522, %p523
      %p526 = scmp.ne.s32.totalorder %s509, %s525
      %p527 = scmp.eq.s32.totalorder %s52, 0
      %p528 = por %p526, %p527
      %s529 = ssub.s32 %s54, %s61
      %p530 = scmp.eq.s32.totalorder %s529, 0
      %s532 = sadd.s32 %s531, 1
      %s533 = scalar_select %p530, %s531, %s532
      %p536 = pneg %p530
      %p537 = scmp.eq.s32.totalorder %s46, 3
      %p538 = por %p536, %p537
      %p539 = scmp.ne.s32.totalorder %s531, %s534
      %p540 = scmp.eq.s32.totalorder %s46, 0
      %p541 = por %p539, %p540
      %p542 = scmp.ne.s32.totalorder %s531, %s534
      %p543 = scmp.eq.s32.totalorder %s51, 3
      %p544 = por %p542, %p543
      %p545 = scmp.ne.s32.totalorder %s534, %s535
      %p546 = scmp.eq.s32.totalorder %s51, 0
      %p547 = por %p545, %p546
      %p548 = scmp.ne.s32.totalorder %s534, %s535
      %p549 = scmp.eq.s32.totalorder %s52, 3
      %p550 = por %p548, %p549
      %p552 = scmp.ne.s32.totalorder %s535, %s551
      %p553 = scmp.eq.s32.totalorder %s52, 0
      %p554 = por %p552, %p553
      %s555 = ssub.s32 %s54, %s61
      %p556 = scmp.eq.s32.totalorder %s555, 0
      %s558 = sadd.s32 %s557, 1
      %s559 = scalar_select %p556, %s557, %s558
      %p562 = pneg %p556
      %p563 = scmp.eq.s32.totalorder %s46, 3
      %p564 = por %p562, %p563
      %p565 = scmp.ne.s32.totalorder %s557, %s560
      %p566 = scmp.eq.s32.totalorder %s46, 0
      %p567 = por %p565, %p566
      %p568 = scmp.ne.s32.totalorder %s557, %s560
      %p569 = scmp.eq.s32.totalorder %s51, 3
      %p570 = por %p568, %p569
      %p571 = scmp.ne.s32.totalorder %s560, %s561
      %p572 = scmp.eq.s32.totalorder %s51, 0
      %p573 = por %p571, %p572
      %p574 = scmp.ne.s32.totalorder %s560, %s561
      %p575 = scmp.eq.s32.totalorder %s52, 3
      %p576 = por %p574, %p575
      %p578 = scmp.ne.s32.totalorder %s561, %s577
      %p579 = scmp.eq.s32.totalorder %s52, 0
      %p580 = por %p578, %p579
      %s581 = ssub.s32 %s54, %s61
      %p582 = scmp.eq.s32.totalorder %s581, 0
      %s584 = sadd.s32 %s583, 1
      %s585 = scalar_select %p582, %s583, %s584
      %p588 = pneg %p582
      %p589 = scmp.eq.s32.totalorder %s46, 3
      %p590 = por %p588, %p589
      %p591 = scmp.ne.s32.totalorder %s583, %s586
      %p592 = scmp.eq.s32.totalorder %s46, 0
      %p593 = por %p591, %p592
      %p594 = scmp.ne.s32.totalorder %s583, %s586
      %p595 = scmp.eq.s32.totalorder %s51, 3
      %p596 = por %p594, %p595
      %p597 = scmp.ne.s32.totalorder %s586, %s587
      %p598 = scmp.eq.s32.totalorder %s51, 0
      %p599 = por %p597, %p598
      %p600 = scmp.ne.s32.totalorder %s586, %s587
      %p601 = scmp.eq.s32.totalorder %s52, 3
      %p602 = por %p600, %p601
      %p604 = scmp.ne.s32.totalorder %s587, %s603
      %p605 = scmp.eq.s32.totalorder %s52, 0
      %p606 = por %p604, %p605
      %s608 = sadd.s32 %s607, 1
      %p611 = scmp.eq.s32.totalorder %s46, 3
      %p612 = scmp.ne.s32.totalorder %s607, %s609
      %p613 = scmp.eq.s32.totalorder %s46, 0
      %p614 = por %p612, %p613
      %p615 = scmp.ne.s32.totalorder %s607, %s609
      %p616 = scmp.eq.s32.totalorder %s51, 3
      %p617 = por %p615, %p616
      %p618 = scmp.ne.s32.totalorder %s609, %s610
      %p619 = scmp.eq.s32.totalorder %s51, 0
      %p620 = por %p618, %p619
      %p621 = scmp.ne.s32.totalorder %s609, %s610
      %p622 = scmp.eq.s32.totalorder %s52, 3
      %p623 = por %p621, %p622
      %p625 = scmp.ne.s32.totalorder %s610, %s624
      %p626 = scmp.eq.s32.totalorder %s52, 0
      %p627 = por %p625, %p626
      %s629 = sadd.s32 %s628, 1
      %p632 = scmp.eq.s32.totalorder %s46, 3
      %p633 = scmp.ne.s32.totalorder %s628, %s630
      %p634 = scmp.eq.s32.totalorder %s46, 0
      %p635 = por %p633, %p634
      %p636 = scmp.ne.s32.totalorder %s628, %s630
      %p637 = scmp.eq.s32.totalorder %s51, 3
      %p638 = por %p636, %p637
      %p639 = scmp.ne.s32.totalorder %s630, %s631
      %p640 = scmp.eq.s32.totalorder %s51, 0
      %p641 = por %p639, %p640
      %p642 = scmp.ne.s32.totalorder %s630, %s631
      %p643 = scmp.eq.s32.totalorder %s52, 3
      %p644 = por %p642, %p643
      %p646 = scmp.ne.s32.totalorder %s631, %s645
      %p647 = scmp.eq.s32.totalorder %s52, 0
      %p648 = por %p646, %p647
      %s649 = ssub.s32 %s53, %s65
      %p650 = scmp.eq.s32.totalorder %s649, 0
      %s652 = sadd.s32 %s651, 1
      %s653 = scalar_select %p650, %s651, %s652
      %p656 = pneg %p650
      %p657 = scmp.eq.s32.totalorder %s46, 3
      %p658 = por %p656, %p657
      %p659 = scmp.ne.s32.totalorder %s651, %s654
      %p660 = scmp.eq.s32.totalorder %s46, 0
      %p661 = por %p659, %p660
      %p662 = scmp.ne.s32.totalorder %s651, %s654
      %p663 = scmp.eq.s32.totalorder %s51, 3
      %p664 = por %p662, %p663
      %p665 = scmp.ne.s32.totalorder %s654, %s655
      %p666 = scmp.eq.s32.totalorder %s51, 0
      %p667 = por %p665, %p666
      %p668 = scmp.ne.s32.totalorder %s654, %s655
      %p669 = scmp.eq.s32.totalorder %s52, 3
      %p670 = por %p668, %p669
      %p672 = scmp.ne.s32.totalorder %s655, %s671
      %p673 = scmp.eq.s32.totalorder %s52, 0
      %p674 = por %p672, %p673
      %s675 = ssub.s32 %s54, %s61
      %s676 = ssub.s32 %s53, %s65
      %s677 = sor.u32 %s675, %s676
      %p678 = scmp.eq.s32.totalorder %s677, 0
      %s680 = sadd.s32 %s679, 1
      %s681 = scalar_select %p678, %s679, %s680
      %p684 = pneg %p678
      %p685 = scmp.eq.s32.totalorder %s46, 3
      %p686 = por %p684, %p685
      %p687 = scmp.ne.s32.totalorder %s679, %s682
      %p688 = scmp.eq.s32.totalorder %s46, 0
      %p689 = por %p687, %p688
      %p690 = scmp.ne.s32.totalorder %s679, %s682
      %p691 = scmp.eq.s32.totalorder %s51, 3
      %p692 = por %p690, %p691
      %p693 = scmp.ne.s32.totalorder %s682, %s683
      %p694 = scmp.eq.s32.totalorder %s51, 0
      %p695 = por %p693, %p694
      %p696 = scmp.ne.s32.totalorder %s682, %s683
      %p697 = scmp.eq.s32.totalorder %s52, 3
      %p698 = por %p696, %p697
      %p700 = scmp.ne.s32.totalorder %s683, %s699
      %p701 = scmp.eq.s32.totalorder %s52, 0
      %p702 = por %p700, %p701
      %p703 = scmp.le.s32.totalorder 1, %s46
      %p704 = scmp.lt.s32.totalorder %s46, 5
      %p705 = pnand %p703, %p704
      %p706 = pneg %p705
      // Predicated region
      $region9: #{decoder_forward.1} parent=5 // pred_check
        _
      $region10: #{decoder_forward.1} parent=5 // pred_check_branch
        %708 = sbr.rel (%p705) target = $region12
      $region11: #{decoder_forward.1} parent=5 // pred_region
        %s709 = ssub.s32 %s46, 1
        // Predicated region
        $region13: #{decoder_forward.1} parent=11 // pred_check
          %p710 = pneg %p131
        $region14: #{decoder_forward.1} parent=11 // pred_check_branch
          %712 = sbr.rel (%p710) target = $region16
        $region15: #{decoder_forward.1} parent=11 // pred_region
          _
        $region16: #{decoder_forward.1} parent=11 // pred_fallthru
          _
        // Predicated region
        $region17: #{decoder_forward.1} parent=11 // pred_check
          %p713 = pneg %p620
        $region18: #{decoder_forward.1} parent=11 // pred_check_branch
          %715 = sbr.rel (%p713) target = $region20
        $region19: #{decoder_forward.1} parent=11 // pred_region
          _
        $region20: #{decoder_forward.1} parent=11 // pred_fallthru
          _
        // Predicated region
        $region21: #{decoder_forward.1} parent=11 // pred_check
          %p716 = pneg %p641
        $region22: #{decoder_forward.1} parent=11 // pred_check_branch
          %718 = sbr.rel (%p716) target = $region24
        $region23: #{decoder_forward.1} parent=11 // pred_region
          _
        $region24: #{decoder_forward.1} parent=11 // pred_fallthru
          _
      $region12: #{decoder_forward.1} parent=5 // pred_fallthru
        _
      %p719 = scmp.lt.s32.totalorder %s46, 4
      // Predicated region
      $region25: #{decoder_forward.1} parent=5 // pred_check
        %p720 = pneg %p719
      $region26: #{decoder_forward.1} parent=5 // pred_check_branch
        %722 = sbr.rel (%p720) target = $region28
      $region27: #{decoder_forward.1} parent=5 // pred_region
        // Predicated region
        $region29: #{decoder_forward.1} parent=27 // pred_check
          %p723 = pneg %p78
        $region30: #{decoder_forward.1} parent=27 // pred_check_branch
          %725 = sbr.rel (%p723) target = $region32
        $region31: #{decoder_forward.1} parent=27 // pred_region
          %p726 = scmp.lt.s32.totalorder %s53, 1
          %s727 = scalar_select %p726, %s53, 1
          %s728 = smul.addr %s727, 8
          %s729 = scalar_lea.vmem %s0, %s728
        $region32: #{decoder_forward.1} parent=27 // pred_fallthru
          _
        // Predicated region
        $region33: #{decoder_forward.1} parent=27 // pred_check
          %p730 = pneg %p104
        $region34: #{decoder_forward.1} parent=27 // pred_check_branch
          %732 = sbr.rel (%p730) target = $region36
        $region35: #{decoder_forward.1} parent=27 // pred_region
          %p733 = scmp.lt.s32.totalorder %s53, 1
          %s734 = scalar_select %p733, %s53, 1
          %s735 = smul.addr %s734, 8
          %s736 = scalar_lea.vmem %s1, %s735
        $region36: #{decoder_forward.1} parent=27 // pred_fallthru
          _
        // Predicated region
        $region37: #{decoder_forward.1} parent=27 // pred_check
          %p737 = pneg %p151
        $region38: #{decoder_forward.1} parent=27 // pred_check_branch
          %739 = sbr.rel (%p737) target = $region40
        $region39: #{decoder_forward.1} parent=27 // pred_region
          %p740 = scmp.lt.s32.totalorder %s54, 1
          %s741 = scalar_select %p740, %s54, 1
          %s742 = smul.addr %s741, 4
          %s743 = smul.addr %s742, 4
          %s744 = scalar_lea.vmem %s3, %s743
        $region40: #{decoder_forward.1} parent=27 // pred_fallthru
          _
        // Predicated region
        $region41: #{decoder_forward.1} parent=27 // pred_check
          %p745 = pneg %p177
        $region42: #{decoder_forward.1} parent=27 // pred_check_branch
          %747 = sbr.rel (%p745) target = $region44
        $region43: #{decoder_forward.1} parent=27 // pred_region
          %p748 = scmp.lt.s32.totalorder %s54, 1
          %s749 = scalar_select %p748, %s54, 1
          %s750 = scalar_lea.vmem %s4, %s749
        $region44: #{decoder_forward.1} parent=27 // pred_fallthru
          _
        // Predicated region
        $region45: #{decoder_forward.1} parent=27 // pred_check
          %p751 = pneg %p203
        $region46: #{decoder_forward.1} parent=27 // pred_check_branch
          %753 = sbr.rel (%p751) target = $region48
        $region47: #{decoder_forward.1} parent=27 // pred_region
          %p754 = scmp.lt.s32.totalorder %s54, 1
          %s755 = scalar_select %p754, %s54, 1
          %s756 = smul.addr %s755, 4
          %s757 = smul.addr %s756, 4
          %s758 = scalar_lea.vmem %s5, %s757
        $region48: #{decoder_forward.1} parent=27 // pred_fallthru
          _
        // Predicated region
        $region49: #{decoder_forward.1} parent=27 // pred_check
          %p759 = pneg %p229
        $region50: #{decoder_forward.1} parent=27 // pred_check_branch
          %761 = sbr.rel (%p759) target = $region52
        $region51: #{decoder_forward.1} parent=27 // pred_region
          %p762 = scmp.lt.s32.totalorder %s54, 1
          %s763 = scalar_select %p762, %s54, 1
          %s764 = scalar_lea.vmem %s6, %s763
        $region52: #{decoder_forward.1} parent=27 // pred_fallthru
          _
        // Predicated region
        $region53: #{decoder_forward.1} parent=27 // pred_check
          %p765 = pneg %p255
        $region54: #{decoder_forward.1} parent=27 // pred_check_branch
          %767 = sbr.rel (%p765) target = $region56
        $region55: #{decoder_forward.1} parent=27 // pred_region
          %p768 = scmp.lt.s32.totalorder %s54, 1
          %s769 = scalar_select %p768, %s54, 1
          %s770 = scalar_lea.vmem %s7, %s769
        $region56: #{decoder_forward.1} parent=27 // pred_fallthru
          _
        // Predicated region
        $region57: #{decoder_forward.1} parent=27 // pred_check
          %p771 = pneg %p281
        $region58: #{decoder_forward.1} parent=27 // pred_check_branch
          %773 = sbr.rel (%p771) target = $region60
        $region59: #{decoder_forward.1} parent=27 // pred_region
          %p774 = scmp.lt.s32.totalorder %s54, 1
          %s775 = scalar_select %p774, %s54, 1
          %s776 = scalar_lea.vmem %s8, %s775
        $region60: #{decoder_forward.1} parent=27 // pred_fallthru
          _
        // Predicated region
        $region61: #{decoder_forward.1} parent=27 // pred_check
          %p777 = pneg %p307
        $region62: #{decoder_forward.1} parent=27 // pred_check_branch
          %779 = sbr.rel (%p777) target = $region64
        $region63: #{decoder_forward.1} parent=27 // pred_region
          %p780 = scmp.lt.s32.totalorder %s54, 1
          %s781 = scalar_select %p780, %s54, 1
          %s782 = smul.addr %s781, 4
          %s783 = smul.addr %s782, 4
          %s784 = scalar_lea.vmem %s9, %s783
        $region64: #{decoder_forward.1} parent=27 // pred_fallthru
          _
        // Predicated region
        $region65: #{decoder_forward.1} parent=27 // pred_check
          %p785 = pneg %p333
        $region66: #{decoder_forward.1} parent=27 // pred_check_branch
          %787 = sbr.rel (%p785) target = $region68
        $region67: #{decoder_forward.1} parent=27 // pred_region
          %s788 = sand.u32 %s323, 1
          %s789 = scalar_lea.sflag [#allocation7], %s788
          %s790 = sand.u32 %s323, 1
          %s791 = scalar_lea.vmem [#allocation6], %s790
          %s793 = ssub.s32 16, 16
          %794 = vsyncadd %s789, %s793
          %s795 = smul.addr %s54, 16
          %s796 = scalar_lea.hbm %s10, %s795
          %s798 = sshll.u32 %s791, 4
          %s799 = int_to_ptr.vmem [resolvable:$true] %s798
          %801 = dma.hbm_to_vmem [thread:$0]  %s796, 16, %s799, %s789
        $region68: #{decoder_forward.1} parent=27 // pred_fallthru
          _
        // Predicated region
        $region69: #{decoder_forward.1} parent=27 // pred_check
          %p802 = pneg %p359
        $region70: #{decoder_forward.1} parent=27 // pred_check_branch
          %804 = sbr.rel (%p802) target = $region72
        $region71: #{decoder_forward.1} parent=27 // pred_region
          %p805 = scmp.lt.s32.totalorder %s54, 1
          %s806 = scalar_select %p805, %s54, 1
          %s807 = smul.addr %s806, 4
          %s808 = smul.addr %s807, 4
          %s809 = scalar_lea.vmem %s11, %s808
        $region72: #{decoder_forward.1} parent=27 // pred_fallthru
          _
        // Predicated region
        $region73: #{decoder_forward.1} parent=27 // pred_check
          %p810 = pneg %p385
        $region74: #{decoder_forward.1} parent=27 // pred_check_branch
          %812 = sbr.rel (%p810) target = $region76
        $region75: #{decoder_forward.1} parent=27 // pred_region
          %s813 = sand.u32 %s46, 1
          %s814 = scalar_lea.sflag [#allocation10], %s813
          %s815 = sand.u32 %s375, 1
          %s816 = scalar_lea.vmem [#allocation9], %s815
          %s818 = ssub.s32 16, 16
          %819 = vsyncadd %s814, %s818
          %s820 = smul.addr %s54, 16
          %s821 = scalar_lea.hbm %s12, %s820
          %s823 = sshll.u32 %s816, 4
          %s824 = int_to_ptr.vmem [resolvable:$true] %s823
          %826 = dma.hbm_to_vmem [thread:$0]  %s821, 16, %s824, %s814
        $region76: #{decoder_forward.1} parent=27 // pred_fallthru
          _
        // Predicated region
        $region77: #{decoder_forward.1} parent=27 // pred_check
          %p827 = pneg %p411
        $region78: #{decoder_forward.1} parent=27 // pred_check_branch
          %829 = sbr.rel (%p827) target = $region80
        $region79: #{decoder_forward.1} parent=27 // pred_region
          %s830 = sand.u32 %s46, 1
          %s831 = scalar_lea.sflag [#allocation10], %s830
          %s832 = sand.u32 %s401, 1
          %s833 = scalar_lea.vmem [#allocation11], %s832
          %s835 = ssub.s32 16, 16
          %836 = vsyncadd %s831, %s835
          %s837 = smul.addr %s54, 16
          %s838 = scalar_lea.hbm %s13, %s837
          %s840 = sshll.u32 %s833, 4
          %s841 = int_to_ptr.vmem [resolvable:$true] %s840
          %843 = dma.hbm_to_vmem [thread:$0]  %s838, 16, %s841, %s831
        $region80: #{decoder_forward.1} parent=27 // pred_fallthru
          _
        // Predicated region
        $region81: #{decoder_forward.1} parent=27 // pred_check
          %p844 = pneg %p437
        $region82: #{decoder_forward.1} parent=27 // pred_check_branch
          %846 = sbr.rel (%p844) target = $region84
        $region83: #{decoder_forward.1} parent=27 // pred_region
          %s847 = sand.u32 %s46, 1
          %s848 = scalar_lea.sflag [#allocation13], %s847
          %s849 = sand.u32 %s427, 1
          %s850 = scalar_lea.vmem [#allocation12], %s849
          %s852 = ssub.s32 16, 16
          %853 = vsyncadd %s848, %s852
          %s854 = smul.addr %s54, 16
          %s855 = scalar_lea.hbm %s14, %s854
          %s857 = sshll.u32 %s850, 4
          %s858 = int_to_ptr.vmem [resolvable:$true] %s857
          %860 = dma.hbm_to_vmem [thread:$0]  %s855, 16, %s858, %s848
        $region84: #{decoder_forward.1} parent=27 // pred_fallthru
          _
        // Predicated region
        $region85: #{decoder_forward.1} parent=27 // pred_check
          %p861 = pneg %p463
        $region86: #{decoder_forward.1} parent=27 // pred_check_branch
          %863 = sbr.rel (%p861) target = $region88
        $region87: #{decoder_forward.1} parent=27 // pred_region
          %p864 = scmp.lt.s32.totalorder %s54, 1
          %s865 = scalar_select %p864, %s54, 1
          %s866 = smul.addr %s865, 4
          %s867 = smul.addr %s866, 4
          %s868 = scalar_lea.vmem %s15, %s867
        $region88: #{decoder_forward.1} parent=27 // pred_fallthru
          _
        // Predicated region
        $region89: #{decoder_forward.1} parent=27 // pred_check
          %p869 = pneg %p489
        $region90: #{decoder_forward.1} parent=27 // pred_check_branch
          %871 = sbr.rel (%p869) target = $region92
        $region91: #{decoder_forward.1} parent=27 // pred_region
          %s872 = sand.u32 %s46, 1
          %s873 = scalar_lea.sflag [#allocation13], %s872
          %s874 = sand.u32 %s479, 1
          %s875 = scalar_lea.vmem [#allocation14], %s874
          %s877 = ssub.s32 16, 16
          %878 = vsyncadd %s873, %s877
          %s879 = smul.addr %s54, 16
          %s880 = scalar_lea.hbm %s16, %s879
          %s882 = sshll.u32 %s875, 4
          %s883 = int_to_ptr.vmem [resolvable:$true] %s882
          %885 = dma.hbm_to_vmem [thread:$0]  %s880, 16, %s883, %s873
        $region92: #{decoder_forward.1} parent=27 // pred_fallthru
          _
        // Predicated region
        $region93: #{decoder_forward.1} parent=27 // pred_check
          %p886 = pneg %p515
        $region94: #{decoder_forward.1} parent=27 // pred_check_branch
          %888 = sbr.rel (%p886) target = $region96
        $region95: #{decoder_forward.1} parent=27 // pred_region
          %p889 = scmp.lt.s32.totalorder %s54, 1
          %s890 = scalar_select %p889, %s54, 1
          %s891 = smul.addr %s890, 8
          %s892 = smul.addr %s891, 4
          %s893 = scalar_lea.vmem %s17, %s892
        $region96: #{decoder_forward.1} parent=27 // pred_fallthru
          _
        // Predicated region
        $region97: #{decoder_forward.1} parent=27 // pred_check
          %p894 = pneg %p541
        $region98: #{decoder_forward.1} parent=27 // pred_check_branch
          %896 = sbr.rel (%p894) target = $region100
        $region99: #{decoder_forward.1} parent=27 // pred_region
          %s897 = sand.u32 %s531, 1
          %s898 = scalar_lea.sflag [#allocation16], %s897
          %s899 = sand.u32 %s531, 1
          %s900 = scalar_lea.vmem [#allocation15], %s899
          %s902 = ssub.s32 16, 16
          %903 = vsyncadd %s898, %s902
          %s904 = smul.addr %s54, 16
          %s905 = scalar_lea.hbm %s18, %s904
          %s907 = sshll.u32 %s900, 4
          %s908 = int_to_ptr.vmem [resolvable:$true] %s907
          %910 = dma.hbm_to_vmem [thread:$0]  %s905, 16, %s908, %s898
        $region100: #{decoder_forward.1} parent=27 // pred_fallthru
          _
        // Predicated region
        $region101: #{decoder_forward.1} parent=27 // pred_check
          %p911 = pneg %p567
        $region102: #{decoder_forward.1} parent=27 // pred_check_branch
          %913 = sbr.rel (%p911) target = $region104
        $region103: #{decoder_forward.1} parent=27 // pred_region
          %p914 = scmp.lt.s32.totalorder %s54, 1
          %s915 = scalar_select %p914, %s54, 1
          %s916 = scalar_lea.vmem %s19, %s915
        $region104: #{decoder_forward.1} parent=27 // pred_fallthru
          _
        // Predicated region
        $region105: #{decoder_forward.1} parent=27 // pred_check
          %p917 = pneg %p593
        $region106: #{decoder_forward.1} parent=27 // pred_check_branch
          %919 = sbr.rel (%p917) target = $region108
        $region107: #{decoder_forward.1} parent=27 // pred_region
          %p920 = scmp.lt.s32.totalorder %s54, 1
          %s921 = scalar_select %p920, %s54, 1
          %s922 = scalar_lea.vmem %s20, %s921
        $region108: #{decoder_forward.1} parent=27 // pred_fallthru
          _
      $region28: #{decoder_forward.1} parent=5 // pred_fallthru
        _
      %p923 = scmp.le.s32.totalorder 1, %s46
      %p924 = scmp.lt.s32.totalorder %s46, 5
      %p925 = pnand %p923, %p924
      %p926 = pneg %p925
      // Predicated region
      $region109: #{decoder_forward.1} parent=5 // pred_check
        _
      $region110: #{decoder_forward.1} parent=5 // pred_check_branch
        %928 = sbr.rel (%p925) target = $region112
      $region111: #{decoder_forward.1} parent=5 // pred_region
        %s929 = ssub.s32 %s46, 1
        %s930 = sand.u32 %s326, 1
        %s931 = scalar_lea.sflag [#allocation7], %s930
        %s932 = sand.u32 %s326, 1
        %s933 = scalar_lea.vmem [#allocation6], %s932
        // Predicated region
        $region113: #{decoder_forward.1} parent=111 // pred_check
          %p934 = pneg %p339
        $region114: #{decoder_forward.1} parent=111 // pred_check_branch
          %936 = sbr.rel (%p934) target = $region116
        $region115: #{decoder_forward.1} parent=111 // pred_region
          %937 = dma.done %s931, 16
        $region116: #{decoder_forward.1} parent=111 // pred_fallthru
          _
        %s938 = sand.u32 %s51, 1
        %s939 = scalar_lea.sflag [#allocation10], %s938
        %s940 = sand.u32 %s378, 1
        %s941 = scalar_lea.vmem [#allocation9], %s940
        // Predicated region
        $region117: #{decoder_forward.1} parent=111 // pred_check
          %p942 = pneg %p391
        $region118: #{decoder_forward.1} parent=111 // pred_check_branch
          %944 = sbr.rel (%p942) target = $region120
        $region119: #{decoder_forward.1} parent=111 // pred_region
          %945 = dma.done %s939, 16
        $region120: #{decoder_forward.1} parent=111 // pred_fallthru
          _
        %s946 = sand.u32 %s51, 1
        %s947 = scalar_lea.sflag [#allocation10], %s946
        %s948 = sand.u32 %s404, 1
        %s949 = scalar_lea.vmem [#allocation11], %s948
        // Predicated region
        $region121: #{decoder_forward.1} parent=111 // pred_check
          %p950 = pneg %p417
        $region122: #{decoder_forward.1} parent=111 // pred_check_branch
          %952 = sbr.rel (%p950) target = $region124
        $region123: #{decoder_forward.1} parent=111 // pred_region
          %953 = dma.done %s947, 16
        $region124: #{decoder_forward.1} parent=111 // pred_fallthru
          _
        %s954 = sand.u32 %s51, 1
        %s955 = scalar_lea.sflag [#allocation13], %s954
        %s956 = sand.u32 %s430, 1
        %s957 = scalar_lea.vmem [#allocation12], %s956
        // Predicated region
        $region125: #{decoder_forward.1} parent=111 // pred_check
          %p958 = pneg %p443
        $region126: #{decoder_forward.1} parent=111 // pred_check_branch
          %960 = sbr.rel (%p958) target = $region128
        $region127: #{decoder_forward.1} parent=111 // pred_region
          %961 = dma.done %s955, 16
        $region128: #{decoder_forward.1} parent=111 // pred_fallthru
          _
        %s962 = sand.u32 %s51, 1
        %s963 = scalar_lea.sflag [#allocation13], %s962
        %s964 = sand.u32 %s482, 1
        %s965 = scalar_lea.vmem [#allocation14], %s964
        // Predicated region
        $region129: #{decoder_forward.1} parent=111 // pred_check
          %p966 = pneg %p495
        $region130: #{decoder_forward.1} parent=111 // pred_check_branch
          %968 = sbr.rel (%p966) target = $region132
        $region131: #{decoder_forward.1} parent=111 // pred_region
          %969 = dma.done %s963, 16
        $region132: #{decoder_forward.1} parent=111 // pred_fallthru
          _
        %s970 = sand.u32 %s534, 1
        %s971 = scalar_lea.sflag [#allocation16], %s970
        %s972 = sand.u32 %s534, 1
        %s973 = scalar_lea.vmem [#allocation15], %s972
        // Predicated region
        $region133: #{decoder_forward.1} parent=111 // pred_check
          %p974 = pneg %p547
        $region134: #{decoder_forward.1} parent=111 // pred_check_branch
          %976 = sbr.rel (%p974) target = $region136
        $region135: #{decoder_forward.1} parent=111 // pred_region
          %977 = dma.done %s971, 16
        $region136: #{decoder_forward.1} parent=111 // pred_fallthru
          _
        %p978 = scmp.lt.s32.totalorder %s55, 1
        %s979 = scalar_select %p978, %s55, 1
        %s980 = smul.addr %s979, 8
        %s981 = scalar_lea.vmem %s0, %s980
        %p982 = pneg %p84
        %p983 = pneg %p81
        %p984 = scmp.lt.s32.totalorder %s55, 1
        %s985 = scalar_select %p984, %s55, 1
        %s986 = smul.addr %s985, 8
        %s987 = scalar_lea.vmem %s1, %s986
        %p988 = pneg %p110
        %p989 = pneg %p107
        %p990 = pneg %p131
        %p991 = pneg %p128
        %p992 = scmp.lt.s32.totalorder %s56, 1
        %s993 = scalar_select %p992, %s56, 1
        %s994 = smul.addr %s993, 4
        %s995 = smul.addr %s994, 4
        %s996 = scalar_lea.vmem %s3, %s995
        %p997 = pneg %p157
        %p998 = pneg %p154
        %p999 = scmp.lt.s32.totalorder %s56, 1
        %s1000 = scalar_select %p999, %s56, 1
        %s1001 = scalar_lea.vmem %s4, %s1000
        %p1002 = pneg %p183
        %p1003 = pneg %p180
        %p1004 = scmp.lt.s32.totalorder %s56, 1
        %s1005 = scalar_select %p1004, %s56, 1
        %s1006 = smul.addr %s1005, 4
        %s1007 = smul.addr %s1006, 4
        %s1008 = scalar_lea.vmem %s5, %s1007
        %p1009 = pneg %p209
        %p1010 = pneg %p206
        %p1011 = scmp.lt.s32.totalorder %s56, 1
        %s1012 = scalar_select %p1011, %s56, 1
        %s1013 = scalar_lea.vmem %s6, %s1012
        %p1014 = pneg %p235
        %p1015 = pneg %p232
        %p1016 = scmp.lt.s32.totalorder %s56, 1
        %s1017 = scalar_select %p1016, %s56, 1
        %s1018 = scalar_lea.vmem %s7, %s1017
        %p1019 = pneg %p261
        %p1020 = pneg %p258
        %p1021 = scmp.lt.s32.totalorder %s56, 1
        %s1022 = scalar_select %p1021, %s56, 1
        %s1023 = scalar_lea.vmem %s8, %s1022
        %p1024 = pneg %p287
        %p1025 = pneg %p284
        %p1026 = scmp.lt.s32.totalorder %s56, 1
        %s1027 = scalar_select %p1026, %s56, 1
        %s1028 = smul.addr %s1027, 4
        %s1029 = smul.addr %s1028, 4
        %s1030 = scalar_lea.vmem %s9, %s1029
        %p1031 = pneg %p313
        %p1032 = pneg %p310
        %s1033 = sand.u32 %s326, 1
        %s1034 = scalar_lea.sflag [#allocation7], %s1033
        %s1035 = sand.u32 %s326, 1
        %s1036 = scalar_lea.vmem [#allocation6], %s1035
        %p1037 = pneg %p339
        %p1038 = pneg %p336
        %p1039 = scmp.lt.s32.totalorder %s56, 1
        %s1040 = scalar_select %p1039, %s56, 1
        %s1041 = smul.addr %s1040, 4
        %s1042 = smul.addr %s1041, 4
        %s1043 = scalar_lea.vmem %s11, %s1042
        %p1044 = pneg %p365
        %p1045 = pneg %p362
        %s1046 = sand.u32 %s51, 1
        %s1047 = scalar_lea.sflag [#allocation10], %s1046
        %s1048 = sand.u32 %s378, 1
        %s1049 = scalar_lea.vmem [#allocation9], %s1048
        %p1050 = pneg %p391
        %p1051 = pneg %p388
        %s1052 = sand.u32 %s51, 1
        %s1053 = scalar_lea.sflag [#allocation10], %s1052
        %s1054 = sand.u32 %s404, 1
        %s1055 = scalar_lea.vmem [#allocation11], %s1054
        %p1056 = pneg %p417
        %p1057 = pneg %p414
        %s1058 = sand.u32 %s51, 1
        %s1059 = scalar_lea.sflag [#allocation13], %s1058
        %s1060 = sand.u32 %s430, 1
        %s1061 = scalar_lea.vmem [#allocation12], %s1060
        %p1062 = pneg %p443
        %p1063 = pneg %p440
        %p1064 = scmp.lt.s32.totalorder %s56, 1
        %s1065 = scalar_select %p1064, %s56, 1
        %s1066 = smul.addr %s1065, 4
        %s1067 = smul.addr %s1066, 4
        %s1068 = scalar_lea.vmem %s15, %s1067
        %p1069 = pneg %p469
        %p1070 = pneg %p466
        %s1071 = sand.u32 %s51, 1
        %s1072 = scalar_lea.sflag [#allocation13], %s1071
        %s1073 = sand.u32 %s482, 1
        %s1074 = scalar_lea.vmem [#allocation14], %s1073
        %p1075 = pneg %p495
        %p1076 = pneg %p492
        %p1077 = scmp.lt.s32.totalorder %s56, 1
        %s1078 = scalar_select %p1077, %s56, 1
        %s1079 = smul.addr %s1078, 8
        %s1080 = smul.addr %s1079, 4
        %s1081 = scalar_lea.vmem %s17, %s1080
        %p1082 = pneg %p521
        %p1083 = pneg %p518
        %s1084 = sand.u32 %s534, 1
        %s1085 = scalar_lea.sflag [#allocation16], %s1084
        %s1086 = sand.u32 %s534, 1
        %s1087 = scalar_lea.vmem [#allocation15], %s1086
        %p1088 = pneg %p547
        %p1089 = pneg %p544
        %p1090 = scmp.lt.s32.totalorder %s56, 1
        %s1091 = scalar_select %p1090, %s56, 1
        %s1092 = scalar_lea.vmem %s19, %s1091
        %p1093 = pneg %p573
        %p1094 = pneg %p570
        %p1095 = scmp.lt.s32.totalorder %s56, 1
        %s1096 = scalar_select %p1095, %s56, 1
        %s1097 = scalar_lea.vmem %s20, %s1096
        %p1098 = pneg %p599
        %p1099 = pneg %p596
        %p1100 = pneg %p620
        %p1101 = pneg %p617
        %p1102 = pneg %p641
        %p1103 = pneg %p638
        %p1104 = pneg %p667
        %p1105 = pneg %p664
        %s1106 = sand.u32 %s654, 1
        %s1107 = scalar_lea.sflag [#allocation8], %s1106
        %s1108 = sand.u32 %s654, 1
        %s1109 = smul.addr %s1108, 8
        %s1110 = scalar_lea.vmem [#allocation17], %s1109
        %p1111 = pneg %p695
        %p1112 = pneg %p692
        %p1113 = scmp.lt.s32.totalorder %s56, 1
        %s1114 = scalar_select %p1113, %s56, 1
        %p1115 = scmp.lt.s32.totalorder %s55, 1
        %s1116 = scalar_select %p1115, %s55, 1
        %s1117 = smul.addr %s1116, 4
        %s1118 = smul.addr %s1114, 8
        %s1119 = sadd.s32 %s1117, %s1118
        %s1120 = smul.addr %s1119, 8
        %s1121 = scalar_lea.vmem %s24, %s1120
        %p1122 = scmp.lt.s32.totalorder %s55, 1
        %s1123 = scalar_select %p1122, %s55, 1
        %s1124 = smul.addr %s1123, 8
        %s1125 = scalar_lea.vmem %s0, %s1124
        %p1126 = scmp.lt.s32.totalorder %s55, 1
        %s1127 = scalar_select %p1126, %s55, 1
        %s1128 = smul.addr %s1127, 8
        %s1129 = scalar_lea.vmem %s1, %s1128
        %p1130 = scmp.lt.s32.totalorder %s56, 1
        %s1131 = scalar_select %p1130, %s56, 1
        %s1132 = smul.addr %s1131, 4
        %s1133 = smul.addr %s1132, 4
        %s1134 = scalar_lea.vmem %s3, %s1133
        %p1135 = scmp.lt.s32.totalorder %s56, 1
        %s1136 = scalar_select %p1135, %s56, 1
        %s1137 = scalar_lea.vmem %s4, %s1136
        %p1138 = scmp.lt.s32.totalorder %s56, 1
        %s1139 = scalar_select %p1138, %s56, 1
        %s1140 = smul.addr %s1139, 4
        %s1141 = smul.addr %s1140, 4
        %s1142 = scalar_lea.vmem %s5, %s1141
        %p1143 = scmp.lt.s32.totalorder %s56, 1
        %s1144 = scalar_select %p1143, %s56, 1
        %s1145 = scalar_lea.vmem %s6, %s1144
        %p1146 = scmp.lt.s32.totalorder %s56, 1
        %s1147 = scalar_select %p1146, %s56, 1
        %s1148 = scalar_lea.vmem %s7, %s1147
        %p1149 = scmp.lt.s32.totalorder %s56, 1
        %s1150 = scalar_select %p1149, %s56, 1
        %s1151 = scalar_lea.vmem %s8, %s1150
        %p1152 = scmp.lt.s32.totalorder %s56, 1
        %s1153 = scalar_select %p1152, %s56, 1
        %s1154 = smul.addr %s1153, 4
        %s1155 = smul.addr %s1154, 4
        %s1156 = scalar_lea.vmem %s9, %s1155
        %p1157 = scmp.lt.s32.totalorder %s56, 1
        %s1158 = scalar_select %p1157, %s56, 1
        %s1159 = smul.addr %s1158, 4
        %s1160 = smul.addr %s1159, 4
        %s1161 = scalar_lea.vmem %s11, %s1160
        %p1162 = scmp.lt.s32.totalorder %s56, 1
        %s1163 = scalar_select %p1162, %s56, 1
        %s1164 = smul.addr %s1163, 4
        %s1165 = smul.addr %s1164, 4
        %s1166 = scalar_lea.vmem %s15, %s1165
        %p1167 = scmp.lt.s32.totalorder %s56, 1
        %s1168 = scalar_select %p1167, %s56, 1
        %s1169 = smul.addr %s1168, 8
        %s1170 = smul.addr %s1169, 4
        %s1171 = scalar_lea.vmem %s17, %s1170
        %p1172 = scmp.lt.s32.totalorder %s56, 1
        %s1173 = scalar_select %p1172, %s56, 1
        %s1174 = scalar_lea.vmem %s19, %s1173
        %p1175 = scmp.lt.s32.totalorder %s56, 1
        %s1176 = scalar_select %p1175, %s56, 1
        %s1177 = scalar_lea.vmem %s20, %s1176
        %p1178 = scmp.lt.s32.totalorder %s56, 1
        %s1179 = scalar_select %p1178, %s56, 1
        %p1180 = scmp.lt.s32.totalorder %s55, 1
        %s1181 = scalar_select %p1180, %s55, 1
        %s1182 = smul.addr %s1181, 4
        %s1183 = smul.addr %s1179, 8
        %s1184 = sadd.s32 %s1182, %s1183
        %s1185 = smul.addr %s1184, 8
        %s1186 = scalar_lea.vmem %s24, %s1185
        %p1188 = scmp.eq.s32.totalorder %s56, 0
        // Predicated region
        $region137: #{decoder_forward.1} parent=111 // pred_check
          %p1189 = pneg %p1188
        $region138: #{decoder_forward.1} parent=111 // pred_check_branch
          %1191 = sbr.rel (%p1189) target = $region140
        $region139: #{decoder_forward.1} parent=111 // pred_region
          %v1192 = vld [vmem:[%s1125] sm:$0xff]
          %v1193 = vld [vmem:[%s2] sm:$0xff]
          %v1194 = vadd.f32 %v1192, %v1193
          %vm1195 = vcmask 261120
          %1196 = vst.msk [vmem:[%s1110] sm:$0xff] %vm1195, %v1194
        $region140: #{decoder_forward.1} parent=111 // pred_fallthru
          _
        %v1197 = vld [vmem:[%s1110] sm:$0xff]
        %v1198 = vlaneseq
        %v1199 = vshrl.u32 %v1198, 7
        %v1200 = vlaneseq
        %v1201 = vand.u32 %v1200, 127
        %vm1202 = vcmp.le.s32.totalorder %v1201, %v1199
        %v1203 = vsel %vm1202, 0.0, -1e+09
        %v1204 = vld [vmem:[%s1134] sm:$0xf]
        %v1205 = vld [vmem:[%s1134 + $0x4] sm:$0xf]
        %v1206 = vld [vmem:[%s1134 + $0x8] sm:$0xf]
        %v1207 = vld [vmem:[%s1134 + $0xc] sm:$0xf]
        %v1208 = vld [vmem:[%s1137] sm:$0x1]
        %v1209 = vpack.c.bf16 %v1197, %v1197
        %v1211 = vlaneseq
        %v1212 = vshrl.u32 %v1211, 7
        %v1213 = vsub.s32 0, %v1212
        %v1214 = vrot.slane %v1208, %v1213
        %v1220 = vunpack.c.l.b16 %v1204
        %v1221 = vunpack.c.l.b16 %v1205
        %v1222 = vunpack.c.l.b16 %v1206
        %v1223 = vunpack.c.l.b16 %v1207
        %v1224 = vpack.c.b16 %v1221, %v1220
        %v1225 = vpack.c.b16 %v1223, %v1222
        %vm1228 = vcmask 261120
        %v1230 = vsel %vm1228, %v1209, 0
        %1232 = vmatprep.subr.bf16.mxu0 0
        %1233 = vmatpush1.bf16.msra.mxu0 %v1224
        %1234 = vmatprep.subr.bf16.mxu0 0
        %1235 = vmatpush1.bf16.msra.mxu0 %v1225
        %1236 = vmatprep.subr.bf16.mxu0 0
        %1237 = vmatpush1.bf16.msra.mxu0 0
        %1238 = vmatprep.subr.bf16.mxu0 0
        %1239 = vmatpush1.bf16.msra.mxu0 0
        %1240 = vmatprep.subr.bf16.mxu0 0
        %1241 = vmatpush1.bf16.msra.mxu0 0
        %1242 = vmatprep.subr.bf16.mxu0 0
        %1243 = vmatpush1.bf16.msra.mxu0 0
        %1244 = vmatprep.subr.bf16.mxu0 0
        %1245 = vmatpush1.bf16.msra.mxu0 0
        %1246 = vmatprep.subr.bf16.mxu0 0
        %1247 = vmatpush1.bf16.msra.mxu0 0
        %1248 = vmatprep.subr.bf16.mxu0 0
        %1249 = vmatpush1.bf16.msra.mxu0 0
        %1250 = vmatprep.subr.bf16.mxu0 0
        %1251 = vmatpush1.bf16.msra.mxu0 0
        %1252 = vmatprep.subr.bf16.mxu0 0
        %1253 = vmatpush1.bf16.msra.mxu0 0
        %1254 = vmatprep.subr.bf16.mxu0 0
        %1255 = vmatpush1.bf16.msra.mxu0 0
        %1256 = vmatprep.subr.bf16.mxu0 0
        %1257 = vmatpush1.bf16.msra.mxu0 0
        %1258 = vmatprep.subr.bf16.mxu0 0
        %1259 = vmatpush1.bf16.msra.mxu0 0
        %1260 = vmatprep.subr.bf16.mxu0 0
        %1261 = vmatpush1.bf16.msra.mxu0 0
        %1262 = vmatprep.subr.bf16.mxu0 0
        %1263 = vmatpush1.bf16.msra.mxu0 0
        %1264 = vmatprep.mubr.bf16.mxu0 0
        %1265 = vmatmul.mubr.bf16.gmra.mrb[0].mxu0 %v1230
        %v1266 = vpop.f32.mrb[0].mxu0
        %v1267 = vadd.f32 %v1214, %v1266
        %v1268 = vpop.f32.mrb[0].mxu0
        %v1269 = vpop.f32.mrb[0].mxu0
        %v1270 = vpop.f32.mrb[0].mxu0
        %1271 = vdwg.mxu0
        %v1272 = vpack.c.bf16 %v1267, %v1267
        %vm1273 = vcmask 60416
        %1274 = vst.msk [vmem:[#allocation2] sm:$0xf] %vm1273, %v1272
        %v1276 = vunpack.c.l.b16 %v1272
        %v1277 = vpack.c.b16 %v1276, %v1276
        %1278 = vrot.lane.b32.xlu0 %v1277, 96
        %v1279 = vpop.permute.xlu0 %1278
        %1281 = vst.msk [vmem:[#allocation3] sm:$0xf] %vm1273, %v1279
        %1282 = vrot.lane.b32.xlu0 %v1277, 64
        %v1283 = vpop.permute.xlu0 %1282
        %1285 = vst.msk [vmem:[#allocation4] sm:$0xf] %vm1273, %v1283
        %1286 = vrot.lane.b32.xlu0 %v1277, 120
        %v1287 = vpop.permute.xlu0 %1286
        %s1289 = scalar_lea.vmem [#allocation2], 4
        %1290 = vst.msk [vmem:[%s1289] sm:$0xf] %vm1273, %v1287
        %1291 = vrot.lane.b32.xlu0 %v1277, 88
        %v1292 = vpop.permute.xlu0 %1291
        %s1294 = scalar_lea.vmem [#allocation3], 4
        %1295 = vst.msk [vmem:[%s1294] sm:$0xf] %vm1273, %v1292
        %1296 = vrot.lane.b32.xlu0 %v1277, 56
        %v1297 = vpop.permute.xlu0 %1296
        %s1299 = scalar_lea.vmem [#allocation4], 4
        %1300 = vst.msk [vmem:[%s1299] sm:$0xf] %vm1273, %v1297
        %1301 = vrot.lane.b32.xlu0 %v1277, 112
        %v1302 = vpop.permute.xlu0 %1301
        %s1304 = scalar_lea.vmem [#allocation2], 8
        %1305 = vst.msk [vmem:[%s1304] sm:$0xf] %vm1273, %v1302
        %1306 = vrot.lane.b32.xlu0 %v1277, 80
        %v1307 = vpop.permute.xlu0 %1306
        %s1309 = scalar_lea.vmem [#allocation3], 8
        %1310 = vst.msk [vmem:[%s1309] sm:$0xf] %vm1273, %v1307
        %1311 = vrot.lane.b32.xlu0 %v1277, 48
        %v1312 = vpop.permute.xlu0 %1311
        %s1314 = scalar_lea.vmem [#allocation4], 8
        %1315 = vst.msk [vmem:[%s1314] sm:$0xf] %vm1273, %v1312
        %1316 = vrot.lane.b32.xlu0 %v1277, 104
        %v1317 = vpop.permute.xlu0 %1316
        %s1319 = scalar_lea.vmem [#allocation2], 12
        %1320 = vst.msk [vmem:[%s1319] sm:$0xf] %vm1273, %v1317
        %1321 = vrot.lane.b32.xlu0 %v1277, 72
        %v1322 = vpop.permute.xlu0 %1321
        %s1324 = scalar_lea.vmem [#allocation3], 12
        %1325 = vst.msk [vmem:[%s1324] sm:$0xf] %vm1273, %v1322
        %1326 = vrot.lane.b32.xlu0 %v1277, 40
        %v1327 = vpop.permute.xlu0 %1326
        %s1329 = scalar_lea.vmem [#allocation4], 12
        %1330 = vst.msk [vmem:[%s1329] sm:$0xf] %vm1273, %v1327
        %v1331 = vld [vmem:[#allocation2] sm:$0xf]
        %v1332 = vld [vmem:[#allocation2 + $0x4] sm:$0xf]
        %v1333 = vld [vmem:[#allocation2 + $0x8] sm:$0xf]
        %v1334 = vld [vmem:[#allocation2 + $0xc] sm:$0xf]
        %v1335 = vld [vmem:[#allocation3] sm:$0xf]
        %v1336 = vld [vmem:[#allocation3 + $0x4] sm:$0xf]
        %v1337 = vld [vmem:[#allocation3 + $0x8] sm:$0xf]
        %v1338 = vld [vmem:[#allocation3 + $0xc] sm:$0xf]
        %v1339 = vld [vmem:[#allocation4] sm:$0xf]
        %v1340 = vld [vmem:[#allocation4 + $0x4] sm:$0xf]
        %v1341 = vld [vmem:[#allocation4 + $0x8] sm:$0xf]
        %v1342 = vld [vmem:[#allocation4 + $0xc] sm:$0xf]
        %vm1343 = vcmask 64512
        %v1345 = vsel %vm1343, %v1331, 0
        %v1348 = vsel %vm1343, %v1335, 0
        %1350 = vmatprep.subr.bf16.mxu0 0
        %1351 = vmatpush1.bf16.xpose.msra.mxu0 %v1348
        %1352 = vmatprep.subr.bf16.mxu0 0
        %1353 = vmatpush1.bf16.xpose.msra.mxu0 0
        %1354 = vmatprep.subr.bf16.mxu0 0
        %1355 = vmatpush1.bf16.xpose.msra.mxu0 0
        %1356 = vmatprep.subr.bf16.mxu0 0
        %1357 = vmatpush1.bf16.xpose.msra.mxu0 0
        %1358 = vmatprep.subr.bf16.mxu0 0
        %1359 = vmatpush1.bf16.xpose.msra.mxu0 0
        %1360 = vmatprep.subr.bf16.mxu0 0
        %1361 = vmatpush1.bf16.xpose.msra.mxu0 0
        %1362 = vmatprep.subr.bf16.mxu0 0
        %1363 = vmatpush1.bf16.xpose.msra.mxu0 0
        %1364 = vmatprep.subr.bf16.mxu0 0
        %1365 = vmatpush1.bf16.xpose.msra.mxu0 0
        %1366 = vmatprep.subr.bf16.mxu0 0
        %1367 = vmatpush1.bf16.xpose.msra.mxu0 0
        %1368 = vmatprep.subr.bf16.mxu0 0
        %1369 = vmatpush1.bf16.xpose.msra.mxu0 0
        %1370 = vmatprep.subr.bf16.mxu0 0
        %1371 = vmatpush1.bf16.xpose.msra.mxu0 0
        %1372 = vmatprep.subr.bf16.mxu0 0
        %1373 = vmatpush1.bf16.xpose.msra.mxu0 0
        %1374 = vmatprep.subr.bf16.mxu0 0
        %1375 = vmatpush1.bf16.xpose.msra.mxu0 0
        %1376 = vmatprep.subr.bf16.mxu0 0
        %1377 = vmatpush1.bf16.xpose.msra.mxu0 0
        %1378 = vmatprep.subr.bf16.mxu0 0
        %1379 = vmatpush1.bf16.xpose.msra.mxu0 0
        %1380 = vmatprep.subr.bf16.mxu0 0
        %1381 = vmatpush1.bf16.xpose.msra.mxu0 0
        %1382 = vmatprep.mubr.bf16.mxu0 0
        %1383 = vmatmul.mubr.bf16.gmra.mrb[0].mxu0 %v1345
        %v1384 = vpop.f32.mrb[0].mxu0
        %v1385 = vadd.f32 0.0, %v1384
        %v1386 = vpop.f32.mrb[0].mxu0
        %v1387 = vpop.f32.mrb[0].mxu0
        %v1388 = vpop.f32.mrb[0].mxu0
        %1389 = vdwg.mxu0
        %v1391 = vsel %vm1343, %v1332, 0
        %v1394 = vsel %vm1343, %v1336, 0
        %1396 = vmatprep.subr.bf16.mxu0 0
        %1397 = vmatpush1.bf16.xpose.msra.mxu0 %v1394
        %1398 = vmatprep.subr.bf16.mxu0 0
        %1399 = vmatpush1.bf16.xpose.msra.mxu0 0
        %1400 = vmatprep.subr.bf16.mxu0 0
        %1401 = vmatpush1.bf16.xpose.msra.mxu0 0
        %1402 = vmatprep.subr.bf16.mxu0 0
        %1403 = vmatpush1.bf16.xpose.msra.mxu0 0
        %1404 = vmatprep.subr.bf16.mxu0 0
        %1405 = vmatpush1.bf16.xpose.msra.mxu0 0
        %1406 = vmatprep.subr.bf16.mxu0 0
        %1407 = vmatpush1.bf16.xpose.msra.mxu0 0
        %1408 = vmatprep.subr.bf16.mxu0 0
        %1409 = vmatpush1.bf16.xpose.msra.mxu0 0
        %1410 = vmatprep.subr.bf16.mxu0 0
        %1411 = vmatpush1.bf16.xpose.msra.mxu0 0
        %1412 = vmatprep.subr.bf16.mxu0 0
        %1413 = vmatpush1.bf16.xpose.msra.mxu0 0
        %1414 = vmatprep.subr.bf16.mxu0 0
        %1415 = vmatpush1.bf16.xpose.msra.mxu0 0
        %1416 = vmatprep.subr.bf16.mxu0 0
        %1417 = vmatpush1.bf16.xpose.msra.mxu0 0
        %1418 = vmatprep.subr.bf16.mxu0 0
        %1419 = vmatpush1.bf16.xpose.msra.mxu0 0
        %1420 = vmatprep.subr.bf16.mxu0 0
        %1421 = vmatpush1.bf16.xpose.msra.mxu0 0
        %1422 = vmatprep.subr.bf16.mxu0 0
        %1423 = vmatpush1.bf16.xpose.msra.mxu0 0
        %1424 = vmatprep.subr.bf16.mxu0 0
        %1425 = vmatpush1.bf16.xpose.msra.mxu0 0
        %1426 = vmatprep.subr.bf16.mxu0 0
        %1427 = vmatpush1.bf16.xpose.msra.mxu0 0
        %1428 = vmatprep.mubr.bf16.mxu0 0
        %1429 = vmatmul.mubr.bf16.gmra.mrb[0].mxu0 %v1391
        %v1430 = vpop.f32.mrb[0].mxu0
        %v1431 = vadd.f32 0.0, %v1430
        %v1432 = vpop.f32.mrb[0].mxu0
        %v1433 = vpop.f32.mrb[0].mxu0
        %v1434 = vpop.f32.mrb[0].mxu0
        %1435 = vdwg.mxu0
        %v1437 = vsel %vm1343, %v1333, 0
        %v1440 = vsel %vm1343, %v1337, 0
        %1442 = vmatprep.subr.bf16.mxu0 0
        %1443 = vmatpush1.bf16.xpose.msra.mxu0 %v1440
        %1444 = vmatprep.subr.bf16.mxu0 0
        %1445 = vmatpush1.bf16.xpose.msra.mxu0 0
        %1446 = vmatprep.subr.bf16.mxu0 0
        %1447 = vmatpush1.bf16.xpose.msra.mxu0 0
        %1448 = vmatprep.subr.bf16.mxu0 0
        %1449 = vmatpush1.bf16.xpose.msra.mxu0 0
        %1450 = vmatprep.subr.bf16.mxu0 0
        %1451 = vmatpush1.bf16.xpose.msra.mxu0 0
        %1452 = vmatprep.subr.bf16.mxu0 0
        %1453 = vmatpush1.bf16.xpose.msra.mxu0 0
        %1454 = vmatprep.subr.bf16.mxu0 0
        %1455 = vmatpush1.bf16.xpose.msra.mxu0 0
        %1456 = vmatprep.subr.bf16.mxu0 0
        %1457 = vmatpush1.bf16.xpose.msra.mxu0 0
        %1458 = vmatprep.subr.bf16.mxu0 0
        %1459 = vmatpush1.bf16.xpose.msra.mxu0 0
        %1460 = vmatprep.subr.bf16.mxu0 0
        %1461 = vmatpush1.bf16.xpose.msra.mxu0 0
        %1462 = vmatprep.subr.bf16.mxu0 0
        %1463 = vmatpush1.bf16.xpose.msra.mxu0 0
        %1464 = vmatprep.subr.bf16.mxu0 0
        %1465 = vmatpush1.bf16.xpose.msra.mxu0 0
        %1466 = vmatprep.subr.bf16.mxu0 0
        %1467 = vmatpush1.bf16.xpose.msra.mxu0 0
        %1468 = vmatprep.subr.bf16.mxu0 0
        %1469 = vmatpush1.bf16.xpose.msra.mxu0 0
        %1470 = vmatprep.subr.bf16.mxu0 0
        %1471 = vmatpush1.bf16.xpose.msra.mxu0 0
        %1472 = vmatprep.subr.bf16.mxu0 0
        %1473 = vmatpush1.bf16.xpose.msra.mxu0 0
        %1474 = vmatprep.mubr.bf16.mxu0 0
        %1475 = vmatmul.mubr.bf16.gmra.mrb[0].mxu0 %v1437
        %v1476 = vpop.f32.mrb[0].mxu0
        %v1477 = vadd.f32 0.0, %v1476
        %v1478 = vpop.f32.mrb[0].mxu0
        %v1479 = vpop.f32.mrb[0].mxu0
        %v1480 = vpop.f32.mrb[0].mxu0
        %1481 = vdwg.mxu0
        %v1483 = vsel %vm1343, %v1334, 0
        %v1486 = vsel %vm1343, %v1338, 0
        %1488 = vmatprep.subr.bf16.mxu0 0
        %1489 = vmatpush1.bf16.xpose.msra.mxu0 %v1486
        %1490 = vmatprep.subr.bf16.mxu0 0
        %1491 = vmatpush1.bf16.xpose.msra.mxu0 0
        %1492 = vmatprep.subr.bf16.mxu0 0
        %1493 = vmatpush1.bf16.xpose.msra.mxu0 0
        %1494 = vmatprep.subr.bf16.mxu0 0
        %1495 = vmatpush1.bf16.xpose.msra.mxu0 0
        %1496 = vmatprep.subr.bf16.mxu0 0
        %1497 = vmatpush1.bf16.xpose.msra.mxu0 0
        %1498 = vmatprep.subr.bf16.mxu0 0
        %1499 = vmatpush1.bf16.xpose.msra.mxu0 0
        %1500 = vmatprep.subr.bf16.mxu0 0
        %1501 = vmatpush1.bf16.xpose.msra.mxu0 0
        %1502 = vmatprep.subr.bf16.mxu0 0
        %1503 = vmatpush1.bf16.xpose.msra.mxu0 0
        %1504 = vmatprep.subr.bf16.mxu0 0
        %1505 = vmatpush1.bf16.xpose.msra.mxu0 0
        %1506 = vmatprep.subr.bf16.mxu0 0
        %1507 = vmatpush1.bf16.xpose.msra.mxu0 0
        %1508 = vmatprep.subr.bf16.mxu0 0
        %1509 = vmatpush1.bf16.xpose.msra.mxu0 0
        %1510 = vmatprep.subr.bf16.mxu0 0
        %1511 = vmatpush1.bf16.xpose.msra.mxu0 0
        %1512 = vmatprep.subr.bf16.mxu0 0
        %1513 = vmatpush1.bf16.xpose.msra.mxu0 0
        %1514 = vmatprep.subr.bf16.mxu0 0
        %1515 = vmatpush1.bf16.xpose.msra.mxu0 0
        %1516 = vmatprep.subr.bf16.mxu0 0
        %1517 = vmatpush1.bf16.xpose.msra.mxu0 0
        %1518 = vmatprep.subr.bf16.mxu0 0
        %1519 = vmatpush1.bf16.xpose.msra.mxu0 0
        %1520 = vmatprep.mubr.bf16.mxu0 0
        %1521 = vmatmul.mubr.bf16.gmra.mrb[0].mxu0 %v1483
        %v1522 = vpop.f32.mrb[0].mxu0
        %v1523 = vadd.f32 0.0, %v1522
        %v1524 = vpop.f32.mrb[0].mxu0
        %v1525 = vpop.f32.mrb[0].mxu0
        %v1526 = vpop.f32.mrb[0].mxu0
        %1527 = vdwg.mxu0
        %v1528 = vmul.f32 %v1385, 0.35355338
        %v1529 = vmul.f32 %v1431, 0.35355338
        %v1530 = vmul.f32 %v1477, 0.35355338
        %v1531 = vmul.f32 %v1523, 0.35355338
        %v1532 = vadd.f32 %v1528, %v1203
        %v1533 = vadd.f32 %v1529, %v1203
        %v1534 = vadd.f32 %v1530, %v1203
        %v1535 = vadd.f32 %v1531, %v1203
        %v1536 = vsel %vm1343, %v1532, -inf
        %1537 = vmax.xlane.f32.xlu0 %v1536
        %v1538 = vpop.xlane.xlu0 %1537
        %v1539 = vsel %vm1343, %v1533, -inf
        %1540 = vmax.xlane.f32.xlu0 %v1539
        %v1541 = vpop.xlane.xlu0 %1540
        %v1542 = vsel %vm1343, %v1534, -inf
        %1543 = vmax.xlane.f32.xlu0 %v1542
        %v1544 = vpop.xlane.xlu0 %1543
        %v1545 = vsel %vm1343, %v1535, -inf
        %1546 = vmax.xlane.f32.xlu0 %v1545
        %v1547 = vpop.xlane.xlu0 %1546
        %v1548 = vsub.f32 %v1532, %v1538
        %v1549 = vsub.f32 %v1533, %v1541
        %v1550 = vsub.f32 %v1534, %v1544
        %v1551 = vsub.f32 %v1535, %v1547
        %v1552 = vmul.f32 %v1548, 1.442695
        %v1553 = vpow.pop %v1552
        %v1554 = vmul.f32 %v1549, 1.442695
        %v1555 = vpow.pop %v1554
        %v1556 = vmul.f32 %v1550, 1.442695
        %v1557 = vpow.pop %v1556
        %v1558 = vmul.f32 %v1551, 1.442695
        %v1559 = vpow.pop %v1558
        %v1560 = vsel %vm1343, %v1553, 0.0
        %1561 = vadd.xlane.f32.xlu0 %v1560
        %v1562 = vpop.xlane.xlu0 %1561
        %v1563 = vsel %vm1343, %v1555, 0.0
        %1564 = vadd.xlane.f32.xlu0 %v1563
        %v1565 = vpop.xlane.xlu0 %1564
        %v1566 = vsel %vm1343, %v1557, 0.0
        %1567 = vadd.xlane.f32.xlu0 %v1566
        %v1568 = vpop.xlane.xlu0 %1567
        %v1569 = vsel %vm1343, %v1559, 0.0
        %1570 = vadd.xlane.f32.xlu0 %v1569
        %v1571 = vpop.xlane.xlu0 %1570
        %v1572 = vrcp.pop %v1562
        %v1573 = vmul.f32 %v1553, %v1572
        %v1574 = vrcp.pop %v1565
        %v1575 = vmul.f32 %v1555, %v1574
        %v1576 = vrcp.pop %v1568
        %v1577 = vmul.f32 %v1557, %v1576
        %v1578 = vrcp.pop %v1571
        %v1579 = vmul.f32 %v1559, %v1578
        %v1580 = vpack.c.bf16 %v1573, %v1573
        %v1581 = vpack.c.bf16 %v1575, %v1575
        %v1582 = vpack.c.bf16 %v1577, %v1577
        %v1583 = vpack.c.bf16 %v1579, %v1579
        %v1585 = vsel %vm1343, %v1580, 0
        %vm1587 = vcmask 1043456
        %v1589 = vsel %vm1587, %v1339, 0
        %1591 = vmatprep.subr.bf16.mxu0 0
        %1592 = vmatpush1.bf16.msra.mxu0 %v1589
        %1593 = vmatprep.subr.bf16.mxu0 0
        %1594 = vmatpush1.bf16.msra.mxu0 0
        %1595 = vmatprep.subr.bf16.mxu0 0
        %1596 = vmatpush1.bf16.msra.mxu0 0
        %1597 = vmatprep.subr.bf16.mxu0 0
        %1598 = vmatpush1.bf16.msra.mxu0 0
        %1599 = vmatprep.subr.bf16.mxu0 0
        %1600 = vmatpush1.bf16.msra.mxu0 0
        %1601 = vmatprep.subr.bf16.mxu0 0
        %1602 = vmatpush1.bf16.msra.mxu0 0
        %1603 = vmatprep.subr.bf16.mxu0 0
        %1604 = vmatpush1.bf16.msra.mxu0 0
        %1605 = vmatprep.subr.bf16.mxu0 0
        %1606 = vmatpush1.bf16.msra.mxu0 0
        %1607 = vmatprep.subr.bf16.mxu0 0
        %1608 = vmatpush1.bf16.msra.mxu0 0
        %1609 = vmatprep.subr.bf16.mxu0 0
        %1610 = vmatpush1.bf16.msra.mxu0 0
        %1611 = vmatprep.subr.bf16.mxu0 0
        %1612 = vmatpush1.bf16.msra.mxu0 0
        %1613 = vmatprep.subr.bf16.mxu0 0
        %1614 = vmatpush1.bf16.msra.mxu0 0
        %1615 = vmatprep.subr.bf16.mxu0 0
        %1616 = vmatpush1.bf16.msra.mxu0 0
        %1617 = vmatprep.subr.bf16.mxu0 0
        %1618 = vmatpush1.bf16.msra.mxu0 0
        %1619 = vmatprep.subr.bf16.mxu0 0
        %1620 = vmatpush1.bf16.msra.mxu0 0
        %1621 = vmatprep.subr.bf16.mxu0 0
        %1622 = vmatpush1.bf16.msra.mxu0 0
        %1623 = vmatprep.mubr.bf16.mxu0 0
        %1624 = vmatmul.mubr.bf16.gmra.mrb[0].mxu0 %v1585
        %v1625 = vpop.f32.mrb[0].mxu0
        %v1626 = vadd.f32 0.0, %v1625
        %v1627 = vpop.f32.mrb[0].mxu0
        %v1628 = vpop.f32.mrb[0].mxu0
        %v1629 = vpop.f32.mrb[0].mxu0
        %1630 = vdwg.mxu0
        %v1632 = vsel %vm1343, %v1581, 0
        %v1635 = vsel %vm1587, %v1340, 0
        %1637 = vmatprep.subr.bf16.mxu0 0
        %1638 = vmatpush1.bf16.msra.mxu0 %v1635
        %1639 = vmatprep.subr.bf16.mxu0 0
        %1640 = vmatpush1.bf16.msra.mxu0 0
        %1641 = vmatprep.subr.bf16.mxu0 0
        %1642 = vmatpush1.bf16.msra.mxu0 0
        %1643 = vmatprep.subr.bf16.mxu0 0
        %1644 = vmatpush1.bf16.msra.mxu0 0
        %1645 = vmatprep.subr.bf16.mxu0 0
        %1646 = vmatpush1.bf16.msra.mxu0 0
        %1647 = vmatprep.subr.bf16.mxu0 0
        %1648 = vmatpush1.bf16.msra.mxu0 0
        %1649 = vmatprep.subr.bf16.mxu0 0
        %1650 = vmatpush1.bf16.msra.mxu0 0
        %1651 = vmatprep.subr.bf16.mxu0 0
        %1652 = vmatpush1.bf16.msra.mxu0 0
        %1653 = vmatprep.subr.bf16.mxu0 0
        %1654 = vmatpush1.bf16.msra.mxu0 0
        %1655 = vmatprep.subr.bf16.mxu0 0
        %1656 = vmatpush1.bf16.msra.mxu0 0
        %1657 = vmatprep.subr.bf16.mxu0 0
        %1658 = vmatpush1.bf16.msra.mxu0 0
        %1659 = vmatprep.subr.bf16.mxu0 0
        %1660 = vmatpush1.bf16.msra.mxu0 0
        %1661 = vmatprep.subr.bf16.mxu0 0
        %1662 = vmatpush1.bf16.msra.mxu0 0
        %1663 = vmatprep.subr.bf16.mxu0 0
        %1664 = vmatpush1.bf16.msra.mxu0 0
        %1665 = vmatprep.subr.bf16.mxu0 0
        %1666 = vmatpush1.bf16.msra.mxu0 0
        %1667 = vmatprep.subr.bf16.mxu0 0
        %1668 = vmatpush1.bf16.msra.mxu0 0
        %1669 = vmatprep.mubr.bf16.mxu0 0
        %1670 = vmatmul.mubr.bf16.gmra.mrb[0].mxu0 %v1632
        %v1671 = vpop.f32.mrb[0].mxu0
        %v1672 = vadd.f32 0.0, %v1671
        %v1673 = vpop.f32.mrb[0].mxu0
        %v1674 = vpop.f32.mrb[0].mxu0
        %v1675 = vpop.f32.mrb[0].mxu0
        %1676 = vdwg.mxu0
        %v1678 = vsel %vm1343, %v1582, 0
        %v1681 = vsel %vm1587, %v1341, 0
        %1683 = vmatprep.subr.bf16.mxu0 0
        %1684 = vmatpush1.bf16.msra.mxu0 %v1681
        %1685 = vmatprep.subr.bf16.mxu0 0
        %1686 = vmatpush1.bf16.msra.mxu0 0
        %1687 = vmatprep.subr.bf16.mxu0 0
        %1688 = vmatpush1.bf16.msra.mxu0 0
        %1689 = vmatprep.subr.bf16.mxu0 0
        %1690 = vmatpush1.bf16.msra.mxu0 0
        %1691 = vmatprep.subr.bf16.mxu0 0
        %1692 = vmatpush1.bf16.msra.mxu0 0
        %1693 = vmatprep.subr.bf16.mxu0 0
        %1694 = vmatpush1.bf16.msra.mxu0 0
        %1695 = vmatprep.subr.bf16.mxu0 0
        %1696 = vmatpush1.bf16.msra.mxu0 0
        %1697 = vmatprep.subr.bf16.mxu0 0
        %1698 = vmatpush1.bf16.msra.mxu0 0
        %1699 = vmatprep.subr.bf16.mxu0 0
        %1700 = vmatpush1.bf16.msra.mxu0 0
        %1701 = vmatprep.subr.bf16.mxu0 0
        %1702 = vmatpush1.bf16.msra.mxu0 0
        %1703 = vmatprep.subr.bf16.mxu0 0
        %1704 = vmatpush1.bf16.msra.mxu0 0
        %1705 = vmatprep.subr.bf16.mxu0 0
        %1706 = vmatpush1.bf16.msra.mxu0 0
        %1707 = vmatprep.subr.bf16.mxu0 0
        %1708 = vmatpush1.bf16.msra.mxu0 0
        %1709 = vmatprep.subr.bf16.mxu0 0
        %1710 = vmatpush1.bf16.msra.mxu0 0
        %1711 = vmatprep.subr.bf16.mxu0 0
        %1712 = vmatpush1.bf16.msra.mxu0 0
        %1713 = vmatprep.subr.bf16.mxu0 0
        %1714 = vmatpush1.bf16.msra.mxu0 0
        %1715 = vmatprep.mubr.bf16.mxu0 0
        %1716 = vmatmul.mubr.bf16.gmra.mrb[0].mxu0 %v1678
        %v1717 = vpop.f32.mrb[0].mxu0
        %v1718 = vadd.f32 0.0, %v1717
        %v1719 = vpop.f32.mrb[0].mxu0
        %v1720 = vpop.f32.mrb[0].mxu0
        %v1721 = vpop.f32.mrb[0].mxu0
        %1722 = vdwg.mxu0
        %v1724 = vsel %vm1343, %v1583, 0
        %v1727 = vsel %vm1587, %v1342, 0
        %1729 = vmatprep.subr.bf16.mxu0 0
        %1730 = vmatpush1.bf16.msra.mxu0 %v1727
        %1731 = vmatprep.subr.bf16.mxu0 0
        %1732 = vmatpush1.bf16.msra.mxu0 0
        %1733 = vmatprep.subr.bf16.mxu0 0
        %1734 = vmatpush1.bf16.msra.mxu0 0
        %1735 = vmatprep.subr.bf16.mxu0 0
        %1736 = vmatpush1.bf16.msra.mxu0 0
        %1737 = vmatprep.subr.bf16.mxu0 0
        %1738 = vmatpush1.bf16.msra.mxu0 0
        %1739 = vmatprep.subr.bf16.mxu0 0
        %1740 = vmatpush1.bf16.msra.mxu0 0
        %1741 = vmatprep.subr.bf16.mxu0 0
        %1742 = vmatpush1.bf16.msra.mxu0 0
        %1743 = vmatprep.subr.bf16.mxu0 0
        %1744 = vmatpush1.bf16.msra.mxu0 0
        %1745 = vmatprep.subr.bf16.mxu0 0
        %1746 = vmatpush1.bf16.msra.mxu0 0
        %1747 = vmatprep.subr.bf16.mxu0 0
        %1748 = vmatpush1.bf16.msra.mxu0 0
        %1749 = vmatprep.subr.bf16.mxu0 0
        %1750 = vmatpush1.bf16.msra.mxu0 0
        %1751 = vmatprep.subr.bf16.mxu0 0
        %1752 = vmatpush1.bf16.msra.mxu0 0
        %1753 = vmatprep.subr.bf16.mxu0 0
        %1754 = vmatpush1.bf16.msra.mxu0 0
        %1755 = vmatprep.subr.bf16.mxu0 0
        %1756 = vmatpush1.bf16.msra.mxu0 0
        %1757 = vmatprep.subr.bf16.mxu0 0
        %1758 = vmatpush1.bf16.msra.mxu0 0
        %1759 = vmatprep.subr.bf16.mxu0 0
        %1760 = vmatpush1.bf16.msra.mxu0 0
        %1761 = vmatprep.mubr.bf16.mxu0 0
        %1762 = vmatmul.mubr.bf16.gmra.mrb[0].mxu0 %v1724
        %v1763 = vpop.f32.mrb[0].mxu0
        %v1764 = vadd.f32 0.0, %v1763
        %v1765 = vpop.f32.mrb[0].mxu0
        %v1766 = vpop.f32.mrb[0].mxu0
        %v1767 = vpop.f32.mrb[0].mxu0
        %1768 = vdwg.mxu0
        %v1769 = vpack.c.bf16 %v1626, %v1626
        %1770 = vst.msk [vmem:[#allocation5] sm:$0xf] %vm1273, %v1769
        %v1771 = vpack.c.bf16 %v1672, %v1672
        %v1773 = vunpack.c.l.b16 %v1771
        %v1774 = vpack.c.b16 %v1773, %v1773
        %1775 = vrot.lane.b32.xlu0 %v1774, 8
        %v1776 = vpop.permute.xlu0 %1775
        %vm1778 = vcmask 126016
        %1779 = vst.msk [vmem:[#allocation5] sm:$0xf] %vm1778, %v1776
        %v1780 = vpack.c.bf16 %v1718, %v1718
        %v1782 = vunpack.c.l.b16 %v1780
        %v1783 = vpack.c.b16 %v1782, %v1782
        %1784 = vrot.lane.b32.xlu0 %v1783, 16
        %v1785 = vpop.permute.xlu0 %1784
        %vm1787 = vcmask 191616
        %1788 = vst.msk [vmem:[#allocation5] sm:$0xf] %vm1787, %v1785
        %v1789 = vpack.c.bf16 %v1764, %v1764
        %v1791 = vunpack.c.l.b16 %v1789
        %v1792 = vpack.c.b16 %v1791, %v1791
        %1793 = vrot.lane.b32.xlu0 %v1792, 24
        %v1794 = vpop.permute.xlu0 %1793
        %vm1796 = vcmask 257216
        %1797 = vst.msk [vmem:[#allocation5] sm:$0xf] %vm1796, %v1794
        %v1798 = vld [vmem:[#allocation5] sm:$0xf]
        %v1799 = vld [vmem:[%s1142] sm:$0xf]
        %v1800 = vld [vmem:[%s1142 + $0x4] sm:$0xf]
        %v1801 = vld [vmem:[%s1142 + $0x8] sm:$0xf]
        %v1802 = vld [vmem:[%s1142 + $0xc] sm:$0xf]
        %v1803 = vld [vmem:[%s1145] sm:$0x1]
        %v1805 = vlaneseq
        %v1806 = vshrl.u32 %v1805, 7
        %v1807 = vsub.s32 0, %v1806
        %v1808 = vrot.slane %v1803, %v1807
        %v1814 = vunpack.c.l.b16 %v1799
        %v1815 = vunpack.c.l.b16 %v1800
        %v1816 = vunpack.c.l.b16 %v1801
        %v1817 = vunpack.c.l.b16 %v1802
        %v1818 = vpack.c.b16 %v1815, %v1814
        %v1819 = vpack.c.b16 %v1817, %v1816
        %v1823 = vsel %vm1228, %v1798, 0
        %1825 = vmatprep.subr.bf16.mxu0 0
        %1826 = vmatpush1.bf16.msra.mxu0 %v1818
        %1827 = vmatprep.subr.bf16.mxu0 0
        %1828 = vmatpush1.bf16.msra.mxu0 %v1819
        %1829 = vmatprep.subr.bf16.mxu0 0
        %1830 = vmatpush1.bf16.msra.mxu0 0
        %1831 = vmatprep.subr.bf16.mxu0 0
        %1832 = vmatpush1.bf16.msra.mxu0 0
        %1833 = vmatprep.subr.bf16.mxu0 0
        %1834 = vmatpush1.bf16.msra.mxu0 0
        %1835 = vmatprep.subr.bf16.mxu0 0
        %1836 = vmatpush1.bf16.msra.mxu0 0
        %1837 = vmatprep.subr.bf16.mxu0 0
        %1838 = vmatpush1.bf16.msra.mxu0 0
        %1839 = vmatprep.subr.bf16.mxu0 0
        %1840 = vmatpush1.bf16.msra.mxu0 0
        %1841 = vmatprep.subr.bf16.mxu0 0
        %1842 = vmatpush1.bf16.msra.mxu0 0
        %1843 = vmatprep.subr.bf16.mxu0 0
        %1844 = vmatpush1.bf16.msra.mxu0 0
        %1845 = vmatprep.subr.bf16.mxu0 0
        %1846 = vmatpush1.bf16.msra.mxu0 0
        %1847 = vmatprep.subr.bf16.mxu0 0
        %1848 = vmatpush1.bf16.msra.mxu0 0
        %1849 = vmatprep.subr.bf16.mxu0 0
        %1850 = vmatpush1.bf16.msra.mxu0 0
        %1851 = vmatprep.subr.bf16.mxu0 0
        %1852 = vmatpush1.bf16.msra.mxu0 0
        %1853 = vmatprep.subr.bf16.mxu0 0
        %1854 = vmatpush1.bf16.msra.mxu0 0
        %1855 = vmatprep.subr.bf16.mxu0 0
        %1856 = vmatpush1.bf16.msra.mxu0 0
        %1857 = vmatprep.mubr.bf16.mxu0 0
        %1858 = vmatmul.mubr.bf16.gmra.mrb[0].mxu0 %v1823
        %v1859 = vpop.f32.mrb[0].mxu0
        %v1860 = vadd.f32 %v1808, %v1859
        %v1861 = vpop.f32.mrb[0].mxu0
        %v1862 = vpop.f32.mrb[0].mxu0
        %v1863 = vpop.f32.mrb[0].mxu0
        %1864 = vdwg.mxu0
        %v1865 = vadd.f32 %v1860, %v1197
        %v1866 = vld [vmem:[%s1148] sm:$0x1]
        %v1867 = vld [vmem:[%s1151] sm:$0x1]
        %v1868 = vsel %vm1228, %v1865, 0.0
        %1869 = vadd.xlane.f32.xlu0 %v1868
        %v1870 = vpop.xlane.xlu0 %1869
        %v1871 = vrcp.pop 32.0
        %v1872 = vmul.f32 %v1870, %v1871
        %v1873 = vsub.f32 %v1865, %v1872
        %v1874 = vmul.f32 %v1873, %v1873
        %v1875 = vsel %vm1228, %v1874, 0.0
        %1876 = vadd.xlane.f32.xlu0 %v1875
        %v1877 = vpop.xlane.xlu0 %1876
        %v1878 = vmul.f32 %v1877, %v1871
        %v1879 = vadd.f32 %v1878, 1e-06
        %v1880 = vrsqrt.pop %v1879
        %v1881 = vmul.f32 %v1873, %v1880
        %v1883 = vlaneseq
        %v1884 = vshrl.u32 %v1883, 7
        %v1885 = vsub.s32 0, %v1884
        %v1886 = vrot.slane %v1866, %v1885
        %v1888 = vmul.f32 %v1881, %v1886
        %v1890 = vlaneseq
        %v1891 = vshrl.u32 %v1890, 7
        %v1892 = vsub.s32 0, %v1891
        %v1893 = vrot.slane %v1867, %v1892
        %v1895 = vadd.f32 %v1888, %v1893
        %v1896 = vld [vmem:[%s1129] sm:$0xff]
        %v1897 = vpack.c.bf16 %v1896, %v1896
        %v1898 = vld [vmem:[%s1156] sm:$0xf]
        %v1899 = vld [vmem:[%s1156 + $0x4] sm:$0xf]
        %v1900 = vld [vmem:[%s1156 + $0x8] sm:$0xf]
        %v1901 = vld [vmem:[%s1156 + $0xc] sm:$0xf]
        %v1902 = vld [vmem:[%s933] sm:$0x1]
        %v1903 = vpack.c.bf16 %v1895, %v1895
        %v1905 = vlaneseq
        %v1906 = vshrl.u32 %v1905, 7
        %v1907 = vsub.s32 0, %v1906
        %v1908 = vrot.slane %v1902, %v1907
        %v1914 = vunpack.c.l.b16 %v1898
        %v1915 = vunpack.c.l.b16 %v1899
        %v1916 = vunpack.c.l.b16 %v1900
        %v1917 = vunpack.c.l.b16 %v1901
        %v1918 = vpack.c.b16 %v1915, %v1914
        %v1919 = vpack.c.b16 %v1917, %v1916
        %v1923 = vsel %vm1228, %v1903, 0
        %1925 = vmatprep.subr.bf16.mxu0 0
        %1926 = vmatpush1.bf16.msra.mxu0 %v1918
        %1927 = vmatprep.subr.bf16.mxu0 0
        %1928 = vmatpush1.bf16.msra.mxu0 %v1919
        %1929 = vmatprep.subr.bf16.mxu0 0
        %1930 = vmatpush1.bf16.msra.mxu0 0
        %1931 = vmatprep.subr.bf16.mxu0 0
        %1932 = vmatpush1.bf16.msra.mxu0 0
        %1933 = vmatprep.subr.bf16.mxu0 0
        %1934 = vmatpush1.bf16.msra.mxu0 0
        %1935 = vmatprep.subr.bf16.mxu0 0
        %1936 = vmatpush1.bf16.msra.mxu0 0
        %1937 = vmatprep.subr.bf16.mxu0 0
        %1938 = vmatpush1.bf16.msra.mxu0 0
        %1939 = vmatprep.subr.bf16.mxu0 0
        %1940 = vmatpush1.bf16.msra.mxu0 0
        %1941 = vmatprep.subr.bf16.mxu0 0
        %1942 = vmatpush1.bf16.msra.mxu0 0
        %1943 = vmatprep.subr.bf16.mxu0 0
        %1944 = vmatpush1.bf16.msra.mxu0 0
        %1945 = vmatprep.subr.bf16.mxu0 0
        %1946 = vmatpush1.bf16.msra.mxu0 0
        %1947 = vmatprep.subr.bf16.mxu0 0
        %1948 = vmatpush1.bf16.msra.mxu0 0
        %1949 = vmatprep.subr.bf16.mxu0 0
        %1950 = vmatpush1.bf16.msra.mxu0 0
        %1951 = vmatprep.subr.bf16.mxu0 0
        %1952 = vmatpush1.bf16.msra.mxu0 0
        %1953 = vmatprep.subr.bf16.mxu0 0
        %1954 = vmatpush1.bf16.msra.mxu0 0
        %1955 = vmatprep.subr.bf16.mxu0 0
        %1956 = vmatpush1.bf16.msra.mxu0 0
        %1957 = vmatprep.mubr.bf16.mxu0 0
        %1958 = vmatmul.mubr.bf16.gmra.mrb[0].mxu0 %v1923
        %v1959 = vpop.f32.mrb[0].mxu0
        %v1960 = vadd.f32 %v1908, %v1959
        %v1961 = vpop.f32.mrb[0].mxu0
        %v1962 = vpop.f32.mrb[0].mxu0
        %v1963 = vpop.f32.mrb[0].mxu0
        %1964 = vdwg.mxu0
        %1965 = vrot.lane.b32.xlu0 %v1918, 96
        %v1966 = vpop.permute.xlu0 %1965
        %1967 = vrot.lane.b32.xlu0 %v1919, 96
        %v1968 = vpop.permute.xlu0 %1967
        %1971 = vrot.lane.b32.xlu0 %v1908, 96
        %v1972 = vpop.permute.xlu0 %1971
        %v1975 = vsel %vm1228, %v1897, 0
        %1977 = vmatprep.subr.bf16.mxu0 0
        %1978 = vmatpush1.bf16.msra.mxu0 %v1966
        %1979 = vmatprep.subr.bf16.mxu0 0
        %1980 = vmatpush1.bf16.msra.mxu0 %v1968
        %1981 = vmatprep.subr.bf16.mxu0 0
        %1982 = vmatpush1.bf16.msra.mxu0 0
        %1983 = vmatprep.subr.bf16.mxu0 0
        %1984 = vmatpush1.bf16.msra.mxu0 0
        %1985 = vmatprep.subr.bf16.mxu0 0
        %1986 = vmatpush1.bf16.msra.mxu0 0
        %1987 = vmatprep.subr.bf16.mxu0 0
        %1988 = vmatpush1.bf16.msra.mxu0 0
        %1989 = vmatprep.subr.bf16.mxu0 0
        %1990 = vmatpush1.bf16.msra.mxu0 0
        %1991 = vmatprep.subr.bf16.mxu0 0
        %1992 = vmatpush1.bf16.msra.mxu0 0
        %1993 = vmatprep.subr.bf16.mxu0 0
        %1994 = vmatpush1.bf16.msra.mxu0 0
        %1995 = vmatprep.subr.bf16.mxu0 0
        %1996 = vmatpush1.bf16.msra.mxu0 0
        %1997 = vmatprep.subr.bf16.mxu0 0
        %1998 = vmatpush1.bf16.msra.mxu0 0
        %1999 = vmatprep.subr.bf16.mxu0 0
        %2000 = vmatpush1.bf16.msra.mxu0 0
        %2001 = vmatprep.subr.bf16.mxu0 0
        %2002 = vmatpush1.bf16.msra.mxu0 0
        %2003 = vmatprep.subr.bf16.mxu0 0
        %2004 = vmatpush1.bf16.msra.mxu0 0
        %2005 = vmatprep.subr.bf16.mxu0 0
        %2006 = vmatpush1.bf16.msra.mxu0 0
        %2007 = vmatprep.subr.bf16.mxu0 0
        %2008 = vmatpush1.bf16.msra.mxu0 0
        %2009 = vmatprep.mubr.bf16.mxu0 0
        %2010 = vmatmul.mubr.bf16.gmra.mrb[0].mxu0 %v1975
        %v2011 = vpop.f32.mrb[0].mxu0
        %v2012 = vadd.f32 %v1972, %v2011
        %v2013 = vpop.f32.mrb[0].mxu0
        %v2014 = vpop.f32.mrb[0].mxu0
        %v2015 = vpop.f32.mrb[0].mxu0
        %2016 = vdwg.mxu0
        %v2017 = vpack.c.bf16 %v1960, %v1960
        %2018 = vst.msk [vmem:[#allocation2] sm:$0xf] %vm1273, %v2017
        %v2019 = vpack.c.bf16 %v2012, %v2012
        %2020 = vst.msk [vmem:[#allocation3] sm:$0xf] %vm1273, %v2019
        %v2022 = vunpack.c.l.b16 %v2019
        %v2023 = vpack.c.b16 %v2022, %v2022
        %2024 = vrot.lane.b32.xlu0 %v2023, 96
        %v2025 = vpop.permute.xlu0 %2024
        %2027 = vst.msk [vmem:[#allocation4] sm:$0xf] %vm1273, %v2025
        %v2029 = vunpack.c.l.b16 %v2017
        %v2030 = vpack.c.b16 %v2029, %v2029
        %2031 = vrot.lane.b32.xlu0 %v2030, 120
        %v2032 = vpop.permute.xlu0 %2031
        %2034 = vst.msk [vmem:[%s1289] sm:$0xf] %vm1273, %v2032
        %2035 = vrot.lane.b32.xlu0 %v2023, 120
        %v2036 = vpop.permute.xlu0 %2035
        %2038 = vst.msk [vmem:[%s1294] sm:$0xf] %vm1273, %v2036
        %2039 = vrot.lane.b32.xlu0 %v2023, 88
        %v2040 = vpop.permute.xlu0 %2039
        %2042 = vst.msk [vmem:[%s1299] sm:$0xf] %vm1273, %v2040
        %2043 = vrot.lane.b32.xlu0 %v2030, 112
        %v2044 = vpop.permute.xlu0 %2043
        %2046 = vst.msk [vmem:[%s1304] sm:$0xf] %vm1273, %v2044
        %2047 = vrot.lane.b32.xlu0 %v2023, 112
        %v2048 = vpop.permute.xlu0 %2047
        %2050 = vst.msk [vmem:[%s1309] sm:$0xf] %vm1273, %v2048
        %2051 = vrot.lane.b32.xlu0 %v2023, 80
        %v2052 = vpop.permute.xlu0 %2051
        %2054 = vst.msk [vmem:[%s1314] sm:$0xf] %vm1273, %v2052
        %2055 = vrot.lane.b32.xlu0 %v2030, 104
        %v2056 = vpop.permute.xlu0 %2055
        %2058 = vst.msk [vmem:[%s1319] sm:$0xf] %vm1273, %v2056
        %2059 = vrot.lane.b32.xlu0 %v2023, 104
        %v2060 = vpop.permute.xlu0 %2059
        %2062 = vst.msk [vmem:[%s1324] sm:$0xf] %vm1273, %v2060
        %2063 = vrot.lane.b32.xlu0 %v2023, 72
        %v2064 = vpop.permute.xlu0 %2063
        %2066 = vst.msk [vmem:[%s1329] sm:$0xf] %vm1273, %v2064
        %v2067 = vld [vmem:[#allocation2] sm:$0xf]
        %v2068 = vld [vmem:[#allocation2 + $0x4] sm:$0xf]
        %v2069 = vld [vmem:[#allocation2 + $0x8] sm:$0xf]
        %v2070 = vld [vmem:[#allocation2 + $0xc] sm:$0xf]
        %v2071 = vld [vmem:[#allocation3] sm:$0xf]
        %v2072 = vld [vmem:[#allocation3 + $0x4] sm:$0xf]
        %v2073 = vld [vmem:[#allocation3 + $0x8] sm:$0xf]
        %v2074 = vld [vmem:[#allocation3 + $0xc] sm:$0xf]
        %v2075 = vld [vmem:[#allocation4] sm:$0xf]
        %v2076 = vld [vmem:[#allocation4 + $0x4] sm:$0xf]
        %v2077 = vld [vmem:[#allocation4 + $0x8] sm:$0xf]
        %v2078 = vld [vmem:[#allocation4 + $0xc] sm:$0xf]
        %v2080 = vsel %vm1343, %v2067, 0
        %v2083 = vsel %vm1343, %v2071, 0
        %2085 = vmatprep.subr.bf16.mxu0 0
        %2086 = vmatpush1.bf16.xpose.msra.mxu0 %v2083
        %2087 = vmatprep.subr.bf16.mxu0 0
        %2088 = vmatpush1.bf16.xpose.msra.mxu0 0
        %2089 = vmatprep.subr.bf16.mxu0 0
        %2090 = vmatpush1.bf16.xpose.msra.mxu0 0
        %2091 = vmatprep.subr.bf16.mxu0 0
        %2092 = vmatpush1.bf16.xpose.msra.mxu0 0
        %2093 = vmatprep.subr.bf16.mxu0 0
        %2094 = vmatpush1.bf16.xpose.msra.mxu0 0
        %2095 = vmatprep.subr.bf16.mxu0 0
        %2096 = vmatpush1.bf16.xpose.msra.mxu0 0
        %2097 = vmatprep.subr.bf16.mxu0 0
        %2098 = vmatpush1.bf16.xpose.msra.mxu0 0
        %2099 = vmatprep.subr.bf16.mxu0 0
        %2100 = vmatpush1.bf16.xpose.msra.mxu0 0
        %2101 = vmatprep.subr.bf16.mxu0 0
        %2102 = vmatpush1.bf16.xpose.msra.mxu0 0
        %2103 = vmatprep.subr.bf16.mxu0 0
        %2104 = vmatpush1.bf16.xpose.msra.mxu0 0
        %2105 = vmatprep.subr.bf16.mxu0 0
        %2106 = vmatpush1.bf16.xpose.msra.mxu0 0
        %2107 = vmatprep.subr.bf16.mxu0 0
        %2108 = vmatpush1.bf16.xpose.msra.mxu0 0
        %2109 = vmatprep.subr.bf16.mxu0 0
        %2110 = vmatpush1.bf16.xpose.msra.mxu0 0
        %2111 = vmatprep.subr.bf16.mxu0 0
        %2112 = vmatpush1.bf16.xpose.msra.mxu0 0
        %2113 = vmatprep.subr.bf16.mxu0 0
        %2114 = vmatpush1.bf16.xpose.msra.mxu0 0
        %2115 = vmatprep.subr.bf16.mxu0 0
        %2116 = vmatpush1.bf16.xpose.msra.mxu0 0
        %2117 = vmatprep.mubr.bf16.mxu0 0
        %2118 = vmatmul.mubr.bf16.gmra.mrb[0].mxu0 %v2080
        %v2119 = vpop.f32.mrb[0].mxu0
        %v2120 = vadd.f32 0.0, %v2119
        %v2121 = vpop.f32.mrb[0].mxu0
        %v2122 = vpop.f32.mrb[0].mxu0
        %v2123 = vpop.f32.mrb[0].mxu0
        %2124 = vdwg.mxu0
        %v2126 = vsel %vm1343, %v2068, 0
        %v2129 = vsel %vm1343, %v2072, 0
        %2131 = vmatprep.subr.bf16.mxu0 0
        %2132 = vmatpush1.bf16.xpose.msra.mxu0 %v2129
        %2133 = vmatprep.subr.bf16.mxu0 0
        %2134 = vmatpush1.bf16.xpose.msra.mxu0 0
        %2135 = vmatprep.subr.bf16.mxu0 0
        %2136 = vmatpush1.bf16.xpose.msra.mxu0 0
        %2137 = vmatprep.subr.bf16.mxu0 0
        %2138 = vmatpush1.bf16.xpose.msra.mxu0 0
        %2139 = vmatprep.subr.bf16.mxu0 0
        %2140 = vmatpush1.bf16.xpose.msra.mxu0 0
        %2141 = vmatprep.subr.bf16.mxu0 0
        %2142 = vmatpush1.bf16.xpose.msra.mxu0 0
        %2143 = vmatprep.subr.bf16.mxu0 0
        %2144 = vmatpush1.bf16.xpose.msra.mxu0 0
        %2145 = vmatprep.subr.bf16.mxu0 0
        %2146 = vmatpush1.bf16.xpose.msra.mxu0 0
        %2147 = vmatprep.subr.bf16.mxu0 0
        %2148 = vmatpush1.bf16.xpose.msra.mxu0 0
        %2149 = vmatprep.subr.bf16.mxu0 0
        %2150 = vmatpush1.bf16.xpose.msra.mxu0 0
        %2151 = vmatprep.subr.bf16.mxu0 0
        %2152 = vmatpush1.bf16.xpose.msra.mxu0 0
        %2153 = vmatprep.subr.bf16.mxu0 0
        %2154 = vmatpush1.bf16.xpose.msra.mxu0 0
        %2155 = vmatprep.subr.bf16.mxu0 0
        %2156 = vmatpush1.bf16.xpose.msra.mxu0 0
        %2157 = vmatprep.subr.bf16.mxu0 0
        %2158 = vmatpush1.bf16.xpose.msra.mxu0 0
        %2159 = vmatprep.subr.bf16.mxu0 0
        %2160 = vmatpush1.bf16.xpose.msra.mxu0 0
        %2161 = vmatprep.subr.bf16.mxu0 0
        %2162 = vmatpush1.bf16.xpose.msra.mxu0 0
        %2163 = vmatprep.mubr.bf16.mxu0 0
        %2164 = vmatmul.mubr.bf16.gmra.mrb[0].mxu0 %v2126
        %v2165 = vpop.f32.mrb[0].mxu0
        %v2166 = vadd.f32 0.0, %v2165
        %v2167 = vpop.f32.mrb[0].mxu0
        %v2168 = vpop.f32.mrb[0].mxu0
        %v2169 = vpop.f32.mrb[0].mxu0
        %2170 = vdwg.mxu0
        %v2172 = vsel %vm1343, %v2069, 0
        %v2175 = vsel %vm1343, %v2073, 0
        %2177 = vmatprep.subr.bf16.mxu0 0
        %2178 = vmatpush1.bf16.xpose.msra.mxu0 %v2175
        %2179 = vmatprep.subr.bf16.mxu0 0
        %2180 = vmatpush1.bf16.xpose.msra.mxu0 0
        %2181 = vmatprep.subr.bf16.mxu0 0
        %2182 = vmatpush1.bf16.xpose.msra.mxu0 0
        %2183 = vmatprep.subr.bf16.mxu0 0
        %2184 = vmatpush1.bf16.xpose.msra.mxu0 0
        %2185 = vmatprep.subr.bf16.mxu0 0
        %2186 = vmatpush1.bf16.xpose.msra.mxu0 0
        %2187 = vmatprep.subr.bf16.mxu0 0
        %2188 = vmatpush1.bf16.xpose.msra.mxu0 0
        %2189 = vmatprep.subr.bf16.mxu0 0
        %2190 = vmatpush1.bf16.xpose.msra.mxu0 0
        %2191 = vmatprep.subr.bf16.mxu0 0
        %2192 = vmatpush1.bf16.xpose.msra.mxu0 0
        %2193 = vmatprep.subr.bf16.mxu0 0
        %2194 = vmatpush1.bf16.xpose.msra.mxu0 0
        %2195 = vmatprep.subr.bf16.mxu0 0
        %2196 = vmatpush1.bf16.xpose.msra.mxu0 0
        %2197 = vmatprep.subr.bf16.mxu0 0
        %2198 = vmatpush1.bf16.xpose.msra.mxu0 0
        %2199 = vmatprep.subr.bf16.mxu0 0
        %2200 = vmatpush1.bf16.xpose.msra.mxu0 0
        %2201 = vmatprep.subr.bf16.mxu0 0
        %2202 = vmatpush1.bf16.xpose.msra.mxu0 0
        %2203 = vmatprep.subr.bf16.mxu0 0
        %2204 = vmatpush1.bf16.xpose.msra.mxu0 0
        %2205 = vmatprep.subr.bf16.mxu0 0
        %2206 = vmatpush1.bf16.xpose.msra.mxu0 0
        %2207 = vmatprep.subr.bf16.mxu0 0
        %2208 = vmatpush1.bf16.xpose.msra.mxu0 0
        %2209 = vmatprep.mubr.bf16.mxu0 0
        %2210 = vmatmul.mubr.bf16.gmra.mrb[0].mxu0 %v2172
        %v2211 = vpop.f32.mrb[0].mxu0
        %v2212 = vadd.f32 0.0, %v2211
        %v2213 = vpop.f32.mrb[0].mxu0
        %v2214 = vpop.f32.mrb[0].mxu0
        %v2215 = vpop.f32.mrb[0].mxu0
        %2216 = vdwg.mxu0
        %v2218 = vsel %vm1343, %v2070, 0
        %v2221 = vsel %vm1343, %v2074, 0
        %2223 = vmatprep.subr.bf16.mxu0 0
        %2224 = vmatpush1.bf16.xpose.msra.mxu0 %v2221
        %2225 = vmatprep.subr.bf16.mxu0 0
        %2226 = vmatpush1.bf16.xpose.msra.mxu0 0
        %2227 = vmatprep.subr.bf16.mxu0 0
        %2228 = vmatpush1.bf16.xpose.msra.mxu0 0
        %2229 = vmatprep.subr.bf16.mxu0 0
        %2230 = vmatpush1.bf16.xpose.msra.mxu0 0
        %2231 = vmatprep.subr.bf16.mxu0 0
        %2232 = vmatpush1.bf16.xpose.msra.mxu0 0
        %2233 = vmatprep.subr.bf16.mxu0 0
        %2234 = vmatpush1.bf16.xpose.msra.mxu0 0
        %2235 = vmatprep.subr.bf16.mxu0 0
        %2236 = vmatpush1.bf16.xpose.msra.mxu0 0
        %2237 = vmatprep.subr.bf16.mxu0 0
        %2238 = vmatpush1.bf16.xpose.msra.mxu0 0
        %2239 = vmatprep.subr.bf16.mxu0 0
        %2240 = vmatpush1.bf16.xpose.msra.mxu0 0
        %2241 = vmatprep.subr.bf16.mxu0 0
        %2242 = vmatpush1.bf16.xpose.msra.mxu0 0
        %2243 = vmatprep.subr.bf16.mxu0 0
        %2244 = vmatpush1.bf16.xpose.msra.mxu0 0
        %2245 = vmatprep.subr.bf16.mxu0 0
        %2246 = vmatpush1.bf16.xpose.msra.mxu0 0
        %2247 = vmatprep.subr.bf16.mxu0 0
        %2248 = vmatpush1.bf16.xpose.msra.mxu0 0
        %2249 = vmatprep.subr.bf16.mxu0 0
        %2250 = vmatpush1.bf16.xpose.msra.mxu0 0
        %2251 = vmatprep.subr.bf16.mxu0 0
        %2252 = vmatpush1.bf16.xpose.msra.mxu0 0
        %2253 = vmatprep.subr.bf16.mxu0 0
        %2254 = vmatpush1.bf16.xpose.msra.mxu0 0
        %2255 = vmatprep.mubr.bf16.mxu0 0
        %2256 = vmatmul.mubr.bf16.gmra.mrb[0].mxu0 %v2218
        %v2257 = vpop.f32.mrb[0].mxu0
        %v2258 = vadd.f32 0.0, %v2257
        %v2259 = vpop.f32.mrb[0].mxu0
        %v2260 = vpop.f32.mrb[0].mxu0
        %v2261 = vpop.f32.mrb[0].mxu0
        %2262 = vdwg.mxu0
        %v2263 = vmul.f32 %v2120, 0.35355338
        %v2264 = vmul.f32 %v2166, 0.35355338
        %v2265 = vmul.f32 %v2212, 0.35355338
        %v2266 = vmul.f32 %v2258, 0.35355338
        %v2267 = vsel %vm1343, %v2263, -inf
        %2268 = vmax.xlane.f32.xlu0 %v2267
        %v2269 = vpop.xlane.xlu0 %2268
        %v2270 = vsel %vm1343, %v2264, -inf
        %2271 = vmax.xlane.f32.xlu0 %v2270
        %v2272 = vpop.xlane.xlu0 %2271
        %v2273 = vsel %vm1343, %v2265, -inf
        %2274 = vmax.xlane.f32.xlu0 %v2273
        %v2275 = vpop.xlane.xlu0 %2274
        %v2276 = vsel %vm1343, %v2266, -inf
        %2277 = vmax.xlane.f32.xlu0 %v2276
        %v2278 = vpop.xlane.xlu0 %2277
        %v2279 = vsub.f32 %v2263, %v2269
        %v2280 = vsub.f32 %v2264, %v2272
        %v2281 = vsub.f32 %v2265, %v2275
        %v2282 = vsub.f32 %v2266, %v2278
        %v2283 = vmul.f32 %v2279, 1.442695
        %v2284 = vpow.pop %v2283
        %v2285 = vmul.f32 %v2280, 1.442695
        %v2286 = vpow.pop %v2285
        %v2287 = vmul.f32 %v2281, 1.442695
        %v2288 = vpow.pop %v2287
        %v2289 = vmul.f32 %v2282, 1.442695
        %v2290 = vpow.pop %v2289
        %v2291 = vsel %vm1343, %v2284, 0.0
        %2292 = vadd.xlane.f32.xlu0 %v2291
        %v2293 = vpop.xlane.xlu0 %2292
        %v2294 = vsel %vm1343, %v2286, 0.0
        %2295 = vadd.xlane.f32.xlu0 %v2294
        %v2296 = vpop.xlane.xlu0 %2295
        %v2297 = vsel %vm1343, %v2288, 0.0
        %2298 = vadd.xlane.f32.xlu0 %v2297
        %v2299 = vpop.xlane.xlu0 %2298
        %v2300 = vsel %vm1343, %v2290, 0.0
        %2301 = vadd.xlane.f32.xlu0 %v2300
        %v2302 = vpop.xlane.xlu0 %2301
        %v2303 = vrcp.pop %v2293
        %v2304 = vmul.f32 %v2284, %v2303
        %v2305 = vrcp.pop %v2296
        %v2306 = vmul.f32 %v2286, %v2305
        %v2307 = vrcp.pop %v2299
        %v2308 = vmul.f32 %v2288, %v2307
        %v2309 = vrcp.pop %v2302
        %v2310 = vmul.f32 %v2290, %v2309
        %2311 = vst.msk [vmem:[%s1186] sm:$0xff] %vm1343, %v2304
        %2312 = vst.msk [vmem:[%s1186 + $0x8] sm:$0xff] %vm1343, %v2306
        %2313 = vst.msk [vmem:[%s1186 + $0x10] sm:$0xff] %vm1343, %v2308
        %2314 = vst.msk [vmem:[%s1186 + $0x18] sm:$0xff] %vm1343, %v2310
        %v2315 = vpack.c.bf16 %v2304, %v2304
        %v2316 = vpack.c.bf16 %v2306, %v2306
        %v2317 = vpack.c.bf16 %v2308, %v2308
        %v2318 = vpack.c.bf16 %v2310, %v2310
        %v2320 = vsel %vm1343, %v2315, 0
        %v2323 = vsel %vm1587, %v2075, 0
        %2325 = vmatprep.subr.bf16.mxu0 0
        %2326 = vmatpush1.bf16.msra.mxu0 %v2323
        %2327 = vmatprep.subr.bf16.mxu0 0
        %2328 = vmatpush1.bf16.msra.mxu0 0
        %2329 = vmatprep.subr.bf16.mxu0 0
        %2330 = vmatpush1.bf16.msra.mxu0 0
        %2331 = vmatprep.subr.bf16.mxu0 0
        %2332 = vmatpush1.bf16.msra.mxu0 0
        %2333 = vmatprep.subr.bf16.mxu0 0
        %2334 = vmatpush1.bf16.msra.mxu0 0
        %2335 = vmatprep.subr.bf16.mxu0 0
        %2336 = vmatpush1.bf16.msra.mxu0 0
        %2337 = vmatprep.subr.bf16.mxu0 0
        %2338 = vmatpush1.bf16.msra.mxu0 0
        %2339 = vmatprep.subr.bf16.mxu0 0
        %2340 = vmatpush1.bf16.msra.mxu0 0
        %2341 = vmatprep.subr.bf16.mxu0 0
        %2342 = vmatpush1.bf16.msra.mxu0 0
        %2343 = vmatprep.subr.bf16.mxu0 0
        %2344 = vmatpush1.bf16.msra.mxu0 0
        %2345 = vmatprep.subr.bf16.mxu0 0
        %2346 = vmatpush1.bf16.msra.mxu0 0
        %2347 = vmatprep.subr.bf16.mxu0 0
        %2348 = vmatpush1.bf16.msra.mxu0 0
        %2349 = vmatprep.subr.bf16.mxu0 0
        %2350 = vmatpush1.bf16.msra.mxu0 0
        %2351 = vmatprep.subr.bf16.mxu0 0
        %2352 = vmatpush1.bf16.msra.mxu0 0
        %2353 = vmatprep.subr.bf16.mxu0 0
        %2354 = vmatpush1.bf16.msra.mxu0 0
        %2355 = vmatprep.subr.bf16.mxu0 0
        %2356 = vmatpush1.bf16.msra.mxu0 0
        %2357 = vmatprep.mubr.bf16.mxu0 0
        %2358 = vmatmul.mubr.bf16.gmra.mrb[0].mxu0 %v2320
        %v2359 = vpop.f32.mrb[0].mxu0
        %v2360 = vadd.f32 0.0, %v2359
        %v2361 = vpop.f32.mrb[0].mxu0
        %v2362 = vpop.f32.mrb[0].mxu0
        %v2363 = vpop.f32.mrb[0].mxu0
        %2364 = vdwg.mxu0
        %v2366 = vsel %vm1343, %v2316, 0
        %v2369 = vsel %vm1587, %v2076, 0
        %2371 = vmatprep.subr.bf16.mxu0 0
        %2372 = vmatpush1.bf16.msra.mxu0 %v2369
        %2373 = vmatprep.subr.bf16.mxu0 0
        %2374 = vmatpush1.bf16.msra.mxu0 0
        %2375 = vmatprep.subr.bf16.mxu0 0
        %2376 = vmatpush1.bf16.msra.mxu0 0
        %2377 = vmatprep.subr.bf16.mxu0 0
        %2378 = vmatpush1.bf16.msra.mxu0 0
        %2379 = vmatprep.subr.bf16.mxu0 0
        %2380 = vmatpush1.bf16.msra.mxu0 0
        %2381 = vmatprep.subr.bf16.mxu0 0
        %2382 = vmatpush1.bf16.msra.mxu0 0
        %2383 = vmatprep.subr.bf16.mxu0 0
        %2384 = vmatpush1.bf16.msra.mxu0 0
        %2385 = vmatprep.subr.bf16.mxu0 0
        %2386 = vmatpush1.bf16.msra.mxu0 0
        %2387 = vmatprep.subr.bf16.mxu0 0
        %2388 = vmatpush1.bf16.msra.mxu0 0
        %2389 = vmatprep.subr.bf16.mxu0 0
        %2390 = vmatpush1.bf16.msra.mxu0 0
        %2391 = vmatprep.subr.bf16.mxu0 0
        %2392 = vmatpush1.bf16.msra.mxu0 0
        %2393 = vmatprep.subr.bf16.mxu0 0
        %2394 = vmatpush1.bf16.msra.mxu0 0
        %2395 = vmatprep.subr.bf16.mxu0 0
        %2396 = vmatpush1.bf16.msra.mxu0 0
        %2397 = vmatprep.subr.bf16.mxu0 0
        %2398 = vmatpush1.bf16.msra.mxu0 0
        %2399 = vmatprep.subr.bf16.mxu0 0
        %2400 = vmatpush1.bf16.msra.mxu0 0
        %2401 = vmatprep.subr.bf16.mxu0 0
        %2402 = vmatpush1.bf16.msra.mxu0 0
        %2403 = vmatprep.mubr.bf16.mxu0 0
        %2404 = vmatmul.mubr.bf16.gmra.mrb[0].mxu0 %v2366
        %v2405 = vpop.f32.mrb[0].mxu0
        %v2406 = vadd.f32 0.0, %v2405
        %v2407 = vpop.f32.mrb[0].mxu0
        %v2408 = vpop.f32.mrb[0].mxu0
        %v2409 = vpop.f32.mrb[0].mxu0
        %2410 = vdwg.mxu0
        %v2412 = vsel %vm1343, %v2317, 0
        %v2415 = vsel %vm1587, %v2077, 0
        %2417 = vmatprep.subr.bf16.mxu0 0
        %2418 = vmatpush1.bf16.msra.mxu0 %v2415
        %2419 = vmatprep.subr.bf16.mxu0 0
        %2420 = vmatpush1.bf16.msra.mxu0 0
        %2421 = vmatprep.subr.bf16.mxu0 0
        %2422 = vmatpush1.bf16.msra.mxu0 0
        %2423 = vmatprep.subr.bf16.mxu0 0
        %2424 = vmatpush1.bf16.msra.mxu0 0
        %2425 = vmatprep.subr.bf16.mxu0 0
        %2426 = vmatpush1.bf16.msra.mxu0 0
        %2427 = vmatprep.subr.bf16.mxu0 0
        %2428 = vmatpush1.bf16.msra.mxu0 0
        %2429 = vmatprep.subr.bf16.mxu0 0
        %2430 = vmatpush1.bf16.msra.mxu0 0
        %2431 = vmatprep.subr.bf16.mxu0 0
        %2432 = vmatpush1.bf16.msra.mxu0 0
        %2433 = vmatprep.subr.bf16.mxu0 0
        %2434 = vmatpush1.bf16.msra.mxu0 0
        %2435 = vmatprep.subr.bf16.mxu0 0
        %2436 = vmatpush1.bf16.msra.mxu0 0
        %2437 = vmatprep.subr.bf16.mxu0 0
        %2438 = vmatpush1.bf16.msra.mxu0 0
        %2439 = vmatprep.subr.bf16.mxu0 0
        %2440 = vmatpush1.bf16.msra.mxu0 0
        %2441 = vmatprep.subr.bf16.mxu0 0
        %2442 = vmatpush1.bf16.msra.mxu0 0
        %2443 = vmatprep.subr.bf16.mxu0 0
        %2444 = vmatpush1.bf16.msra.mxu0 0
        %2445 = vmatprep.subr.bf16.mxu0 0
        %2446 = vmatpush1.bf16.msra.mxu0 0
        %2447 = vmatprep.subr.bf16.mxu0 0
        %2448 = vmatpush1.bf16.msra.mxu0 0
        %2449 = vmatprep.mubr.bf16.mxu0 0
        %2450 = vmatmul.mubr.bf16.gmra.mrb[0].mxu0 %v2412
        %v2451 = vpop.f32.mrb[0].mxu0
        %v2452 = vadd.f32 0.0, %v2451
        %v2453 = vpop.f32.mrb[0].mxu0
        %v2454 = vpop.f32.mrb[0].mxu0
        %v2455 = vpop.f32.mrb[0].mxu0
        %2456 = vdwg.mxu0
        %v2458 = vsel %vm1343, %v2318, 0
        %v2461 = vsel %vm1587, %v2078, 0
        %2463 = vmatprep.subr.bf16.mxu0 0
        %2464 = vmatpush1.bf16.msra.mxu0 %v2461
        %2465 = vmatprep.subr.bf16.mxu0 0
        %2466 = vmatpush1.bf16.msra.mxu0 0
        %2467 = vmatprep.subr.bf16.mxu0 0
        %2468 = vmatpush1.bf16.msra.mxu0 0
        %2469 = vmatprep.subr.bf16.mxu0 0
        %2470 = vmatpush1.bf16.msra.mxu0 0
        %2471 = vmatprep.subr.bf16.mxu0 0
        %2472 = vmatpush1.bf16.msra.mxu0 0
        %2473 = vmatprep.subr.bf16.mxu0 0
        %2474 = vmatpush1.bf16.msra.mxu0 0
        %2475 = vmatprep.subr.bf16.mxu0 0
        %2476 = vmatpush1.bf16.msra.mxu0 0
        %2477 = vmatprep.subr.bf16.mxu0 0
        %2478 = vmatpush1.bf16.msra.mxu0 0
        %2479 = vmatprep.subr.bf16.mxu0 0
        %2480 = vmatpush1.bf16.msra.mxu0 0
        %2481 = vmatprep.subr.bf16.mxu0 0
        %2482 = vmatpush1.bf16.msra.mxu0 0
        %2483 = vmatprep.subr.bf16.mxu0 0
        %2484 = vmatpush1.bf16.msra.mxu0 0
        %2485 = vmatprep.subr.bf16.mxu0 0
        %2486 = vmatpush1.bf16.msra.mxu0 0
        %2487 = vmatprep.subr.bf16.mxu0 0
        %2488 = vmatpush1.bf16.msra.mxu0 0
        %2489 = vmatprep.subr.bf16.mxu0 0
        %2490 = vmatpush1.bf16.msra.mxu0 0
        %2491 = vmatprep.subr.bf16.mxu0 0
        %2492 = vmatpush1.bf16.msra.mxu0 0
        %2493 = vmatprep.subr.bf16.mxu0 0
        %2494 = vmatpush1.bf16.msra.mxu0 0
        %2495 = vmatprep.mubr.bf16.mxu0 0
        %2496 = vmatmul.mubr.bf16.gmra.mrb[0].mxu0 %v2458
        %v2497 = vpop.f32.mrb[0].mxu0
        %v2498 = vadd.f32 0.0, %v2497
        %v2499 = vpop.f32.mrb[0].mxu0
        %v2500 = vpop.f32.mrb[0].mxu0
        %v2501 = vpop.f32.mrb[0].mxu0
        %2502 = vdwg.mxu0
        %v2503 = vpack.c.bf16 %v2360, %v2360
        %2504 = vst.msk [vmem:[#allocation5] sm:$0xf] %vm1273, %v2503
        %v2505 = vpack.c.bf16 %v2406, %v2406
        %v2507 = vunpack.c.l.b16 %v2505
        %v2508 = vpack.c.b16 %v2507, %v2507
        %2509 = vrot.lane.b32.xlu0 %v2508, 8
        %v2510 = vpop.permute.xlu0 %2509
        %2512 = vst.msk [vmem:[#allocation5] sm:$0xf] %vm1778, %v2510
        %v2513 = vpack.c.bf16 %v2452, %v2452
        %v2515 = vunpack.c.l.b16 %v2513
        %v2516 = vpack.c.b16 %v2515, %v2515
        %2517 = vrot.lane.b32.xlu0 %v2516, 16
        %v2518 = vpop.permute.xlu0 %2517
        %2520 = vst.msk [vmem:[#allocation5] sm:$0xf] %vm1787, %v2518
        %v2521 = vpack.c.bf16 %v2498, %v2498
        %v2523 = vunpack.c.l.b16 %v2521
        %v2524 = vpack.c.b16 %v2523, %v2523
        %2525 = vrot.lane.b32.xlu0 %v2524, 24
        %v2526 = vpop.permute.xlu0 %2525
        %2528 = vst.msk [vmem:[#allocation5] sm:$0xf] %vm1796, %v2526
        %v2529 = vld [vmem:[#allocation5] sm:$0xf]
        %v2530 = vld [vmem:[%s1161] sm:$0xf]
        %v2531 = vld [vmem:[%s1161 + $0x4] sm:$0xf]
        %v2532 = vld [vmem:[%s1161 + $0x8] sm:$0xf]
        %v2533 = vld [vmem:[%s1161 + $0xc] sm:$0xf]
        %v2534 = vld [vmem:[%s941] sm:$0x1]
        %v2536 = vlaneseq
        %v2537 = vshrl.u32 %v2536, 7
        %v2538 = vsub.s32 0, %v2537
        %v2539 = vrot.slane %v2534, %v2538
        %v2545 = vunpack.c.l.b16 %v2530
        %v2546 = vunpack.c.l.b16 %v2531
        %v2547 = vunpack.c.l.b16 %v2532
        %v2548 = vunpack.c.l.b16 %v2533
        %v2549 = vpack.c.b16 %v2546, %v2545
        %v2550 = vpack.c.b16 %v2548, %v2547
        %v2554 = vsel %vm1228, %v2529, 0
        %2556 = vmatprep.subr.bf16.mxu0 0
        %2557 = vmatpush1.bf16.msra.mxu0 %v2549
        %2558 = vmatprep.subr.bf16.mxu0 0
        %2559 = vmatpush1.bf16.msra.mxu0 %v2550
        %2560 = vmatprep.subr.bf16.mxu0 0
        %2561 = vmatpush1.bf16.msra.mxu0 0
        %2562 = vmatprep.subr.bf16.mxu0 0
        %2563 = vmatpush1.bf16.msra.mxu0 0
        %2564 = vmatprep.subr.bf16.mxu0 0
        %2565 = vmatpush1.bf16.msra.mxu0 0
        %2566 = vmatprep.subr.bf16.mxu0 0
        %2567 = vmatpush1.bf16.msra.mxu0 0
        %2568 = vmatprep.subr.bf16.mxu0 0
        %2569 = vmatpush1.bf16.msra.mxu0 0
        %2570 = vmatprep.subr.bf16.mxu0 0
        %2571 = vmatpush1.bf16.msra.mxu0 0
        %2572 = vmatprep.subr.bf16.mxu0 0
        %2573 = vmatpush1.bf16.msra.mxu0 0
        %2574 = vmatprep.subr.bf16.mxu0 0
        %2575 = vmatpush1.bf16.msra.mxu0 0
        %2576 = vmatprep.subr.bf16.mxu0 0
        %2577 = vmatpush1.bf16.msra.mxu0 0
        %2578 = vmatprep.subr.bf16.mxu0 0
        %2579 = vmatpush1.bf16.msra.mxu0 0
        %2580 = vmatprep.subr.bf16.mxu0 0
        %2581 = vmatpush1.bf16.msra.mxu0 0
        %2582 = vmatprep.subr.bf16.mxu0 0
        %2583 = vmatpush1.bf16.msra.mxu0 0
        %2584 = vmatprep.subr.bf16.mxu0 0
        %2585 = vmatpush1.bf16.msra.mxu0 0
        %2586 = vmatprep.subr.bf16.mxu0 0
        %2587 = vmatpush1.bf16.msra.mxu0 0
        %2588 = vmatprep.mubr.bf16.mxu0 0
        %2589 = vmatmul.mubr.bf16.gmra.mrb[0].mxu0 %v2554
        %v2590 = vpop.f32.mrb[0].mxu0
        %v2591 = vadd.f32 %v2539, %v2590
        %v2592 = vpop.f32.mrb[0].mxu0
        %v2593 = vpop.f32.mrb[0].mxu0
        %v2594 = vpop.f32.mrb[0].mxu0
        %2595 = vdwg.mxu0
        %v2596 = vadd.f32 %v2591, %v1895
        %v2597 = vld [vmem:[%s949] sm:$0x1]
        %v2598 = vld [vmem:[%s957] sm:$0x1]
        %v2599 = vsel %vm1228, %v2596, 0.0
        %2600 = vadd.xlane.f32.xlu0 %v2599
        %v2601 = vpop.xlane.xlu0 %2600
        %v2602 = vmul.f32 %v2601, %v1871
        %v2603 = vsub.f32 %v2596, %v2602
        %v2604 = vmul.f32 %v2603, %v2603
        %v2605 = vsel %vm1228, %v2604, 0.0
        %2606 = vadd.xlane.f32.xlu0 %v2605
        %v2607 = vpop.xlane.xlu0 %2606
        %v2608 = vmul.f32 %v2607, %v1871
        %v2609 = vadd.f32 %v2608, 1e-06
        %v2610 = vrsqrt.pop %v2609
        %v2611 = vmul.f32 %v2603, %v2610
        %v2613 = vlaneseq
        %v2614 = vshrl.u32 %v2613, 7
        %v2615 = vsub.s32 0, %v2614
        %v2616 = vrot.slane %v2597, %v2615
        %v2618 = vmul.f32 %v2611, %v2616
        %v2620 = vlaneseq
        %v2621 = vshrl.u32 %v2620, 7
        %v2622 = vsub.s32 0, %v2621
        %v2623 = vrot.slane %v2598, %v2622
        %v2625 = vadd.f32 %v2618, %v2623
        %v2626 = vpack.c.bf16 %v2625, %v2625
        %v2627 = vld [vmem:[%s1166] sm:$0xf]
        %v2628 = vld [vmem:[%s1166 + $0x4] sm:$0xf]
        %v2629 = vld [vmem:[%s1166 + $0x8] sm:$0xf]
        %v2630 = vld [vmem:[%s1166 + $0xc] sm:$0xf]
        %v2631 = vld [vmem:[%s965] sm:$0x1]
        %v2633 = vlaneseq
        %v2634 = vshrl.u32 %v2633, 7
        %v2635 = vsub.s32 0, %v2634
        %v2636 = vrot.slane %v2631, %v2635
        %v2642 = vunpack.c.l.b16 %v2627
        %v2643 = vunpack.c.l.b16 %v2628
        %v2644 = vunpack.c.l.b16 %v2629
        %v2645 = vunpack.c.l.b16 %v2630
        %v2646 = vpack.c.b16 %v2643, %v2642
        %v2647 = vpack.c.b16 %v2645, %v2644
        %v2651 = vsel %vm1228, %v2626, 0
        %2653 = vmatprep.subr.bf16.mxu0 0
        %2654 = vmatpush1.bf16.msra.mxu0 %v2646
        %2655 = vmatprep.subr.bf16.mxu0 0
        %2656 = vmatpush1.bf16.msra.mxu0 %v2647
        %2657 = vmatprep.subr.bf16.mxu0 0
        %2658 = vmatpush1.bf16.msra.mxu0 0
        %2659 = vmatprep.subr.bf16.mxu0 0
        %2660 = vmatpush1.bf16.msra.mxu0 0
        %2661 = vmatprep.subr.bf16.mxu0 0
        %2662 = vmatpush1.bf16.msra.mxu0 0
        %2663 = vmatprep.subr.bf16.mxu0 0
        %2664 = vmatpush1.bf16.msra.mxu0 0
        %2665 = vmatprep.subr.bf16.mxu0 0
        %2666 = vmatpush1.bf16.msra.mxu0 0
        %2667 = vmatprep.subr.bf16.mxu0 0
        %2668 = vmatpush1.bf16.msra.mxu0 0
        %2669 = vmatprep.subr.bf16.mxu0 0
        %2670 = vmatpush1.bf16.msra.mxu0 0
        %2671 = vmatprep.subr.bf16.mxu0 0
        %2672 = vmatpush1.bf16.msra.mxu0 0
        %2673 = vmatprep.subr.bf16.mxu0 0
        %2674 = vmatpush1.bf16.msra.mxu0 0
        %2675 = vmatprep.subr.bf16.mxu0 0
        %2676 = vmatpush1.bf16.msra.mxu0 0
        %2677 = vmatprep.subr.bf16.mxu0 0
        %2678 = vmatpush1.bf16.msra.mxu0 0
        %2679 = vmatprep.subr.bf16.mxu0 0
        %2680 = vmatpush1.bf16.msra.mxu0 0
        %2681 = vmatprep.subr.bf16.mxu0 0
        %2682 = vmatpush1.bf16.msra.mxu0 0
        %2683 = vmatprep.subr.bf16.mxu0 0
        %2684 = vmatpush1.bf16.msra.mxu0 0
        %2685 = vmatprep.mubr.bf16.mxu0 0
        %2686 = vmatmul.mubr.bf16.gmra.mrb[0].mxu0 %v2651
        %v2687 = vpop.f32.mrb[0].mxu0
        %v2688 = vadd.f32 %v2636, %v2687
        %v2689 = vpop.f32.mrb[0].mxu0
        %v2690 = vpop.f32.mrb[0].mxu0
        %v2691 = vpop.f32.mrb[0].mxu0
        %2692 = vdwg.mxu0
        %v2693 = vmax.f32 %v2688, 0.0
        %v2694 = vpack.c.bf16 %v2693, %v2693
        %v2695 = vld [vmem:[%s1171] sm:$0xf]
        %v2696 = vld [vmem:[%s1171 + $0x4] sm:$0xf]
        %v2697 = vld [vmem:[%s1171 + $0x8] sm:$0xf]
        %v2698 = vld [vmem:[%s1171 + $0xc] sm:$0xf]
        %v2699 = vld [vmem:[%s1171 + $0x10] sm:$0xf]
        %v2700 = vld [vmem:[%s1171 + $0x14] sm:$0xf]
        %v2701 = vld [vmem:[%s1171 + $0x18] sm:$0xf]
        %v2702 = vld [vmem:[%s1171 + $0x1c] sm:$0xf]
        %v2703 = vld [vmem:[%s973] sm:$0x1]
        %v2705 = vlaneseq
        %v2706 = vshrl.u32 %v2705, 7
        %v2707 = vsub.s32 0, %v2706
        %v2708 = vrot.slane %v2703, %v2707
        %v2718 = vunpack.c.l.b16 %v2695
        %v2719 = vunpack.c.l.b16 %v2696
        %v2720 = vunpack.c.l.b16 %v2697
        %v2721 = vunpack.c.l.b16 %v2698
        %v2722 = vunpack.c.l.b16 %v2699
        %v2723 = vunpack.c.l.b16 %v2700
        %v2724 = vunpack.c.l.b16 %v2701
        %v2725 = vunpack.c.l.b16 %v2702
        %v2726 = vpack.c.b16 %v2719, %v2718
        %v2727 = vpack.c.b16 %v2721, %v2720
        %v2728 = vpack.c.b16 %v2723, %v2722
        %v2729 = vpack.c.b16 %v2725, %v2724
        %vm2734 = vcmask 523264
        %v2736 = vsel %vm2734, %v2694, 0
        %2738 = vmatprep.subr.bf16.mxu0 0
        %2739 = vmatpush1.bf16.msra.mxu0 %v2726
        %2740 = vmatprep.subr.bf16.mxu0 0
        %2741 = vmatpush1.bf16.msra.mxu0 %v2727
        %2742 = vmatprep.subr.bf16.mxu0 0
        %2743 = vmatpush1.bf16.msra.mxu0 %v2728
        %2744 = vmatprep.subr.bf16.mxu0 0
        %2745 = vmatpush1.bf16.msra.mxu0 %v2729
        %2746 = vmatprep.subr.bf16.mxu0 0
        %2747 = vmatpush1.bf16.msra.mxu0 0
        %2748 = vmatprep.subr.bf16.mxu0 0
        %2749 = vmatpush1.bf16.msra.mxu0 0
        %2750 = vmatprep.subr.bf16.mxu0 0
        %2751 = vmatpush1.bf16.msra.mxu0 0
        %2752 = vmatprep.subr.bf16.mxu0 0
        %2753 = vmatpush1.bf16.msra.mxu0 0
        %2754 = vmatprep.subr.bf16.mxu0 0
        %2755 = vmatpush1.bf16.msra.mxu0 0
        %2756 = vmatprep.subr.bf16.mxu0 0
        %2757 = vmatpush1.bf16.msra.mxu0 0
        %2758 = vmatprep.subr.bf16.mxu0 0
        %2759 = vmatpush1.bf16.msra.mxu0 0
        %2760 = vmatprep.subr.bf16.mxu0 0
        %2761 = vmatpush1.bf16.msra.mxu0 0
        %2762 = vmatprep.subr.bf16.mxu0 0
        %2763 = vmatpush1.bf16.msra.mxu0 0
        %2764 = vmatprep.subr.bf16.mxu0 0
        %2765 = vmatpush1.bf16.msra.mxu0 0
        %2766 = vmatprep.subr.bf16.mxu0 0
        %2767 = vmatpush1.bf16.msra.mxu0 0
        %2768 = vmatprep.subr.bf16.mxu0 0
        %2769 = vmatpush1.bf16.msra.mxu0 0
        %2770 = vmatprep.mubr.bf16.mxu0 0
        %2771 = vmatmul.mubr.bf16.gmra.mrb[0].mxu0 %v2736
        %v2772 = vpop.f32.mrb[0].mxu0
        %v2773 = vadd.f32 %v2708, %v2772
        %v2774 = vpop.f32.mrb[0].mxu0
        %v2775 = vpop.f32.mrb[0].mxu0
        %v2776 = vpop.f32.mrb[0].mxu0
        %2777 = vdwg.mxu0
        %v2778 = vadd.f32 %v2773, %v2625
        %v2779 = vld [vmem:[%s1174] sm:$0x1]
        %v2780 = vld [vmem:[%s1177] sm:$0x1]
        %v2781 = vsel %vm1228, %v2778, 0.0
        %2782 = vadd.xlane.f32.xlu0 %v2781
        %v2783 = vpop.xlane.xlu0 %2782
        %v2784 = vmul.f32 %v2783, %v1871
        %v2785 = vsub.f32 %v2778, %v2784
        %v2786 = vmul.f32 %v2785, %v2785
        %v2787 = vsel %vm1228, %v2786, 0.0
        %2788 = vadd.xlane.f32.xlu0 %v2787
        %v2789 = vpop.xlane.xlu0 %2788
        %v2790 = vmul.f32 %v2789, %v1871
        %v2791 = vadd.f32 %v2790, 1e-06
        %v2792 = vrsqrt.pop %v2791
        %v2793 = vmul.f32 %v2785, %v2792
        %v2795 = vlaneseq
        %v2796 = vshrl.u32 %v2795, 7
        %v2797 = vsub.s32 0, %v2796
        %v2798 = vrot.slane %v2779, %v2797
        %v2800 = vmul.f32 %v2793, %v2798
        %v2802 = vlaneseq
        %v2803 = vshrl.u32 %v2802, 7
        %v2804 = vsub.s32 0, %v2803
        %v2805 = vrot.slane %v2780, %v2804
        %v2807 = vadd.f32 %v2800, %v2805
        %p2808 = scmp.eq.s32.totalorder %s56, 1
        // Predicated region
        $region141: #{decoder_forward.1} parent=111 // pred_check
          %p2809 = pneg %p2808
        $region142: #{decoder_forward.1} parent=111 // pred_check_branch
          %2811 = sbr.rel (%p2809) target = $region144
        $region143: #{decoder_forward.1} parent=111 // pred_region
          %v2812 = vld [vmem:[%s21] sm:$0x1]
          %v2813 = vld [vmem:[%s22] sm:$0x1]
          %v2814 = vsel %vm1228, %v2807, 0.0
          %2815 = vadd.xlane.f32.xlu0 %v2814
          %v2816 = vpop.xlane.xlu0 %2815
          %v2817 = vmul.f32 %v2816, %v1871
          %v2818 = vsub.f32 %v2807, %v2817
          %v2819 = vmul.f32 %v2818, %v2818
          %v2820 = vsel %vm1228, %v2819, 0.0
          %2821 = vadd.xlane.f32.xlu0 %v2820
          %v2822 = vpop.xlane.xlu0 %2821
          %v2823 = vmul.f32 %v2822, %v1871
          %v2824 = vadd.f32 %v2823, 1e-06
          %v2825 = vrsqrt.pop %v2824
          %v2826 = vmul.f32 %v2818, %v2825
          %v2828 = vlaneseq
          %v2829 = vshrl.u32 %v2828, 7
          %v2830 = vsub.s32 0, %v2829
          %v2831 = vrot.slane %v2812, %v2830
          %v2833 = vmul.f32 %v2826, %v2831
          %v2835 = vlaneseq
          %v2836 = vshrl.u32 %v2835, 7
          %v2837 = vsub.s32 0, %v2836
          %v2838 = vrot.slane %v2813, %v2837
          %v2840 = vadd.f32 %v2833, %v2838
          %2841 = vst.msk [vmem:[%s1110] sm:$0xff] %vm1228, %v2840
        $region144: #{decoder_forward.1} parent=111 // pred_fallthru
          _
        %p2842 = scmp.ne.s32.totalorder %s56, 1
        // Predicated region
        $region145: #{decoder_forward.1} parent=111 // pred_check
          %p2843 = pneg %p2842
        $region146: #{decoder_forward.1} parent=111 // pred_check_branch
          %2845 = sbr.rel (%p2843) target = $region148
        $region147: #{decoder_forward.1} parent=111 // pred_region
          %2846 = vst.msk [vmem:[%s1110] sm:$0xff] %vm1228, %v2807
        $region148: #{decoder_forward.1} parent=111 // pred_fallthru
          _
        %s2847 = sand.u32 %s654, 1
        %s2848 = scalar_lea.sflag [#allocation8], %s2847
        %s2849 = sand.u32 %s654, 1
        %s2850 = smul.addr %s2849, 8
        %s2851 = scalar_lea.vmem [#allocation17], %s2850
        %p2852 = scmp.lt.s32.totalorder %s56, 1
        %s2853 = scalar_select %p2852, %s56, 1
        %p2854 = scmp.lt.s32.totalorder %s55, 1
        %s2855 = scalar_select %p2854, %s55, 1
        %s2856 = smul.addr %s2855, 4
        %s2857 = smul.addr %s2853, 8
        %s2858 = sadd.s32 %s2856, %s2857
        %s2859 = smul.addr %s2858, 8
        %s2860 = scalar_lea.vmem %s24, %s2859
        // Predicated region
        $region149: #{decoder_forward.1} parent=111 // pred_check
          %p2861 = pneg %p664
        $region150: #{decoder_forward.1} parent=111 // pred_check_branch
          %2863 = sbr.rel (%p2861) target = $region152
        $region151: #{decoder_forward.1} parent=111 // pred_region
          %s2865 = ssub.s32 128, 128
          %2866 = vsyncadd %s2848, %s2865
          %s2867 = smul.addr %s55, 128
          %s2868 = scalar_lea.hbm %s23, %s2867
          %s2870 = sshll.u32 %s2851, 4
          %s2871 = int_to_ptr.vmem [resolvable:$true] %s2870
          %2873 = dma.vmem_to_hbm [thread:$0]  %s2871, 128, %s2868, %s2848
        $region152: #{decoder_forward.1} parent=111 // pred_fallthru
          _
        // Predicated region
        $region153: #{decoder_forward.1} parent=111 // pred_check
          %p2874 = pneg %p692
        $region154: #{decoder_forward.1} parent=111 // pred_check_branch
          %2876 = sbr.rel (%p2874) target = $region156
        $region155: #{decoder_forward.1} parent=111 // pred_region
          _
        $region156: #{decoder_forward.1} parent=111 // pred_fallthru
          _
      $region112: #{decoder_forward.1} parent=5 // pred_fallthru
        _
      %p2877 = scmp.le.s32.totalorder 2, %s46
      // Predicated region
      $region157: #{decoder_forward.1} parent=5 // pred_check
        %p2878 = pneg %p2877
      $region158: #{decoder_forward.1} parent=5 // pred_check_branch
        %2880 = sbr.rel (%p2878) target = $region160
      $region159: #{decoder_forward.1} parent=5 // pred_region
        %s2881 = ssub.s32 %s46, 2
        // Predicated region
        $region161: #{decoder_forward.1} parent=159 // pred_check
          %p2882 = pneg %p670
        $region162: #{decoder_forward.1} parent=159 // pred_check_branch
          %2884 = sbr.rel (%p2882) target = $region164
        $region163: #{decoder_forward.1} parent=159 // pred_region
          %s2885 = sand.u32 %s655, 1
          %s2886 = scalar_lea.sflag [#allocation8], %s2885
          %s2887 = sand.u32 %s655, 1
          %s2888 = smul.addr %s2887, 8
          %s2889 = scalar_lea.vmem [#allocation17], %s2888
          %2890 = dma.done %s2886, 128
        $region164: #{decoder_forward.1} parent=159 // pred_fallthru
          _
        // Predicated region
        $region165: #{decoder_forward.1} parent=159 // pred_check
          %p2891 = pneg %p698
        $region166: #{decoder_forward.1} parent=159 // pred_check_branch
          %2893 = sbr.rel (%p2891) target = $region168
        $region167: #{decoder_forward.1} parent=159 // pred_region
          %p2894 = scmp.lt.s32.totalorder %s58, 1
          %s2895 = scalar_select %p2894, %s58, 1
          %p2896 = scmp.lt.s32.totalorder %s57, 1
          %s2897 = scalar_select %p2896, %s57, 1
          %s2898 = smul.addr %s2897, 4
          %s2899 = smul.addr %s2895, 8
          %s2900 = sadd.s32 %s2898, %s2899
          %s2901 = smul.addr %s2900, 8
          %s2902 = scalar_lea.vmem %s24, %s2901
        $region168: #{decoder_forward.1} parent=159 // pred_fallthru
          _
      $region160: #{decoder_forward.1} parent=5 // pred_fallthru
        _
    $region6: #{decoder_forward.1} parent=1 // loop_footer
      %s50 = sadd.s32 1, %s46
    $region7: #{decoder_forward.1} parent=1 // loop_footer_branch
      %45 = sbr.rel target = $region3
    $region8: #{decoder_forward.1} parent=1 // loop_exit
      _
    %2903 = vsyncpa [#allocation7], 1
    %s2904 = scalar_lea.sflag [#allocation7], 1
    %2905 = vsyncpa %s2904, 1
    %2906 = vsyncpa [#allocation10], 1
    %s2907 = scalar_lea.sflag [#allocation10], 1
    %2908 = vsyncpa %s2907, 1
    %2909 = vsyncpa [#allocation13], 1
    %s2910 = scalar_lea.sflag [#allocation13], 1
    %2911 = vsyncpa %s2910, 1
    %2912 = vsyncpa [#allocation16], 1
    %s2913 = scalar_lea.sflag [#allocation16], 1
    %2914 = vsyncpa %s2913, 1
    %2915 = vsyncpa [#allocation8], 1
    %s2916 = scalar_lea.sflag [#allocation8], 1
    %2917 = vsyncpa %s2916, 1

</llo_original>
